<compile_context>
chip_gen: v7x
topology: tpu7x:2x2x1
jax: 0.10.0
libtpu: 0.0.40
codegen_flags: <defaults>
</compile_context>

<pallas_src>
import jax
import jax.numpy as jnp
from jax.experimental import pallas as pl
from jax.experimental.pallas import tpu as pltpu

SUBLANE = 8


def _round_up(x, m):
    return ((x + m - 1) // m) * m


def _vae_kernel(x_ref, eps_ref,
                w1_ref, b1_ref,
                w2_ref, b2_ref,
                w3_ref, b3_ref,
                w4_ref, b4_ref,
                recon_ref, mu_ref, logvar_ref):
    # Row-independent math only (required for the ragged last block: OOB rows
    # may hold garbage, but they never mix with valid rows and are not stored).
    L = eps_ref.shape[-1]

    # ---- encoder: Linear(D, H) -> ReLU
    x = x_ref[...]
    h = jnp.dot(x, w1_ref[...], preferred_element_type=jnp.float32) + b1_ref[...]
    h = jnp.maximum(h, 0.0)

    # ---- encoder head: single merged Linear(H, 2L); chunk(2, dim=-1) is two
    #      static lane slices of the enc *value* (XLU shift, off the MXU path).
    enc = jnp.dot(h, w2_ref[...], preferred_element_type=jnp.float32) + b2_ref[...]
    mu = enc[:, :L]
    logvar = enc[:, L:]

    # ---- reparameterize: z = mu + eps * exp(0.5 * logvar)
    z = mu + eps_ref[...] * jnp.exp(0.5 * logvar)

    # ---- decoder: Linear(L, H) -> ReLU -> Linear(H, D)
    h2 = jnp.dot(z, w3_ref[...], preferred_element_type=jnp.float32) + b3_ref[...]
    h2 = jnp.maximum(h2, 0.0)
    recon = jnp.dot(h2, w4_ref[...], preferred_element_type=jnp.float32) + b4_ref[...]

    recon_ref[...] = recon.astype(recon_ref.dtype)
    mu_ref[...] = mu.astype(mu_ref.dtype)
    logvar_ref[...] = logvar.astype(logvar_ref.dtype)


def init_params(key, input_dim, latent_dim, hidden_dim):
    """Deterministic synthetic parameters; weights stored as (in, out)."""
    ks = jax.random.split(key, 8)

    def lin(kw, kb, fan_in, fan_out):
        bound = 1.0 / jnp.sqrt(fan_in)
        w = jax.random.uniform(kw, (fan_in, fan_out), jnp.float32, -bound, bound)
        b = jax.random.uniform(kb, (1, fan_out), jnp.float32, -bound, bound)
        return w, b

    w1, b1 = lin(ks[0], ks[1], input_dim, hidden_dim)
    w2, b2 = lin(ks[2], ks[3], hidden_dim, latent_dim * 2)   # merged mu|logvar head
    w3, b3 = lin(ks[4], ks[5], latent_dim, hidden_dim)
    w4, b4 = lin(ks[6], ks[7], hidden_dim, input_dim)
    return dict(w1=w1, b1=b1, w2=w2, b2=b2, w3=w3, b3=b3, w4=w4, b4=b4)


def _default_num_row_tiles():
    """2 parallel row tiles when one JAX device spans 2 TensorCores, else 1."""
    try:
        kind = jax.devices()[0].device_kind.lower()
    except Exception:
        return 1
    if any(tag in kind for tag in ("v7", "v4", "v5p")):
        return 2
    return 1


def vae_only_forward(x_seq, params, eps, *, num_row_tiles=None):
    """Pallas implementation of VAE_Only.forward.

    x_seq  : (B, S, input_dim) float32
    params : dict of natural-shape (in, out) weights / (1, out) biases
    eps    : (B*S, latent_dim) float32 standard-normal noise (torch.randn_like)
    Returns (x_recon, mu, logvar) with the same shapes as the torch module.
    """
    B, S, D = x_seq.shape
    N = B * S
    H = params["w1"].shape[1]
    L = params["w3"].shape[0]

    if num_row_tiles is None:
        num_row_tiles = _default_num_row_tiles()
    tiles = max(1, min(int(num_row_tiles), pl.cdiv(N, SUBLANE)))

    # Row tile: multiple of the 8-row sublane; one tile on 1-core chips, two
    # balanced tiles on 2-core chips.  Last (ragged) block is masked by Pallas.
    TN = min(_round_up(pl.cdiv(N, tiles), SUBLANE), _round_up(N, SUBLANE))
    grid = (pl.cdiv(N, TN),)

    x_flat = x_seq.reshape(N, D).astype(jnp.float32)
    eps = eps.astype(jnp.float32)

    def row_spec(cols):
        # Row-tiled blocks at natural lane width (block last dim == array dim).
        return pl.BlockSpec((TN, cols), lambda i: (i, 0))

    def resident(shape):
        # Full-array block, constant index_map: fetched once, resident in VMEM.
        return pl.BlockSpec(shape, lambda i: (0, 0))

    recon, mu, logvar = pl.pallas_call(
        _vae_kernel,
        out_shape=(
            jax.ShapeDtypeStruct((N, D), jnp.float32),
            jax.ShapeDtypeStruct((N, L), jnp.float32),
            jax.ShapeDtypeStruct((N, L), jnp.float32),
        ),
        grid=grid,
        in_specs=[
            row_spec(D),                                   # x
            row_spec(L),                                   # eps
            resident((D, H)), resident((1, H)),            # w1, b1
            resident((H, 2 * L)), resident((1, 2 * L)),    # w2 (merged), b2
            resident((L, H)), resident((1, H)),            # w3, b3
            resident((H, D)), resident((1, D)),            # w4, b4
        ],
        out_specs=(row_spec(D), row_spec(L), row_spec(L)),
        compiler_params=pltpu.CompilerParams(
            dimension_semantics=("parallel",),  # shards row tiles across cores
        ),
    )(x_flat, eps,
      params["w1"], params["b1"], params["w2"], params["b2"],
      params["w3"], params["b3"], params["w4"], params["b4"])

    return (recon.reshape(B, S, D),
            mu.reshape(B, S, L),
            logvar.reshape(B, S, L))


def _reference_forward(x_seq, params, eps):
    """Pure-JAX reference for correctness checking."""
    B, S, D = x_seq.shape
    L = params["w3"].shape[0]
    x = x_seq.reshape(-1, D)
    h = jnp.maximum(x @ params["w1"] + params["b1"], 0.0)
    enc = h @ params["w2"] + params["b2"]
    mu, logvar = enc[:, :L], enc[:, L:]
    z = mu + eps * jnp.exp(0.5 * logvar)
    h2 = jnp.maximum(z @ params["w3"] + params["b3"], 0.0)
    recon = h2 @ params["w4"] + params["b4"]
    return recon.reshape(B, S, D), mu.reshape(B, S, L), logvar.reshape(B, S, L)


if __name__ == "__main__":
    # Shapes from the PyTorch module's constants.
    batch, seq = 32, 15
    input_dim, latent_dim, hidden_dim = 20, 10, 64

    key = jax.random.PRNGKey(0)
    k_x, k_eps, k_params = jax.random.split(key, 3)

    x_seq = jax.random.normal(k_x, (batch, seq, input_dim), jnp.float32)
    # torch.randn_like equivalent, sampled outside the kernel.
    eps = jax.random.normal(k_eps, (batch * seq, latent_dim), jnp.float32)
    params = init_params(k_params, input_dim, latent_dim, hidden_dim)

    fwd = jax.jit(vae_only_forward)
    x_recon, mu, logvar = fwd(x_seq, params, eps)
    jax.block_until_ready((x_recon, mu, logvar))

    # sanity check against pure-JAX reference
    r_recon, r_mu, r_logvar = _reference_forward(x_seq, params, eps)
    assert x_recon.shape == (batch, seq, input_dim)
    assert mu.shape == (batch, seq, latent_dim)
    assert logvar.shape == (batch, seq, latent_dim)
    assert jnp.allclose(x_recon, r_recon, atol=1e-3, rtol=1e-3)
    assert jnp.allclose(mu, r_mu, atol=1e-3, rtol=1e-3)
    assert jnp.allclose(logvar, r_logvar, atol=1e-3, rtol=1e-3)

    print("KERNEL_OK")
</pallas_src>

<mosaic_0001>
module attributes {stable_mosaic.version = 11 : i64} {
  func.func @_vae_kernel(%arg0: i32, %arg1: memref<480x20xf32, #tpu.memory_space<vmem>>, %arg2: memref<480x10xf32, #tpu.memory_space<vmem>>, %arg3: memref<20x64xf32, #tpu.memory_space<vmem>>, %arg4: memref<1x64xf32, #tpu.memory_space<vmem>>, %arg5: memref<64x20xf32, #tpu.memory_space<vmem>>, %arg6: memref<1x20xf32, #tpu.memory_space<vmem>>, %arg7: memref<10x64xf32, #tpu.memory_space<vmem>>, %arg8: memref<1x64xf32, #tpu.memory_space<vmem>>, %arg9: memref<64x20xf32, #tpu.memory_space<vmem>>, %arg10: memref<1x20xf32, #tpu.memory_space<vmem>>, %arg11: memref<480x20xf32, #tpu.memory_space<vmem>>, %arg12: memref<480x10xf32, #tpu.memory_space<vmem>>, %arg13: memref<480x10xf32, #tpu.memory_space<vmem>>) attributes {dimension_semantics = [#tpu.dimension_semantics<parallel>], iteration_bounds = array<i64: 1>, scalar_prefetch = 0 : i64, scratch_operands = 0 : i64, tpu.core_type = #tpu.core_type<tc>, window_params = [{transform_indices = @transform_0, window_bounds = array<i64: 480, 20>}, {transform_indices = @transform_1, window_bounds = array<i64: 480, 10>}, {pipeline_mode = #tpu.pipeline_mode<synchronous>, transform_indices = @transform_2, window_bounds = array<i64: 20, 64>}, {pipeline_mode = #tpu.pipeline_mode<synchronous>, transform_indices = @transform_3, window_bounds = array<i64: 1, 64>}, {pipeline_mode = #tpu.pipeline_mode<synchronous>, transform_indices = @transform_4, window_bounds = array<i64: 64, 20>}, {pipeline_mode = #tpu.pipeline_mode<synchronous>, transform_indices = @transform_5, window_bounds = array<i64: 1, 20>}, {pipeline_mode = #tpu.pipeline_mode<synchronous>, transform_indices = @transform_6, window_bounds = array<i64: 10, 64>}, {pipeline_mode = #tpu.pipeline_mode<synchronous>, transform_indices = @transform_7, window_bounds = array<i64: 1, 64>}, {pipeline_mode = #tpu.pipeline_mode<synchronous>, transform_indices = @transform_8, window_bounds = array<i64: 64, 20>}, {pipeline_mode = #tpu.pipeline_mode<synchronous>, transform_indices = @transform_9, window_bounds = array<i64: 1, 20>}, {transform_indices = @transform_10, window_bounds = array<i64: 480, 20>}, {transform_indices = @transform_11, window_bounds = array<i64: 480, 10>}, {transform_indices = @transform_12, window_bounds = array<i64: 480, 10>}]} {
    %c0 = arith.constant 0 : index
    %c0_0 = arith.constant 0 : index
    %0 = vector.load %arg1[%c0, %c0_0] : memref<480x20xf32, #tpu.memory_space<vmem>>, vector<480x20xf32>
    %c0_1 = arith.constant 0 : index
    %c0_2 = arith.constant 0 : index
    %1 = vector.load %arg3[%c0_1, %c0_2] : memref<20x64xf32, #tpu.memory_space<vmem>>, vector<20x64xf32>
    %cst = arith.constant dense<0.000000e+00> : vector<480x64xf32>
    %2 = tpu.matmul %0, %1, %cst {dimension_numbers = #tpu.dot_dimension_numbers<[1], [0], [0], [1], [0, 0, 1, 1], [], []>} : vector<480x20xf32>, vector<20x64xf32>, vector<480x64xf32> -> vector<480x64xf32>
    %c0_3 = arith.constant 0 : index
    %c0_4 = arith.constant 0 : index
    %3 = vector.load %arg4[%c0_3, %c0_4] : memref<1x64xf32, #tpu.memory_space<vmem>>, vector<1x64xf32>
    %4 = vector.broadcast %3 : vector<1x64xf32> to vector<480x64xf32>
    %5 = arith.addf %2, %4 : vector<480x64xf32>
    %cst_5 = arith.constant 0.000000e+00 : f32
    %6 = vector.broadcast %cst_5 : f32 to vector<480x64xf32>
    %7 = arith.maximumf %5, %6 : vector<480x64xf32>
    %c0_6 = arith.constant 0 : index
    %c0_7 = arith.constant 0 : index
    %8 = vector.load %arg5[%c0_6, %c0_7] : memref<64x20xf32, #tpu.memory_space<vmem>>, vector<64x20xf32>
    %cst_8 = arith.constant dense<0.000000e+00> : vector<480x20xf32>
    %9 = tpu.matmul %7, %8, %cst_8 {dimension_numbers = #tpu.dot_dimension_numbers<[1], [0], [0], [1], [0, 0, 1, 1], [], []>} : vector<480x64xf32>, vector<64x20xf32>, vector<480x20xf32> -> vector<480x20xf32>
    %c0_9 = arith.constant 0 : index
    %c0_10 = arith.constant 0 : index
    %10 = vector.load %arg6[%c0_9, %c0_10] : memref<1x20xf32, #tpu.memory_space<vmem>>, vector<1x20xf32>
    %11 = vector.broadcast %10 : vector<1x20xf32> to vector<480x20xf32>
    %12 = arith.addf %9, %11 : vector<480x20xf32>
    %13 = vector.extract_strided_slice %12 {offsets = [0, 0], sizes = [480, 10], strides = [1, 1]} : vector<480x20xf32> to vector<480x10xf32>
    %14 = vector.extract_strided_slice %12 {offsets = [0, 10], sizes = [480, 10], strides = [1, 1]} : vector<480x20xf32> to vector<480x10xf32>
    %c0_11 = arith.constant 0 : index
    %c0_12 = arith.constant 0 : index
    %15 = vector.load %arg2[%c0_11, %c0_12] : memref<480x10xf32, #tpu.memory_space<vmem>>, vector<480x10xf32>
    %cst_13 = arith.constant 5.000000e-01 : f32
    %16 = vector.broadcast %cst_13 : f32 to vector<480x10xf32>
    %17 = arith.mulf %16, %14 : vector<480x10xf32>
    %18 = math.exp %17 : vector<480x10xf32>
    %19 = arith.mulf %15, %18 : vector<480x10xf32>
    %20 = arith.addf %13, %19 : vector<480x10xf32>
    %c0_14 = arith.constant 0 : index
    %c0_15 = arith.constant 0 : index
    %21 = vector.load %arg7[%c0_14, %c0_15] : memref<10x64xf32, #tpu.memory_space<vmem>>, vector<10x64xf32>
    %cst_16 = arith.constant dense<0.000000e+00> : vector<480x64xf32>
    %22 = tpu.matmul %20, %21, %cst_16 {dimension_numbers = #tpu.dot_dimension_numbers<[1], [0], [0], [1], [0, 0, 1, 1], [], []>} : vector<480x10xf32>, vector<10x64xf32>, vector<480x64xf32> -> vector<480x64xf32>
    %c0_17 = arith.constant 0 : index
    %c0_18 = arith.constant 0 : index
    %23 = vector.load %arg8[%c0_17, %c0_18] : memref<1x64xf32, #tpu.memory_space<vmem>>, vector<1x64xf32>
    %24 = vector.broadcast %23 : vector<1x64xf32> to vector<480x64xf32>
    %25 = arith.addf %22, %24 : vector<480x64xf32>
    %cst_19 = arith.constant 0.000000e+00 : f32
    %26 = vector.broadcast %cst_19 : f32 to vector<480x64xf32>
    %27 = arith.maximumf %25, %26 : vector<480x64xf32>
    %c0_20 = arith.constant 0 : index
    %c0_21 = arith.constant 0 : index
    %28 = vector.load %arg9[%c0_20, %c0_21] : memref<64x20xf32, #tpu.memory_space<vmem>>, vector<64x20xf32>
    %cst_22 = arith.constant dense<0.000000e+00> : vector<480x20xf32>
    %29 = tpu.matmul %27, %28, %cst_22 {dimension_numbers = #tpu.dot_dimension_numbers<[1], [0], [0], [1], [0, 0, 1, 1], [], []>} : vector<480x64xf32>, vector<64x20xf32>, vector<480x20xf32> -> vector<480x20xf32>
    %c0_23 = arith.constant 0 : index
    %c0_24 = arith.constant 0 : index
    %30 = vector.load %arg10[%c0_23, %c0_24] : memref<1x20xf32, #tpu.memory_space<vmem>>, vector<1x20xf32>
    %31 = vector.broadcast %30 : vector<1x20xf32> to vector<480x20xf32>
    %32 = arith.addf %29, %31 : vector<480x20xf32>
    %c0_25 = arith.constant 0 : index
    %c0_26 = arith.constant 0 : index
    %33 = vector.load %arg11[%c0_25, %c0_26] : memref<480x20xf32, #tpu.memory_space<vmem>>, vector<480x20xf32>
    tpu.vector_store %arg11[%c0_25, %c0_26], %32 {strides = array<i32>} : memref<480x20xf32, #tpu.memory_space<vmem>>, vector<480x20xf32>,
    %c0_27 = arith.constant 0 : index
    %c0_28 = arith.constant 0 : index
    %34 = vector.load %arg12[%c0_27, %c0_28] : memref<480x10xf32, #tpu.memory_space<vmem>>, vector<480x10xf32>
    tpu.vector_store %arg12[%c0_27, %c0_28], %13 {strides = array<i32>} : memref<480x10xf32, #tpu.memory_space<vmem>>, vector<480x10xf32>,
    %c0_29 = arith.constant 0 : index
    %c0_30 = arith.constant 0 : index
    %35 = vector.load %arg13[%c0_29, %c0_30] : memref<480x10xf32, #tpu.memory_space<vmem>>, vector<480x10xf32>
    tpu.vector_store %arg13[%c0_29, %c0_30], %14 {strides = array<i32>} : memref<480x10xf32, #tpu.memory_space<vmem>>, vector<480x10xf32>,
    return
  }
  func.func @transform_0(%arg0: i32) -> (i32, i32) {
    %c0_i32 = arith.constant 0 : i32
    %c0_i32_0 = arith.constant 0 : i32
    return %arg0, %c0_i32 : i32, i32
  }
  func.func @transform_1(%arg0: i32) -> (i32, i32) {
    %c0_i32 = arith.constant 0 : i32
    %c0_i32_0 = arith.constant 0 : i32
    return %arg0, %c0_i32 : i32, i32
  }
  func.func @transform_2(%arg0: i32) -> (i32, i32) {
    %c0_i32 = arith.constant 0 : i32
    %c0_i32_0 = arith.constant 0 : i32
    %c0_i32_1 = arith.constant 0 : i32
    return %c0_i32, %c0_i32_0 : i32, i32
  }
  func.func @transform_3(%arg0: i32) -> (i32, i32) {
    %c0_i32 = arith.constant 0 : i32
    %c0_i32_0 = arith.constant 0 : i32
    %c0_i32_1 = arith.constant 0 : i32
    return %c0_i32, %c0_i32_0 : i32, i32
  }
  func.func @transform_4(%arg0: i32) -> (i32, i32) {
    %c0_i32 = arith.constant 0 : i32
    %c0_i32_0 = arith.constant 0 : i32
    %c0_i32_1 = arith.constant 0 : i32
    return %c0_i32, %c0_i32_0 : i32, i32
  }
  func.func @transform_5(%arg0: i32) -> (i32, i32) {
    %c0_i32 = arith.constant 0 : i32
    %c0_i32_0 = arith.constant 0 : i32
    %c0_i32_1 = arith.constant 0 : i32
    return %c0_i32, %c0_i32_0 : i32, i32
  }
  func.func @transform_6(%arg0: i32) -> (i32, i32) {
    %c0_i32 = arith.constant 0 : i32
    %c0_i32_0 = arith.constant 0 : i32
    %c0_i32_1 = arith.constant 0 : i32
    return %c0_i32, %c0_i32_0 : i32, i32
  }
  func.func @transform_7(%arg0: i32) -> (i32, i32) {
    %c0_i32 = arith.constant 0 : i32
    %c0_i32_0 = arith.constant 0 : i32
    %c0_i32_1 = arith.constant 0 : i32
    return %c0_i32, %c0_i32_0 : i32, i32
  }
  func.func @transform_8(%arg0: i32) -> (i32, i32) {
    %c0_i32 = arith.constant 0 : i32
    %c0_i32_0 = arith.constant 0 : i32
    %c0_i32_1 = arith.constant 0 : i32
    return %c0_i32, %c0_i32_0 : i32, i32
  }
  func.func @transform_9(%arg0: i32) -> (i32, i32) {
    %c0_i32 = arith.constant 0 : i32
    %c0_i32_0 = arith.constant 0 : i32
    %c0_i32_1 = arith.constant 0 : i32
    return %c0_i32, %c0_i32_0 : i32, i32
  }
  func.func @transform_10(%arg0: i32) -> (i32, i32) {
    %c0_i32 = arith.constant 0 : i32
    %c0_i32_0 = arith.constant 0 : i32
    return %arg0, %c0_i32 : i32, i32
  }
  func.func @transform_11(%arg0: i32) -> (i32, i32) {
    %c0_i32 = arith.constant 0 : i32
    %c0_i32_0 = arith.constant 0 : i32
    return %arg0, %c0_i32 : i32, i32
  }
  func.func @transform_12(%arg0: i32) -> (i32, i32) {
    %c0_i32 = arith.constant 0 : i32
    %c0_i32_0 = arith.constant 0 : i32
    return %arg0, %c0_i32 : i32, i32
  }
}

</mosaic_0001>

<llo_original>
// kernel: vae_only_forward.1
$region0: #{vae_only_forward.1}
  #allocation0 [shape = 'u32[]', space=smem, size = 0x4, offset = 0x4, fixed_abs, tag = 'smem constant byte address 0x4 - core index']
  #allocation1 [shape = 'u32[144,128]{1,0:T(1,128)}', space=vmem, size = 0x12000, scoped, tag = 'internal scratch']
  %s0 = inlined_call_operand.vmem [shape: f32[480,20], index: 0, kind: input, shape index: {}]
  %s1 = inlined_call_operand.vmem [shape: f32[480,10], index: 1, kind: input, shape index: {}]
  %s2 = inlined_call_operand.vmem [shape: f32[20,64], index: 2, kind: input, shape index: {}]
  %s3 = inlined_call_operand.vmem [shape: f32[1,64], index: 3, kind: input, shape index: {}]
  %s4 = inlined_call_operand.vmem [shape: f32[64,20], index: 4, kind: input, shape index: {}]
  %s5 = inlined_call_operand.vmem [shape: f32[1,20], index: 5, kind: input, shape index: {}]
  %s6 = inlined_call_operand.vmem [shape: f32[10,64], index: 6, kind: input, shape index: {}]
  %s7 = inlined_call_operand.vmem [shape: f32[1,64], index: 7, kind: input, shape index: {}]
  %s8 = inlined_call_operand.vmem [shape: f32[64,20], index: 8, kind: input, shape index: {}]
  %s9 = inlined_call_operand.vmem [shape: f32[1,20], index: 9, kind: input, shape index: {}]
  %s10 = inlined_call_operand.vmem [shape: f32[480,20], index: 10, kind: output, shape index: {0}]
  %s11 = inlined_call_operand.vmem [shape: f32[480,10], index: 11, kind: output, shape index: {1}]
  %s12 = inlined_call_operand.vmem [shape: f32[480,10], index: 12, kind: output, shape index: {2}]
  %13 = xla_tuple %s10, %s11, %s12
  %s14 = sld [smem:[#allocation0]]
  $region66: #{vae_only_forward.1} parent=0
    _
  %s16 = ssub.s32 1, %s14
  %s17 = scalar_select 0, %s16, %s14
  // Predicated region
  $region2: #{vae_only_forward.1} parent=0 // pred_check
    _
  $region3: #{vae_only_forward.1} parent=0 // pred_check_branch
    %19 = sbr.rel (0) target = $region5
  $region4: #{vae_only_forward.1} parent=0 // pred_region
    _
  $region5: #{vae_only_forward.1} parent=0 // pred_fallthru
    _
  // Predicated region
  $region6: #{vae_only_forward.1} parent=0 // pred_check
    _
  $region7: #{vae_only_forward.1} parent=0 // pred_check_branch
    %21 = sbr.rel (0) target = $region9
  $region8: #{vae_only_forward.1} parent=0 // pred_region
    _
  $region9: #{vae_only_forward.1} parent=0 // pred_fallthru
    _
  // Predicated region
  $region10: #{vae_only_forward.1} parent=0 // pred_check
    _
  $region11: #{vae_only_forward.1} parent=0 // pred_check_branch
    %23 = sbr.rel (0) target = $region13
  $region12: #{vae_only_forward.1} parent=0 // pred_region
    _
  $region13: #{vae_only_forward.1} parent=0 // pred_fallthru
    _
  // Predicated region
  $region14: #{vae_only_forward.1} parent=0 // pred_check
    _
  $region15: #{vae_only_forward.1} parent=0 // pred_check_branch
    %25 = sbr.rel (0) target = $region17
  $region16: #{vae_only_forward.1} parent=0 // pred_region
    _
  $region17: #{vae_only_forward.1} parent=0 // pred_fallthru
    _
  // Predicated region
  $region18: #{vae_only_forward.1} parent=0 // pred_check
    _
  $region19: #{vae_only_forward.1} parent=0 // pred_check_branch
    %27 = sbr.rel (0) target = $region21
  $region20: #{vae_only_forward.1} parent=0 // pred_region
    _
  $region21: #{vae_only_forward.1} parent=0 // pred_fallthru
    _
  // Predicated region
  $region22: #{vae_only_forward.1} parent=0 // pred_check
    _
  $region23: #{vae_only_forward.1} parent=0 // pred_check_branch
    %29 = sbr.rel (0) target = $region25
  $region24: #{vae_only_forward.1} parent=0 // pred_region
    _
  $region25: #{vae_only_forward.1} parent=0 // pred_fallthru
    _
  // Predicated region
  $region26: #{vae_only_forward.1} parent=0 // pred_check
    _
  $region27: #{vae_only_forward.1} parent=0 // pred_check_branch
    %31 = sbr.rel (0) target = $region29
  $region28: #{vae_only_forward.1} parent=0 // pred_region
    _
  $region29: #{vae_only_forward.1} parent=0 // pred_fallthru
    _
  // Predicated region
  $region30: #{vae_only_forward.1} parent=0 // pred_check
    _
  $region31: #{vae_only_forward.1} parent=0 // pred_check_branch
    %33 = sbr.rel (0) target = $region33
  $region32: #{vae_only_forward.1} parent=0 // pred_region
    _
  $region33: #{vae_only_forward.1} parent=0 // pred_fallthru
    _
  // Predicated region
  $region34: #{vae_only_forward.1} parent=0 // pred_check
    _
  $region35: #{vae_only_forward.1} parent=0 // pred_check_branch
    %35 = sbr.rel (0) target = $region37
  $region36: #{vae_only_forward.1} parent=0 // pred_region
    _
  $region37: #{vae_only_forward.1} parent=0 // pred_fallthru
    _
  // Predicated region
  $region38: #{vae_only_forward.1} parent=0 // pred_check
    _
  $region39: #{vae_only_forward.1} parent=0 // pred_check_branch
    %37 = sbr.rel (0) target = $region41
  $region40: #{vae_only_forward.1} parent=0 // pred_region
    _
  $region41: #{vae_only_forward.1} parent=0 // pred_fallthru
    _
  %v38 = vld [vmem:[%s0] sm:$0xff]
  %v39 = vld [vmem:[%s0 + $0x8] sm:$0xff]
  %v40 = vld [vmem:[%s0 + $0x10] sm:$0xff]
  %v41 = vld [vmem:[%s0 + $0x18] sm:$0xff]
  %v42 = vld [vmem:[%s0 + $0x20] sm:$0xff]
  %v43 = vld [vmem:[%s0 + $0x28] sm:$0xff]
  %v44 = vld [vmem:[%s0 + $0x30] sm:$0xff]
  %v45 = vld [vmem:[%s0 + $0x38] sm:$0xff]
  %v46 = vld [vmem:[%s0 + $0x40] sm:$0xff]
  %v47 = vld [vmem:[%s0 + $0x48] sm:$0xff]
  %v48 = vld [vmem:[%s0 + $0x50] sm:$0xff]
  %v49 = vld [vmem:[%s0 + $0x58] sm:$0xff]
  %v50 = vld [vmem:[%s0 + $0x60] sm:$0xff]
  %v51 = vld [vmem:[%s0 + $0x68] sm:$0xff]
  %v52 = vld [vmem:[%s0 + $0x70] sm:$0xff]
  %v53 = vld [vmem:[%s0 + $0x78] sm:$0xff]
  %v54 = vld [vmem:[%s0 + $0x80] sm:$0xff]
  %v55 = vld [vmem:[%s0 + $0x88] sm:$0xff]
  %v56 = vld [vmem:[%s0 + $0x90] sm:$0xff]
  %v57 = vld [vmem:[%s0 + $0x98] sm:$0xff]
  %v58 = vld [vmem:[%s0 + $0xa0] sm:$0xff]
  %v59 = vld [vmem:[%s0 + $0xa8] sm:$0xff]
  %v60 = vld [vmem:[%s0 + $0xb0] sm:$0xff]
  %v61 = vld [vmem:[%s0 + $0xb8] sm:$0xff]
  %v62 = vld [vmem:[%s0 + $0xc0] sm:$0xff]
  %v63 = vld [vmem:[%s0 + $0xc8] sm:$0xff]
  %v64 = vld [vmem:[%s0 + $0xd0] sm:$0xff]
  %v65 = vld [vmem:[%s0 + $0xd8] sm:$0xff]
  %v66 = vld [vmem:[%s0 + $0xe0] sm:$0xff]
  %v67 = vld [vmem:[%s0 + $0xe8] sm:$0xff]
  %v68 = vld [vmem:[%s0 + $0xf0] sm:$0xff]
  %v69 = vld [vmem:[%s0 + $0xf8] sm:$0xff]
  %v70 = vld [vmem:[%s0 + $0x100] sm:$0xff]
  %v71 = vld [vmem:[%s0 + $0x108] sm:$0xff]
  %v72 = vld [vmem:[%s0 + $0x110] sm:$0xff]
  %v73 = vld [vmem:[%s0 + $0x118] sm:$0xff]
  %v74 = vld [vmem:[%s0 + $0x120] sm:$0xff]
  %v75 = vld [vmem:[%s0 + $0x128] sm:$0xff]
  %v76 = vld [vmem:[%s0 + $0x130] sm:$0xff]
  %v77 = vld [vmem:[%s0 + $0x138] sm:$0xff]
  %v78 = vld [vmem:[%s0 + $0x140] sm:$0xff]
  %v79 = vld [vmem:[%s0 + $0x148] sm:$0xff]
  %v80 = vld [vmem:[%s0 + $0x150] sm:$0xff]
  %v81 = vld [vmem:[%s0 + $0x158] sm:$0xff]
  %v82 = vld [vmem:[%s0 + $0x160] sm:$0xff]
  %v83 = vld [vmem:[%s0 + $0x168] sm:$0xff]
  %v84 = vld [vmem:[%s0 + $0x170] sm:$0xff]
  %v85 = vld [vmem:[%s0 + $0x178] sm:$0xff]
  %v86 = vld [vmem:[%s0 + $0x180] sm:$0xff]
  %v87 = vld [vmem:[%s0 + $0x188] sm:$0xff]
  %v88 = vld [vmem:[%s0 + $0x190] sm:$0xff]
  %v89 = vld [vmem:[%s0 + $0x198] sm:$0xff]
  %v90 = vld [vmem:[%s0 + $0x1a0] sm:$0xff]
  %v91 = vld [vmem:[%s0 + $0x1a8] sm:$0xff]
  %v92 = vld [vmem:[%s0 + $0x1b0] sm:$0xff]
  %v93 = vld [vmem:[%s0 + $0x1b8] sm:$0xff]
  %v94 = vld [vmem:[%s0 + $0x1c0] sm:$0xff]
  %v95 = vld [vmem:[%s0 + $0x1c8] sm:$0xff]
  %v96 = vld [vmem:[%s0 + $0x1d0] sm:$0xff]
  %v97 = vld [vmem:[%s0 + $0x1d8] sm:$0xff]
  %v98 = vld [vmem:[%s2] sm:$0xff]
  %v99 = vld [vmem:[%s2 + $0x8] sm:$0xff]
  %v100 = vld [vmem:[%s2 + $0x10] sm:$0xf]
  %v101 = vld [vmem:[%s3] sm:$0x1]
  %v103 = vlaneseq
  %v104 = vshrl.u32 %v103, 7
  %v105 = vsub.s32 0, %v104
  %v106 = vrot.slane %v101, %v105
  %vm108 = vcmask 162816
  %v110 = vsel %vm108, %v38, 0
  %v113 = vsel %vm108, %v39, 0
  %v116 = vsel %vm108, %v40, 0
  %v119 = vsel %vm108, %v41, 0
  %v122 = vsel %vm108, %v42, 0
  %v125 = vsel %vm108, %v43, 0
  %v128 = vsel %vm108, %v44, 0
  %v131 = vsel %vm108, %v45, 0
  %v134 = vsel %vm108, %v46, 0
  %v137 = vsel %vm108, %v47, 0
  %v140 = vsel %vm108, %v48, 0
  %v143 = vsel %vm108, %v49, 0
  %v146 = vsel %vm108, %v50, 0
  %v149 = vsel %vm108, %v51, 0
  %v152 = vsel %vm108, %v52, 0
  %v155 = vsel %vm108, %v53, 0
  %v158 = vsel %vm108, %v54, 0
  %v161 = vsel %vm108, %v55, 0
  %v164 = vsel %vm108, %v56, 0
  %v167 = vsel %vm108, %v57, 0
  %v170 = vsel %vm108, %v58, 0
  %v173 = vsel %vm108, %v59, 0
  %v176 = vsel %vm108, %v60, 0
  %v179 = vsel %vm108, %v61, 0
  %v182 = vsel %vm108, %v62, 0
  %v185 = vsel %vm108, %v63, 0
  %v188 = vsel %vm108, %v64, 0
  %v191 = vsel %vm108, %v65, 0
  %v194 = vsel %vm108, %v66, 0
  %v197 = vsel %vm108, %v67, 0
  %v200 = vsel %vm108, %v68, 0
  %v203 = vsel %vm108, %v69, 0
  %v206 = vsel %vm108, %v70, 0
  %v209 = vsel %vm108, %v71, 0
  %v212 = vsel %vm108, %v72, 0
  %v215 = vsel %vm108, %v73, 0
  %v218 = vsel %vm108, %v74, 0
  %v221 = vsel %vm108, %v75, 0
  %v224 = vsel %vm108, %v76, 0
  %v227 = vsel %vm108, %v77, 0
  %v230 = vsel %vm108, %v78, 0
  %v233 = vsel %vm108, %v79, 0
  %v236 = vsel %vm108, %v80, 0
  %v239 = vsel %vm108, %v81, 0
  %v242 = vsel %vm108, %v82, 0
  %v245 = vsel %vm108, %v83, 0
  %v248 = vsel %vm108, %v84, 0
  %v251 = vsel %vm108, %v85, 0
  %v254 = vsel %vm108, %v86, 0
  %v257 = vsel %vm108, %v87, 0
  %v260 = vsel %vm108, %v88, 0
  %v263 = vsel %vm108, %v89, 0
  %v266 = vsel %vm108, %v90, 0
  %v269 = vsel %vm108, %v91, 0
  %v272 = vsel %vm108, %v92, 0
  %v275 = vsel %vm108, %v93, 0
  %v278 = vsel %vm108, %v94, 0
  %v281 = vsel %vm108, %v95, 0
  %v284 = vsel %vm108, %v96, 0
  %v287 = vsel %vm108, %v97, 0
  %vm289 = vcmask 1043456
  %v291 = vsel %vm289, %v100, 0
  %293 = vmatprep.subr.mxu0 0.0
  %294 = vmatpush1.msra.mxu0 %v98
  %295 = vmatprep.subr.mxu0 0.0
  %296 = vmatpush1.msra.mxu0 %v99
  %297 = vmatprep.subr.mxu0 0.0
  %298 = vmatpush1.msra.mxu0 %v291
  %299 = vmatprep.subr.mxu0 0.0
  %300 = vmatpush1.msra.mxu0 0.0
  %301 = vmatprep.subr.mxu0 0.0
  %302 = vmatpush1.msra.mxu0 0.0
  %303 = vmatprep.subr.mxu0 0.0
  %304 = vmatpush1.msra.mxu0 0.0
  %305 = vmatprep.subr.mxu0 0.0
  %306 = vmatpush1.msra.mxu0 0.0
  %307 = vmatprep.subr.mxu0 0.0
  %308 = vmatpush1.msra.mxu0 0.0
  %309 = vmatprep.subr.mxu0 0.0
  %310 = vmatpush1.msra.mxu0 0.0
  %311 = vmatprep.subr.mxu0 0.0
  %312 = vmatpush1.msra.mxu0 0.0
  %313 = vmatprep.subr.mxu0 0.0
  %314 = vmatpush1.msra.mxu0 0.0
  %315 = vmatprep.subr.mxu0 0.0
  %316 = vmatpush1.msra.mxu0 0.0
  %317 = vmatprep.subr.mxu0 0.0
  %318 = vmatpush1.msra.mxu0 0.0
  %319 = vmatprep.subr.mxu0 0.0
  %320 = vmatpush1.msra.mxu0 0.0
  %321 = vmatprep.subr.mxu0 0.0
  %322 = vmatpush1.msra.mxu0 0.0
  %323 = vmatprep.subr.mxu0 0.0
  %324 = vmatpush1.msra.mxu0 0.0
  %325 = vmatprep.subr.mxu0 0.0
  %326 = vmatpush1.msra.mxu0 0.0
  %327 = vmatprep.subr.mxu0 0.0
  %328 = vmatpush1.msra.mxu0 0.0
  %329 = vmatprep.subr.mxu0 0.0
  %330 = vmatpush1.msra.mxu0 0.0
  %331 = vmatprep.subr.mxu0 0.0
  %332 = vmatpush1.msra.mxu0 0.0
  %333 = vmatprep.subr.mxu0 0.0
  %334 = vmatpush1.msra.mxu0 0.0
  %335 = vmatprep.subr.mxu0 0.0
  %336 = vmatpush1.msra.mxu0 0.0
  %337 = vmatprep.subr.mxu0 0.0
  %338 = vmatpush1.msra.mxu0 0.0
  %339 = vmatprep.subr.mxu0 0.0
  %340 = vmatpush1.msra.mxu0 0.0
  %341 = vmatprep.subr.mxu0 0.0
  %342 = vmatpush1.msra.mxu0 0.0
  %343 = vmatprep.subr.mxu0 0.0
  %344 = vmatpush1.msra.mxu0 0.0
  %345 = vmatprep.subr.mxu0 0.0
  %346 = vmatpush1.msra.mxu0 0.0
  %347 = vmatprep.subr.mxu0 0.0
  %348 = vmatpush1.msra.mxu0 0.0
  %349 = vmatprep.subr.mxu0 0.0
  %350 = vmatpush1.msra.mxu0 0.0
  %351 = vmatprep.subr.mxu0 0.0
  %352 = vmatpush1.msra.mxu0 0.0
  %353 = vmatprep.subr.mxu0 0.0
  %354 = vmatpush1.msra.mxu0 0.0
  %355 = vmatprep.subr.mxu0 0.0
  %356 = vmatpush1.msra.mxu0 0.0
  %357 = vmatprep.mubr.f32.mxu0 0.0
  %358 = vmatmul.mubr.f32.gmra.mrb[0].mxu0 %v110
  %v359 = vpop.f32.mrb[0].mxu0
  %v360 = vadd.f32 %v106, %v359
  %v361 = vpop.f32.mrb[0].mxu0
  %362 = vmatprep.mubr.f32.mxu0 0.0
  %363 = vmatmul.mubr.f32.gmra.mrb[0].mxu0 %v113
  %v364 = vpop.f32.mrb[0].mxu0
  %v365 = vadd.f32 %v106, %v364
  %v366 = vpop.f32.mrb[0].mxu0
  %367 = vmatprep.mubr.f32.mxu0 0.0
  %368 = vmatmul.mubr.f32.gmra.mrb[0].mxu0 %v116
  %v369 = vpop.f32.mrb[0].mxu0
  %v370 = vadd.f32 %v106, %v369
  %v371 = vpop.f32.mrb[0].mxu0
  %372 = vmatprep.mubr.f32.mxu0 0.0
  %373 = vmatmul.mubr.f32.gmra.mrb[0].mxu0 %v119
  %v374 = vpop.f32.mrb[0].mxu0
  %v375 = vadd.f32 %v106, %v374
  %v376 = vpop.f32.mrb[0].mxu0
  %377 = vmatprep.mubr.f32.mxu0 0.0
  %378 = vmatmul.mubr.f32.gmra.mrb[0].mxu0 %v122
  %v379 = vpop.f32.mrb[0].mxu0
  %v380 = vadd.f32 %v106, %v379
  %v381 = vpop.f32.mrb[0].mxu0
  %382 = vmatprep.mubr.f32.mxu0 0.0
  %383 = vmatmul.mubr.f32.gmra.mrb[0].mxu0 %v125
  %v384 = vpop.f32.mrb[0].mxu0
  %v385 = vadd.f32 %v106, %v384
  %v386 = vpop.f32.mrb[0].mxu0
  %387 = vmatprep.mubr.f32.mxu0 0.0
  %388 = vmatmul.mubr.f32.gmra.mrb[0].mxu0 %v128
  %v389 = vpop.f32.mrb[0].mxu0
  %v390 = vadd.f32 %v106, %v389
  %v391 = vpop.f32.mrb[0].mxu0
  %392 = vmatprep.mubr.f32.mxu0 0.0
  %393 = vmatmul.mubr.f32.gmra.mrb[0].mxu0 %v131
  %v394 = vpop.f32.mrb[0].mxu0
  %v395 = vadd.f32 %v106, %v394
  %v396 = vpop.f32.mrb[0].mxu0
  %397 = vmatprep.mubr.f32.mxu0 0.0
  %398 = vmatmul.mubr.f32.gmra.mrb[0].mxu0 %v134
  %v399 = vpop.f32.mrb[0].mxu0
  %v400 = vadd.f32 %v106, %v399
  %v401 = vpop.f32.mrb[0].mxu0
  %402 = vmatprep.mubr.f32.mxu0 0.0
  %403 = vmatmul.mubr.f32.gmra.mrb[0].mxu0 %v137
  %v404 = vpop.f32.mrb[0].mxu0
  %v405 = vadd.f32 %v106, %v404
  %v406 = vpop.f32.mrb[0].mxu0
  %407 = vmatprep.mubr.f32.mxu0 0.0
  %408 = vmatmul.mubr.f32.gmra.mrb[0].mxu0 %v140
  %v409 = vpop.f32.mrb[0].mxu0
  %v410 = vadd.f32 %v106, %v409
  %v411 = vpop.f32.mrb[0].mxu0
  %412 = vmatprep.mubr.f32.mxu0 0.0
  %413 = vmatmul.mubr.f32.gmra.mrb[0].mxu0 %v143
  %v414 = vpop.f32.mrb[0].mxu0
  %v415 = vadd.f32 %v106, %v414
  %v416 = vpop.f32.mrb[0].mxu0
  %417 = vmatprep.mubr.f32.mxu0 0.0
  %418 = vmatmul.mubr.f32.gmra.mrb[0].mxu0 %v146
  %v419 = vpop.f32.mrb[0].mxu0
  %v420 = vadd.f32 %v106, %v419
  %v421 = vpop.f32.mrb[0].mxu0
  %422 = vmatprep.mubr.f32.mxu0 0.0
  %423 = vmatmul.mubr.f32.gmra.mrb[0].mxu0 %v149
  %v424 = vpop.f32.mrb[0].mxu0
  %v425 = vadd.f32 %v106, %v424
  %v426 = vpop.f32.mrb[0].mxu0
  %427 = vmatprep.mubr.f32.mxu0 0.0
  %428 = vmatmul.mubr.f32.gmra.mrb[0].mxu0 %v152
  %v429 = vpop.f32.mrb[0].mxu0
  %v430 = vadd.f32 %v106, %v429
  %v431 = vpop.f32.mrb[0].mxu0
  %432 = vmatprep.mubr.f32.mxu0 0.0
  %433 = vmatmul.mubr.f32.gmra.mrb[0].mxu0 %v155
  %v434 = vpop.f32.mrb[0].mxu0
  %v435 = vadd.f32 %v106, %v434
  %v436 = vpop.f32.mrb[0].mxu0
  %437 = vmatprep.mubr.f32.mxu0 0.0
  %438 = vmatmul.mubr.f32.gmra.mrb[0].mxu0 %v158
  %v439 = vpop.f32.mrb[0].mxu0
  %v440 = vadd.f32 %v106, %v439
  %v441 = vpop.f32.mrb[0].mxu0
  %442 = vmatprep.mubr.f32.mxu0 0.0
  %443 = vmatmul.mubr.f32.gmra.mrb[0].mxu0 %v161
  %v444 = vpop.f32.mrb[0].mxu0
  %v445 = vadd.f32 %v106, %v444
  %v446 = vpop.f32.mrb[0].mxu0
  %447 = vmatprep.mubr.f32.mxu0 0.0
  %448 = vmatmul.mubr.f32.gmra.mrb[0].mxu0 %v164
  %v449 = vpop.f32.mrb[0].mxu0
  %v450 = vadd.f32 %v106, %v449
  %v451 = vpop.f32.mrb[0].mxu0
  %452 = vmatprep.mubr.f32.mxu0 0.0
  %453 = vmatmul.mubr.f32.gmra.mrb[0].mxu0 %v167
  %v454 = vpop.f32.mrb[0].mxu0
  %v455 = vadd.f32 %v106, %v454
  %v456 = vpop.f32.mrb[0].mxu0
  %457 = vmatprep.mubr.f32.mxu0 0.0
  %458 = vmatmul.mubr.f32.gmra.mrb[0].mxu0 %v170
  %v459 = vpop.f32.mrb[0].mxu0
  %v460 = vadd.f32 %v106, %v459
  %v461 = vpop.f32.mrb[0].mxu0
  %462 = vmatprep.mubr.f32.mxu0 0.0
  %463 = vmatmul.mubr.f32.gmra.mrb[0].mxu0 %v173
  %v464 = vpop.f32.mrb[0].mxu0
  %v465 = vadd.f32 %v106, %v464
  %v466 = vpop.f32.mrb[0].mxu0
  %467 = vmatprep.mubr.f32.mxu0 0.0
  %468 = vmatmul.mubr.f32.gmra.mrb[0].mxu0 %v176
  %v469 = vpop.f32.mrb[0].mxu0
  %v470 = vadd.f32 %v106, %v469
  %v471 = vpop.f32.mrb[0].mxu0
  %472 = vmatprep.mubr.f32.mxu0 0.0
  %473 = vmatmul.mubr.f32.gmra.mrb[0].mxu0 %v179
  %v474 = vpop.f32.mrb[0].mxu0
  %v475 = vadd.f32 %v106, %v474
  %v476 = vpop.f32.mrb[0].mxu0
  %477 = vmatprep.mubr.f32.mxu0 0.0
  %478 = vmatmul.mubr.f32.gmra.mrb[0].mxu0 %v182
  %v479 = vpop.f32.mrb[0].mxu0
  %v480 = vadd.f32 %v106, %v479
  %v481 = vpop.f32.mrb[0].mxu0
  %482 = vmatprep.mubr.f32.mxu0 0.0
  %483 = vmatmul.mubr.f32.gmra.mrb[0].mxu0 %v185
  %v484 = vpop.f32.mrb[0].mxu0
  %v485 = vadd.f32 %v106, %v484
  %v486 = vpop.f32.mrb[0].mxu0
  %487 = vmatprep.mubr.f32.mxu0 0.0
  %488 = vmatmul.mubr.f32.gmra.mrb[0].mxu0 %v188
  %v489 = vpop.f32.mrb[0].mxu0
  %v490 = vadd.f32 %v106, %v489
  %v491 = vpop.f32.mrb[0].mxu0
  %492 = vmatprep.mubr.f32.mxu0 0.0
  %493 = vmatmul.mubr.f32.gmra.mrb[0].mxu0 %v191
  %v494 = vpop.f32.mrb[0].mxu0
  %v495 = vadd.f32 %v106, %v494
  %v496 = vpop.f32.mrb[0].mxu0
  %497 = vmatprep.mubr.f32.mxu0 0.0
  %498 = vmatmul.mubr.f32.gmra.mrb[0].mxu0 %v194
  %v499 = vpop.f32.mrb[0].mxu0
  %v500 = vadd.f32 %v106, %v499
  %v501 = vpop.f32.mrb[0].mxu0
  %502 = vmatprep.mubr.f32.mxu0 0.0
  %503 = vmatmul.mubr.f32.gmra.mrb[0].mxu0 %v197
  %v504 = vpop.f32.mrb[0].mxu0
  %v505 = vadd.f32 %v106, %v504
  %v506 = vpop.f32.mrb[0].mxu0
  %507 = vmatprep.mubr.f32.mxu0 0.0
  %508 = vmatmul.mubr.f32.gmra.mrb[0].mxu0 %v200
  %v509 = vpop.f32.mrb[0].mxu0
  %v510 = vadd.f32 %v106, %v509
  %v511 = vpop.f32.mrb[0].mxu0
  %512 = vmatprep.mubr.f32.mxu0 0.0
  %513 = vmatmul.mubr.f32.gmra.mrb[0].mxu0 %v203
  %v514 = vpop.f32.mrb[0].mxu0
  %v515 = vadd.f32 %v106, %v514
  %v516 = vpop.f32.mrb[0].mxu0
  %517 = vmatprep.mubr.f32.mxu0 0.0
  %518 = vmatmul.mubr.f32.gmra.mrb[0].mxu0 %v206
  %v519 = vpop.f32.mrb[0].mxu0
  %v520 = vadd.f32 %v106, %v519
  %v521 = vpop.f32.mrb[0].mxu0
  %522 = vmatprep.mubr.f32.mxu0 0.0
  %523 = vmatmul.mubr.f32.gmra.mrb[0].mxu0 %v209
  %v524 = vpop.f32.mrb[0].mxu0
  %v525 = vadd.f32 %v106, %v524
  %v526 = vpop.f32.mrb[0].mxu0
  %527 = vmatprep.mubr.f32.mxu0 0.0
  %528 = vmatmul.mubr.f32.gmra.mrb[0].mxu0 %v212
  %v529 = vpop.f32.mrb[0].mxu0
  %v530 = vadd.f32 %v106, %v529
  %v531 = vpop.f32.mrb[0].mxu0
  %532 = vmatprep.mubr.f32.mxu0 0.0
  %533 = vmatmul.mubr.f32.gmra.mrb[0].mxu0 %v215
  %v534 = vpop.f32.mrb[0].mxu0
  %v535 = vadd.f32 %v106, %v534
  %v536 = vpop.f32.mrb[0].mxu0
  %537 = vmatprep.mubr.f32.mxu0 0.0
  %538 = vmatmul.mubr.f32.gmra.mrb[0].mxu0 %v218
  %v539 = vpop.f32.mrb[0].mxu0
  %v540 = vadd.f32 %v106, %v539
  %v541 = vpop.f32.mrb[0].mxu0
  %542 = vmatprep.mubr.f32.mxu0 0.0
  %543 = vmatmul.mubr.f32.gmra.mrb[0].mxu0 %v221
  %v544 = vpop.f32.mrb[0].mxu0
  %v545 = vadd.f32 %v106, %v544
  %v546 = vpop.f32.mrb[0].mxu0
  %547 = vmatprep.mubr.f32.mxu0 0.0
  %548 = vmatmul.mubr.f32.gmra.mrb[0].mxu0 %v224
  %v549 = vpop.f32.mrb[0].mxu0
  %v550 = vadd.f32 %v106, %v549
  %v551 = vpop.f32.mrb[0].mxu0
  %552 = vmatprep.mubr.f32.mxu0 0.0
  %553 = vmatmul.mubr.f32.gmra.mrb[0].mxu0 %v227
  %v554 = vpop.f32.mrb[0].mxu0
  %v555 = vadd.f32 %v106, %v554
  %v556 = vpop.f32.mrb[0].mxu0
  %557 = vmatprep.mubr.f32.mxu0 0.0
  %558 = vmatmul.mubr.f32.gmra.mrb[0].mxu0 %v230
  %v559 = vpop.f32.mrb[0].mxu0
  %v560 = vadd.f32 %v106, %v559
  %v561 = vpop.f32.mrb[0].mxu0
  %562 = vmatprep.mubr.f32.mxu0 0.0
  %563 = vmatmul.mubr.f32.gmra.mrb[0].mxu0 %v233
  %v564 = vpop.f32.mrb[0].mxu0
  %v565 = vadd.f32 %v106, %v564
  %v566 = vpop.f32.mrb[0].mxu0
  %567 = vmatprep.mubr.f32.mxu0 0.0
  %568 = vmatmul.mubr.f32.gmra.mrb[0].mxu0 %v236
  %v569 = vpop.f32.mrb[0].mxu0
  %v570 = vadd.f32 %v106, %v569
  %v571 = vpop.f32.mrb[0].mxu0
  %572 = vmatprep.mubr.f32.mxu0 0.0
  %573 = vmatmul.mubr.f32.gmra.mrb[0].mxu0 %v239
  %v574 = vpop.f32.mrb[0].mxu0
  %v575 = vadd.f32 %v106, %v574
  %v576 = vpop.f32.mrb[0].mxu0
  %577 = vmatprep.mubr.f32.mxu0 0.0
  %578 = vmatmul.mubr.f32.gmra.mrb[0].mxu0 %v242
  %v579 = vpop.f32.mrb[0].mxu0
  %v580 = vadd.f32 %v106, %v579
  %v581 = vpop.f32.mrb[0].mxu0
  %582 = vmatprep.mubr.f32.mxu0 0.0
  %583 = vmatmul.mubr.f32.gmra.mrb[0].mxu0 %v245
  %v584 = vpop.f32.mrb[0].mxu0
  %v585 = vadd.f32 %v106, %v584
  %v586 = vpop.f32.mrb[0].mxu0
  %587 = vmatprep.mubr.f32.mxu0 0.0
  %588 = vmatmul.mubr.f32.gmra.mrb[0].mxu0 %v248
  %v589 = vpop.f32.mrb[0].mxu0
  %v590 = vadd.f32 %v106, %v589
  %v591 = vpop.f32.mrb[0].mxu0
  %592 = vmatprep.mubr.f32.mxu0 0.0
  %593 = vmatmul.mubr.f32.gmra.mrb[0].mxu0 %v251
  %v594 = vpop.f32.mrb[0].mxu0
  %v595 = vadd.f32 %v106, %v594
  %v596 = vpop.f32.mrb[0].mxu0
  %597 = vmatprep.mubr.f32.mxu0 0.0
  %598 = vmatmul.mubr.f32.gmra.mrb[0].mxu0 %v254
  %v599 = vpop.f32.mrb[0].mxu0
  %v600 = vadd.f32 %v106, %v599
  %v601 = vpop.f32.mrb[0].mxu0
  %602 = vmatprep.mubr.f32.mxu0 0.0
  %603 = vmatmul.mubr.f32.gmra.mrb[0].mxu0 %v257
  %v604 = vpop.f32.mrb[0].mxu0
  %v605 = vadd.f32 %v106, %v604
  %v606 = vpop.f32.mrb[0].mxu0
  %607 = vmatprep.mubr.f32.mxu0 0.0
  %608 = vmatmul.mubr.f32.gmra.mrb[0].mxu0 %v260
  %v609 = vpop.f32.mrb[0].mxu0
  %v610 = vadd.f32 %v106, %v609
  %v611 = vpop.f32.mrb[0].mxu0
  %612 = vmatprep.mubr.f32.mxu0 0.0
  %613 = vmatmul.mubr.f32.gmra.mrb[0].mxu0 %v263
  %v614 = vpop.f32.mrb[0].mxu0
  %v615 = vadd.f32 %v106, %v614
  %v616 = vpop.f32.mrb[0].mxu0
  %617 = vmatprep.mubr.f32.mxu0 0.0
  %618 = vmatmul.mubr.f32.gmra.mrb[0].mxu0 %v266
  %v619 = vpop.f32.mrb[0].mxu0
  %v620 = vadd.f32 %v106, %v619
  %v621 = vpop.f32.mrb[0].mxu0
  %622 = vmatprep.mubr.f32.mxu0 0.0
  %623 = vmatmul.mubr.f32.gmra.mrb[0].mxu0 %v269
  %v624 = vpop.f32.mrb[0].mxu0
  %v625 = vadd.f32 %v106, %v624
  %v626 = vpop.f32.mrb[0].mxu0
  %627 = vmatprep.mubr.f32.mxu0 0.0
  %628 = vmatmul.mubr.f32.gmra.mrb[0].mxu0 %v272
  %v629 = vpop.f32.mrb[0].mxu0
  %v630 = vadd.f32 %v106, %v629
  %v631 = vpop.f32.mrb[0].mxu0
  %632 = vmatprep.mubr.f32.mxu0 0.0
  %633 = vmatmul.mubr.f32.gmra.mrb[0].mxu0 %v275
  %v634 = vpop.f32.mrb[0].mxu0
  %v635 = vadd.f32 %v106, %v634
  %v636 = vpop.f32.mrb[0].mxu0
  %637 = vmatprep.mubr.f32.mxu0 0.0
  %638 = vmatmul.mubr.f32.gmra.mrb[0].mxu0 %v278
  %v639 = vpop.f32.mrb[0].mxu0
  %v640 = vadd.f32 %v106, %v639
  %v641 = vpop.f32.mrb[0].mxu0
  %642 = vmatprep.mubr.f32.mxu0 0.0
  %643 = vmatmul.mubr.f32.gmra.mrb[0].mxu0 %v281
  %v644 = vpop.f32.mrb[0].mxu0
  %v645 = vadd.f32 %v106, %v644
  %v646 = vpop.f32.mrb[0].mxu0
  %647 = vmatprep.mubr.f32.mxu0 0.0
  %648 = vmatmul.mubr.f32.gmra.mrb[0].mxu0 %v284
  %v649 = vpop.f32.mrb[0].mxu0
  %v650 = vadd.f32 %v106, %v649
  %v651 = vpop.f32.mrb[0].mxu0
  %652 = vmatprep.mubr.f32.mxu0 0.0
  %653 = vmatmul.mubr.f32.gmra.mrb[0].mxu0 %v287
  %v654 = vpop.f32.mrb[0].mxu0
  %v655 = vadd.f32 %v106, %v654
  %v656 = vpop.f32.mrb[0].mxu0
  %657 = vdwg.mxu0
  %v658 = vmax.f32 %v360, 0.0
  %v659 = vmax.f32 %v365, 0.0
  %v660 = vmax.f32 %v370, 0.0
  %v661 = vmax.f32 %v375, 0.0
  %v662 = vmax.f32 %v380, 0.0
  %v663 = vmax.f32 %v385, 0.0
  %v664 = vmax.f32 %v390, 0.0
  %v665 = vmax.f32 %v395, 0.0
  %v666 = vmax.f32 %v400, 0.0
  %v667 = vmax.f32 %v405, 0.0
  %v668 = vmax.f32 %v410, 0.0
  %v669 = vmax.f32 %v415, 0.0
  %v670 = vmax.f32 %v420, 0.0
  %v671 = vmax.f32 %v425, 0.0
  %v672 = vmax.f32 %v430, 0.0
  %v673 = vmax.f32 %v435, 0.0
  %v674 = vmax.f32 %v440, 0.0
  %v675 = vmax.f32 %v445, 0.0
  %v676 = vmax.f32 %v450, 0.0
  %v677 = vmax.f32 %v455, 0.0
  %v678 = vmax.f32 %v460, 0.0
  %v679 = vmax.f32 %v465, 0.0
  %v680 = vmax.f32 %v470, 0.0
  %v681 = vmax.f32 %v475, 0.0
  %v682 = vmax.f32 %v480, 0.0
  %v683 = vmax.f32 %v485, 0.0
  %v684 = vmax.f32 %v490, 0.0
  %v685 = vmax.f32 %v495, 0.0
  %v686 = vmax.f32 %v500, 0.0
  %v687 = vmax.f32 %v505, 0.0
  %v688 = vmax.f32 %v510, 0.0
  %v689 = vmax.f32 %v515, 0.0
  %v690 = vmax.f32 %v520, 0.0
  %v691 = vmax.f32 %v525, 0.0
  %v692 = vmax.f32 %v530, 0.0
  %v693 = vmax.f32 %v535, 0.0
  %v694 = vmax.f32 %v540, 0.0
  %v695 = vmax.f32 %v545, 0.0
  %v696 = vmax.f32 %v550, 0.0
  %v697 = vmax.f32 %v555, 0.0
  %v698 = vmax.f32 %v560, 0.0
  %v699 = vmax.f32 %v565, 0.0
  %v700 = vmax.f32 %v570, 0.0
  %v701 = vmax.f32 %v575, 0.0
  %v702 = vmax.f32 %v580, 0.0
  %v703 = vmax.f32 %v585, 0.0
  %v704 = vmax.f32 %v590, 0.0
  %v705 = vmax.f32 %v595, 0.0
  %v706 = vmax.f32 %v600, 0.0
  %v707 = vmax.f32 %v605, 0.0
  %v708 = vmax.f32 %v610, 0.0
  %v709 = vmax.f32 %v615, 0.0
  %v710 = vmax.f32 %v620, 0.0
  %v711 = vmax.f32 %v625, 0.0
  %v712 = vmax.f32 %v630, 0.0
  %v713 = vmax.f32 %v635, 0.0
  %v714 = vmax.f32 %v640, 0.0
  %v715 = vmax.f32 %v645, 0.0
  %v716 = vmax.f32 %v650, 0.0
  %v717 = vmax.f32 %v655, 0.0
  %v718 = vld [vmem:[%s4] sm:$0xff]
  %v719 = vld [vmem:[%s4 + $0x8] sm:$0xff]
  %v720 = vld [vmem:[%s4 + $0x10] sm:$0xff]
  %v721 = vld [vmem:[%s4 + $0x18] sm:$0xff]
  %v722 = vld [vmem:[%s4 + $0x20] sm:$0xff]
  %v723 = vld [vmem:[%s4 + $0x28] sm:$0xff]
  %v724 = vld [vmem:[%s4 + $0x30] sm:$0xff]
  %v725 = vld [vmem:[%s4 + $0x38] sm:$0xff]
  %v726 = vld [vmem:[%s5] sm:$0x1]
  %v728 = vlaneseq
  %v729 = vshrl.u32 %v728, 7
  %v730 = vsub.s32 0, %v729
  %v731 = vrot.slane %v726, %v730
  %vm733 = vcmask 523264
  %v735 = vsel %vm733, %v658, 0
  %v738 = vsel %vm733, %v659, 0
  %v741 = vsel %vm733, %v660, 0
  %v744 = vsel %vm733, %v661, 0
  %v747 = vsel %vm733, %v662, 0
  %v750 = vsel %vm733, %v663, 0
  %v753 = vsel %vm733, %v664, 0
  %v756 = vsel %vm733, %v665, 0
  %v759 = vsel %vm733, %v666, 0
  %v762 = vsel %vm733, %v667, 0
  %v765 = vsel %vm733, %v668, 0
  %v768 = vsel %vm733, %v669, 0
  %v771 = vsel %vm733, %v670, 0
  %v774 = vsel %vm733, %v671, 0
  %v777 = vsel %vm733, %v672, 0
  %v780 = vsel %vm733, %v673, 0
  %v783 = vsel %vm733, %v674, 0
  %v786 = vsel %vm733, %v675, 0
  %v789 = vsel %vm733, %v676, 0
  %v792 = vsel %vm733, %v677, 0
  %v795 = vsel %vm733, %v678, 0
  %v798 = vsel %vm733, %v679, 0
  %v801 = vsel %vm733, %v680, 0
  %v804 = vsel %vm733, %v681, 0
  %v807 = vsel %vm733, %v682, 0
  %v810 = vsel %vm733, %v683, 0
  %v813 = vsel %vm733, %v684, 0
  %v816 = vsel %vm733, %v685, 0
  %v819 = vsel %vm733, %v686, 0
  %v822 = vsel %vm733, %v687, 0
  %v825 = vsel %vm733, %v688, 0
  %v828 = vsel %vm733, %v689, 0
  %v831 = vsel %vm733, %v690, 0
  %v834 = vsel %vm733, %v691, 0
  %v837 = vsel %vm733, %v692, 0
  %v840 = vsel %vm733, %v693, 0
  %v843 = vsel %vm733, %v694, 0
  %v846 = vsel %vm733, %v695, 0
  %v849 = vsel %vm733, %v696, 0
  %v852 = vsel %vm733, %v697, 0
  %v855 = vsel %vm733, %v698, 0
  %v858 = vsel %vm733, %v699, 0
  %v861 = vsel %vm733, %v700, 0
  %v864 = vsel %vm733, %v701, 0
  %v867 = vsel %vm733, %v702, 0
  %v870 = vsel %vm733, %v703, 0
  %v873 = vsel %vm733, %v704, 0
  %v876 = vsel %vm733, %v705, 0
  %v879 = vsel %vm733, %v706, 0
  %v882 = vsel %vm733, %v707, 0
  %v885 = vsel %vm733, %v708, 0
  %v888 = vsel %vm733, %v709, 0
  %v891 = vsel %vm733, %v710, 0
  %v894 = vsel %vm733, %v711, 0
  %v897 = vsel %vm733, %v712, 0
  %v900 = vsel %vm733, %v713, 0
  %v903 = vsel %vm733, %v714, 0
  %v906 = vsel %vm733, %v715, 0
  %v909 = vsel %vm733, %v716, 0
  %v912 = vsel %vm733, %v717, 0
  %914 = vmatprep.subr.mxu0 0.0
  %915 = vmatpush1.msra.mxu0 %v718
  %916 = vmatprep.subr.mxu0 0.0
  %917 = vmatpush1.msra.mxu0 %v719
  %918 = vmatprep.subr.mxu0 0.0
  %919 = vmatpush1.msra.mxu0 %v720
  %920 = vmatprep.subr.mxu0 0.0
  %921 = vmatpush1.msra.mxu0 %v721
  %922 = vmatprep.subr.mxu0 0.0
  %923 = vmatpush1.msra.mxu0 %v722
  %924 = vmatprep.subr.mxu0 0.0
  %925 = vmatpush1.msra.mxu0 %v723
  %926 = vmatprep.subr.mxu0 0.0
  %927 = vmatpush1.msra.mxu0 %v724
  %928 = vmatprep.subr.mxu0 0.0
  %929 = vmatpush1.msra.mxu0 %v725
  %930 = vmatprep.subr.mxu0 0.0
  %931 = vmatpush1.msra.mxu0 0.0
  %932 = vmatprep.subr.mxu0 0.0
  %933 = vmatpush1.msra.mxu0 0.0
  %934 = vmatprep.subr.mxu0 0.0
  %935 = vmatpush1.msra.mxu0 0.0
  %936 = vmatprep.subr.mxu0 0.0
  %937 = vmatpush1.msra.mxu0 0.0
  %938 = vmatprep.subr.mxu0 0.0
  %939 = vmatpush1.msra.mxu0 0.0
  %940 = vmatprep.subr.mxu0 0.0
  %941 = vmatpush1.msra.mxu0 0.0
  %942 = vmatprep.subr.mxu0 0.0
  %943 = vmatpush1.msra.mxu0 0.0
  %944 = vmatprep.subr.mxu0 0.0
  %945 = vmatpush1.msra.mxu0 0.0
  %946 = vmatprep.subr.mxu0 0.0
  %947 = vmatpush1.msra.mxu0 0.0
  %948 = vmatprep.subr.mxu0 0.0
  %949 = vmatpush1.msra.mxu0 0.0
  %950 = vmatprep.subr.mxu0 0.0
  %951 = vmatpush1.msra.mxu0 0.0
  %952 = vmatprep.subr.mxu0 0.0
  %953 = vmatpush1.msra.mxu0 0.0
  %954 = vmatprep.subr.mxu0 0.0
  %955 = vmatpush1.msra.mxu0 0.0
  %956 = vmatprep.subr.mxu0 0.0
  %957 = vmatpush1.msra.mxu0 0.0
  %958 = vmatprep.subr.mxu0 0.0
  %959 = vmatpush1.msra.mxu0 0.0
  %960 = vmatprep.subr.mxu0 0.0
  %961 = vmatpush1.msra.mxu0 0.0
  %962 = vmatprep.subr.mxu0 0.0
  %963 = vmatpush1.msra.mxu0 0.0
  %964 = vmatprep.subr.mxu0 0.0
  %965 = vmatpush1.msra.mxu0 0.0
  %966 = vmatprep.subr.mxu0 0.0
  %967 = vmatpush1.msra.mxu0 0.0
  %968 = vmatprep.subr.mxu0 0.0
  %969 = vmatpush1.msra.mxu0 0.0
  %970 = vmatprep.subr.mxu0 0.0
  %971 = vmatpush1.msra.mxu0 0.0
  %972 = vmatprep.subr.mxu0 0.0
  %973 = vmatpush1.msra.mxu0 0.0
  %974 = vmatprep.subr.mxu0 0.0
  %975 = vmatpush1.msra.mxu0 0.0
  %976 = vmatprep.subr.mxu0 0.0
  %977 = vmatpush1.msra.mxu0 0.0
  %978 = vmatprep.mubr.f32.mxu0 0.0
  %979 = vmatmul.mubr.f32.gmra.mrb[0].mxu0 %v735
  %v980 = vpop.f32.mrb[0].mxu0
  %v981 = vadd.f32 %v731, %v980
  %v982 = vpop.f32.mrb[0].mxu0
  %983 = vmatprep.mubr.f32.mxu0 0.0
  %984 = vmatmul.mubr.f32.gmra.mrb[0].mxu0 %v738
  %v985 = vpop.f32.mrb[0].mxu0
  %v986 = vadd.f32 %v731, %v985
  %v987 = vpop.f32.mrb[0].mxu0
  %988 = vmatprep.mubr.f32.mxu0 0.0
  %989 = vmatmul.mubr.f32.gmra.mrb[0].mxu0 %v741
  %v990 = vpop.f32.mrb[0].mxu0
  %v991 = vadd.f32 %v731, %v990
  %v992 = vpop.f32.mrb[0].mxu0
  %993 = vmatprep.mubr.f32.mxu0 0.0
  %994 = vmatmul.mubr.f32.gmra.mrb[0].mxu0 %v744
  %v995 = vpop.f32.mrb[0].mxu0
  %v996 = vadd.f32 %v731, %v995
  %v997 = vpop.f32.mrb[0].mxu0
  %998 = vmatprep.mubr.f32.mxu0 0.0
  %999 = vmatmul.mubr.f32.gmra.mrb[0].mxu0 %v747
  %v1000 = vpop.f32.mrb[0].mxu0
  %v1001 = vadd.f32 %v731, %v1000
  %v1002 = vpop.f32.mrb[0].mxu0
  %1003 = vmatprep.mubr.f32.mxu0 0.0
  %1004 = vmatmul.mubr.f32.gmra.mrb[0].mxu0 %v750
  %v1005 = vpop.f32.mrb[0].mxu0
  %v1006 = vadd.f32 %v731, %v1005
  %v1007 = vpop.f32.mrb[0].mxu0
  %1008 = vmatprep.mubr.f32.mxu0 0.0
  %1009 = vmatmul.mubr.f32.gmra.mrb[0].mxu0 %v753
  %v1010 = vpop.f32.mrb[0].mxu0
  %v1011 = vadd.f32 %v731, %v1010
  %v1012 = vpop.f32.mrb[0].mxu0
  %1013 = vmatprep.mubr.f32.mxu0 0.0
  %1014 = vmatmul.mubr.f32.gmra.mrb[0].mxu0 %v756
  %v1015 = vpop.f32.mrb[0].mxu0
  %v1016 = vadd.f32 %v731, %v1015
  %v1017 = vpop.f32.mrb[0].mxu0
  %1018 = vmatprep.mubr.f32.mxu0 0.0
  %1019 = vmatmul.mubr.f32.gmra.mrb[0].mxu0 %v759
  %v1020 = vpop.f32.mrb[0].mxu0
  %v1021 = vadd.f32 %v731, %v1020
  %v1022 = vpop.f32.mrb[0].mxu0
  %1023 = vmatprep.mubr.f32.mxu0 0.0
  %1024 = vmatmul.mubr.f32.gmra.mrb[0].mxu0 %v762
  %v1025 = vpop.f32.mrb[0].mxu0
  %v1026 = vadd.f32 %v731, %v1025
  %v1027 = vpop.f32.mrb[0].mxu0
  %1028 = vmatprep.mubr.f32.mxu0 0.0
  %1029 = vmatmul.mubr.f32.gmra.mrb[0].mxu0 %v765
  %v1030 = vpop.f32.mrb[0].mxu0
  %v1031 = vadd.f32 %v731, %v1030
  %v1032 = vpop.f32.mrb[0].mxu0
  %1033 = vmatprep.mubr.f32.mxu0 0.0
  %1034 = vmatmul.mubr.f32.gmra.mrb[0].mxu0 %v768
  %v1035 = vpop.f32.mrb[0].mxu0
  %v1036 = vadd.f32 %v731, %v1035
  %v1037 = vpop.f32.mrb[0].mxu0
  %1038 = vmatprep.mubr.f32.mxu0 0.0
  %1039 = vmatmul.mubr.f32.gmra.mrb[0].mxu0 %v771
  %v1040 = vpop.f32.mrb[0].mxu0
  %v1041 = vadd.f32 %v731, %v1040
  %v1042 = vpop.f32.mrb[0].mxu0
  %1043 = vmatprep.mubr.f32.mxu0 0.0
  %1044 = vmatmul.mubr.f32.gmra.mrb[0].mxu0 %v774
  %v1045 = vpop.f32.mrb[0].mxu0
  %v1046 = vadd.f32 %v731, %v1045
  %v1047 = vpop.f32.mrb[0].mxu0
  %1048 = vmatprep.mubr.f32.mxu0 0.0
  %1049 = vmatmul.mubr.f32.gmra.mrb[0].mxu0 %v777
  %v1050 = vpop.f32.mrb[0].mxu0
  %v1051 = vadd.f32 %v731, %v1050
  %v1052 = vpop.f32.mrb[0].mxu0
  %1053 = vmatprep.mubr.f32.mxu0 0.0
  %1054 = vmatmul.mubr.f32.gmra.mrb[0].mxu0 %v780
  %v1055 = vpop.f32.mrb[0].mxu0
  %v1056 = vadd.f32 %v731, %v1055
  %v1057 = vpop.f32.mrb[0].mxu0
  %1058 = vmatprep.mubr.f32.mxu0 0.0
  %1059 = vmatmul.mubr.f32.gmra.mrb[0].mxu0 %v783
  %v1060 = vpop.f32.mrb[0].mxu0
  %v1061 = vadd.f32 %v731, %v1060
  %v1062 = vpop.f32.mrb[0].mxu0
  %1063 = vmatprep.mubr.f32.mxu0 0.0
  %1064 = vmatmul.mubr.f32.gmra.mrb[0].mxu0 %v786
  %v1065 = vpop.f32.mrb[0].mxu0
  %v1066 = vadd.f32 %v731, %v1065
  %v1067 = vpop.f32.mrb[0].mxu0
  %1068 = vmatprep.mubr.f32.mxu0 0.0
  %1069 = vmatmul.mubr.f32.gmra.mrb[0].mxu0 %v789
  %v1070 = vpop.f32.mrb[0].mxu0
  %v1071 = vadd.f32 %v731, %v1070
  %v1072 = vpop.f32.mrb[0].mxu0
  %1073 = vmatprep.mubr.f32.mxu0 0.0
  %1074 = vmatmul.mubr.f32.gmra.mrb[0].mxu0 %v792
  %v1075 = vpop.f32.mrb[0].mxu0
  %v1076 = vadd.f32 %v731, %v1075
  %v1077 = vpop.f32.mrb[0].mxu0
  %1078 = vmatprep.mubr.f32.mxu0 0.0
  %1079 = vmatmul.mubr.f32.gmra.mrb[0].mxu0 %v795
  %v1080 = vpop.f32.mrb[0].mxu0
  %v1081 = vadd.f32 %v731, %v1080
  %v1082 = vpop.f32.mrb[0].mxu0
  %1083 = vmatprep.mubr.f32.mxu0 0.0
  %1084 = vmatmul.mubr.f32.gmra.mrb[0].mxu0 %v798
  %v1085 = vpop.f32.mrb[0].mxu0
  %v1086 = vadd.f32 %v731, %v1085
  %v1087 = vpop.f32.mrb[0].mxu0
  %1088 = vmatprep.mubr.f32.mxu0 0.0
  %1089 = vmatmul.mubr.f32.gmra.mrb[0].mxu0 %v801
  %v1090 = vpop.f32.mrb[0].mxu0
  %v1091 = vadd.f32 %v731, %v1090
  %v1092 = vpop.f32.mrb[0].mxu0
  %1093 = vmatprep.mubr.f32.mxu0 0.0
  %1094 = vmatmul.mubr.f32.gmra.mrb[0].mxu0 %v804
  %v1095 = vpop.f32.mrb[0].mxu0
  %v1096 = vadd.f32 %v731, %v1095
  %v1097 = vpop.f32.mrb[0].mxu0
  %1098 = vmatprep.mubr.f32.mxu0 0.0
  %1099 = vmatmul.mubr.f32.gmra.mrb[0].mxu0 %v807
  %v1100 = vpop.f32.mrb[0].mxu0
  %v1101 = vadd.f32 %v731, %v1100
  %v1102 = vpop.f32.mrb[0].mxu0
  %1103 = vmatprep.mubr.f32.mxu0 0.0
  %1104 = vmatmul.mubr.f32.gmra.mrb[0].mxu0 %v810
  %v1105 = vpop.f32.mrb[0].mxu0
  %v1106 = vadd.f32 %v731, %v1105
  %v1107 = vpop.f32.mrb[0].mxu0
  %1108 = vmatprep.mubr.f32.mxu0 0.0
  %1109 = vmatmul.mubr.f32.gmra.mrb[0].mxu0 %v813
  %v1110 = vpop.f32.mrb[0].mxu0
  %v1111 = vadd.f32 %v731, %v1110
  %v1112 = vpop.f32.mrb[0].mxu0
  %1113 = vmatprep.mubr.f32.mxu0 0.0
  %1114 = vmatmul.mubr.f32.gmra.mrb[0].mxu0 %v816
  %v1115 = vpop.f32.mrb[0].mxu0
  %v1116 = vadd.f32 %v731, %v1115
  %v1117 = vpop.f32.mrb[0].mxu0
  %1118 = vmatprep.mubr.f32.mxu0 0.0
  %1119 = vmatmul.mubr.f32.gmra.mrb[0].mxu0 %v819
  %v1120 = vpop.f32.mrb[0].mxu0
  %v1121 = vadd.f32 %v731, %v1120
  %v1122 = vpop.f32.mrb[0].mxu0
  %1123 = vmatprep.mubr.f32.mxu0 0.0
  %1124 = vmatmul.mubr.f32.gmra.mrb[0].mxu0 %v822
  %v1125 = vpop.f32.mrb[0].mxu0
  %v1126 = vadd.f32 %v731, %v1125
  %v1127 = vpop.f32.mrb[0].mxu0
  %1128 = vmatprep.mubr.f32.mxu0 0.0
  %1129 = vmatmul.mubr.f32.gmra.mrb[0].mxu0 %v825
  %v1130 = vpop.f32.mrb[0].mxu0
  %v1131 = vadd.f32 %v731, %v1130
  %v1132 = vpop.f32.mrb[0].mxu0
  %1133 = vmatprep.mubr.f32.mxu0 0.0
  %1134 = vmatmul.mubr.f32.gmra.mrb[0].mxu0 %v828
  %v1135 = vpop.f32.mrb[0].mxu0
  %v1136 = vadd.f32 %v731, %v1135
  %v1137 = vpop.f32.mrb[0].mxu0
  %1138 = vmatprep.mubr.f32.mxu0 0.0
  %1139 = vmatmul.mubr.f32.gmra.mrb[0].mxu0 %v831
  %v1140 = vpop.f32.mrb[0].mxu0
  %v1141 = vadd.f32 %v731, %v1140
  %v1142 = vpop.f32.mrb[0].mxu0
  %1143 = vmatprep.mubr.f32.mxu0 0.0
  %1144 = vmatmul.mubr.f32.gmra.mrb[0].mxu0 %v834
  %v1145 = vpop.f32.mrb[0].mxu0
  %v1146 = vadd.f32 %v731, %v1145
  %v1147 = vpop.f32.mrb[0].mxu0
  %1148 = vmatprep.mubr.f32.mxu0 0.0
  %1149 = vmatmul.mubr.f32.gmra.mrb[0].mxu0 %v837
  %v1150 = vpop.f32.mrb[0].mxu0
  %v1151 = vadd.f32 %v731, %v1150
  %v1152 = vpop.f32.mrb[0].mxu0
  %1153 = vmatprep.mubr.f32.mxu0 0.0
  %1154 = vmatmul.mubr.f32.gmra.mrb[0].mxu0 %v840
  %v1155 = vpop.f32.mrb[0].mxu0
  %v1156 = vadd.f32 %v731, %v1155
  %v1157 = vpop.f32.mrb[0].mxu0
  %1158 = vmatprep.mubr.f32.mxu0 0.0
  %1159 = vmatmul.mubr.f32.gmra.mrb[0].mxu0 %v843
  %v1160 = vpop.f32.mrb[0].mxu0
  %v1161 = vadd.f32 %v731, %v1160
  %v1162 = vpop.f32.mrb[0].mxu0
  %1163 = vmatprep.mubr.f32.mxu0 0.0
  %1164 = vmatmul.mubr.f32.gmra.mrb[0].mxu0 %v846
  %v1165 = vpop.f32.mrb[0].mxu0
  %v1166 = vadd.f32 %v731, %v1165
  %v1167 = vpop.f32.mrb[0].mxu0
  %1168 = vmatprep.mubr.f32.mxu0 0.0
  %1169 = vmatmul.mubr.f32.gmra.mrb[0].mxu0 %v849
  %v1170 = vpop.f32.mrb[0].mxu0
  %v1171 = vadd.f32 %v731, %v1170
  %v1172 = vpop.f32.mrb[0].mxu0
  %1173 = vmatprep.mubr.f32.mxu0 0.0
  %1174 = vmatmul.mubr.f32.gmra.mrb[0].mxu0 %v852
  %v1175 = vpop.f32.mrb[0].mxu0
  %v1176 = vadd.f32 %v731, %v1175
  %v1177 = vpop.f32.mrb[0].mxu0
  %1178 = vmatprep.mubr.f32.mxu0 0.0
  %1179 = vmatmul.mubr.f32.gmra.mrb[0].mxu0 %v855
  %v1180 = vpop.f32.mrb[0].mxu0
  %v1181 = vadd.f32 %v731, %v1180
  %v1182 = vpop.f32.mrb[0].mxu0
  %1183 = vmatprep.mubr.f32.mxu0 0.0
  %1184 = vmatmul.mubr.f32.gmra.mrb[0].mxu0 %v858
  %v1185 = vpop.f32.mrb[0].mxu0
  %v1186 = vadd.f32 %v731, %v1185
  %v1187 = vpop.f32.mrb[0].mxu0
  %1188 = vmatprep.mubr.f32.mxu0 0.0
  %1189 = vmatmul.mubr.f32.gmra.mrb[0].mxu0 %v861
  %v1190 = vpop.f32.mrb[0].mxu0
  %v1191 = vadd.f32 %v731, %v1190
  %v1192 = vpop.f32.mrb[0].mxu0
  %1193 = vmatprep.mubr.f32.mxu0 0.0
  %1194 = vmatmul.mubr.f32.gmra.mrb[0].mxu0 %v864
  %v1195 = vpop.f32.mrb[0].mxu0
  %v1196 = vadd.f32 %v731, %v1195
  %v1197 = vpop.f32.mrb[0].mxu0
  %1198 = vmatprep.mubr.f32.mxu0 0.0
  %1199 = vmatmul.mubr.f32.gmra.mrb[0].mxu0 %v867
  %v1200 = vpop.f32.mrb[0].mxu0
  %v1201 = vadd.f32 %v731, %v1200
  %v1202 = vpop.f32.mrb[0].mxu0
  %1203 = vmatprep.mubr.f32.mxu0 0.0
  %1204 = vmatmul.mubr.f32.gmra.mrb[0].mxu0 %v870
  %v1205 = vpop.f32.mrb[0].mxu0
  %v1206 = vadd.f32 %v731, %v1205
  %v1207 = vpop.f32.mrb[0].mxu0
  %1208 = vmatprep.mubr.f32.mxu0 0.0
  %1209 = vmatmul.mubr.f32.gmra.mrb[0].mxu0 %v873
  %v1210 = vpop.f32.mrb[0].mxu0
  %v1211 = vadd.f32 %v731, %v1210
  %v1212 = vpop.f32.mrb[0].mxu0
  %1213 = vmatprep.mubr.f32.mxu0 0.0
  %1214 = vmatmul.mubr.f32.gmra.mrb[0].mxu0 %v876
  %v1215 = vpop.f32.mrb[0].mxu0
  %v1216 = vadd.f32 %v731, %v1215
  %v1217 = vpop.f32.mrb[0].mxu0
  %1218 = vmatprep.mubr.f32.mxu0 0.0
  %1219 = vmatmul.mubr.f32.gmra.mrb[0].mxu0 %v879
  %v1220 = vpop.f32.mrb[0].mxu0
  %v1221 = vadd.f32 %v731, %v1220
  %v1222 = vpop.f32.mrb[0].mxu0
  %1223 = vmatprep.mubr.f32.mxu0 0.0
  %1224 = vmatmul.mubr.f32.gmra.mrb[0].mxu0 %v882
  %v1225 = vpop.f32.mrb[0].mxu0
  %v1226 = vadd.f32 %v731, %v1225
  %v1227 = vpop.f32.mrb[0].mxu0
  %1228 = vmatprep.mubr.f32.mxu0 0.0
  %1229 = vmatmul.mubr.f32.gmra.mrb[0].mxu0 %v885
  %v1230 = vpop.f32.mrb[0].mxu0
  %v1231 = vadd.f32 %v731, %v1230
  %v1232 = vpop.f32.mrb[0].mxu0
  %1233 = vmatprep.mubr.f32.mxu0 0.0
  %1234 = vmatmul.mubr.f32.gmra.mrb[0].mxu0 %v888
  %v1235 = vpop.f32.mrb[0].mxu0
  %v1236 = vadd.f32 %v731, %v1235
  %v1237 = vpop.f32.mrb[0].mxu0
  %1238 = vmatprep.mubr.f32.mxu0 0.0
  %1239 = vmatmul.mubr.f32.gmra.mrb[0].mxu0 %v891
  %v1240 = vpop.f32.mrb[0].mxu0
  %v1241 = vadd.f32 %v731, %v1240
  %v1242 = vpop.f32.mrb[0].mxu0
  %1243 = vmatprep.mubr.f32.mxu0 0.0
  %1244 = vmatmul.mubr.f32.gmra.mrb[0].mxu0 %v894
  %v1245 = vpop.f32.mrb[0].mxu0
  %v1246 = vadd.f32 %v731, %v1245
  %v1247 = vpop.f32.mrb[0].mxu0
  %1248 = vmatprep.mubr.f32.mxu0 0.0
  %1249 = vmatmul.mubr.f32.gmra.mrb[0].mxu0 %v897
  %v1250 = vpop.f32.mrb[0].mxu0
  %v1251 = vadd.f32 %v731, %v1250
  %v1252 = vpop.f32.mrb[0].mxu0
  %1253 = vmatprep.mubr.f32.mxu0 0.0
  %1254 = vmatmul.mubr.f32.gmra.mrb[0].mxu0 %v900
  %v1255 = vpop.f32.mrb[0].mxu0
  %v1256 = vadd.f32 %v731, %v1255
  %v1257 = vpop.f32.mrb[0].mxu0
  %1258 = vmatprep.mubr.f32.mxu0 0.0
  %1259 = vmatmul.mubr.f32.gmra.mrb[0].mxu0 %v903
  %v1260 = vpop.f32.mrb[0].mxu0
  %v1261 = vadd.f32 %v731, %v1260
  %v1262 = vpop.f32.mrb[0].mxu0
  %1263 = vmatprep.mubr.f32.mxu0 0.0
  %1264 = vmatmul.mubr.f32.gmra.mrb[0].mxu0 %v906
  %v1265 = vpop.f32.mrb[0].mxu0
  %v1266 = vadd.f32 %v731, %v1265
  %v1267 = vpop.f32.mrb[0].mxu0
  %1268 = vmatprep.mubr.f32.mxu0 0.0
  %1269 = vmatmul.mubr.f32.gmra.mrb[0].mxu0 %v909
  %v1270 = vpop.f32.mrb[0].mxu0
  %v1271 = vadd.f32 %v731, %v1270
  %v1272 = vpop.f32.mrb[0].mxu0
  %1273 = vmatprep.mubr.f32.mxu0 0.0
  %1274 = vmatmul.mubr.f32.gmra.mrb[0].mxu0 %v912
  %v1275 = vpop.f32.mrb[0].mxu0
  %v1276 = vadd.f32 %v731, %v1275
  %v1277 = vpop.f32.mrb[0].mxu0
  %1278 = vdwg.mxu0
  %v1279 = vld [vmem:[%s1] sm:$0xff]
  %v1280 = vld [vmem:[%s1 + $0x8] sm:$0xff]
  %v1281 = vld [vmem:[%s1 + $0x10] sm:$0xff]
  %v1282 = vld [vmem:[%s1 + $0x18] sm:$0xff]
  %v1283 = vld [vmem:[%s1 + $0x20] sm:$0xff]
  %v1284 = vld [vmem:[%s1 + $0x28] sm:$0xff]
  %v1285 = vld [vmem:[%s1 + $0x30] sm:$0xff]
  %v1286 = vld [vmem:[%s1 + $0x38] sm:$0xff]
  %v1287 = vld [vmem:[%s1 + $0x40] sm:$0xff]
  %v1288 = vld [vmem:[%s1 + $0x48] sm:$0xff]
  %v1289 = vld [vmem:[%s1 + $0x50] sm:$0xff]
  %v1290 = vld [vmem:[%s1 + $0x58] sm:$0xff]
  %v1291 = vld [vmem:[%s1 + $0x60] sm:$0xff]
  %v1292 = vld [vmem:[%s1 + $0x68] sm:$0xff]
  %v1293 = vld [vmem:[%s1 + $0x70] sm:$0xff]
  %v1294 = vld [vmem:[%s1 + $0x78] sm:$0xff]
  %v1295 = vld [vmem:[%s1 + $0x80] sm:$0xff]
  %v1296 = vld [vmem:[%s1 + $0x88] sm:$0xff]
  %v1297 = vld [vmem:[%s1 + $0x90] sm:$0xff]
  %v1298 = vld [vmem:[%s1 + $0x98] sm:$0xff]
  %v1299 = vld [vmem:[%s1 + $0xa0] sm:$0xff]
  %v1300 = vld [vmem:[%s1 + $0xa8] sm:$0xff]
  %v1301 = vld [vmem:[%s1 + $0xb0] sm:$0xff]
  %v1302 = vld [vmem:[%s1 + $0xb8] sm:$0xff]
  %v1303 = vld [vmem:[%s1 + $0xc0] sm:$0xff]
  %v1304 = vld [vmem:[%s1 + $0xc8] sm:$0xff]
  %v1305 = vld [vmem:[%s1 + $0xd0] sm:$0xff]
  %v1306 = vld [vmem:[%s1 + $0xd8] sm:$0xff]
  %v1307 = vld [vmem:[%s1 + $0xe0] sm:$0xff]
  %v1308 = vld [vmem:[%s1 + $0xe8] sm:$0xff]
  %v1309 = vld [vmem:[%s1 + $0xf0] sm:$0xff]
  %v1310 = vld [vmem:[%s1 + $0xf8] sm:$0xff]
  %v1311 = vld [vmem:[%s1 + $0x100] sm:$0xff]
  %v1312 = vld [vmem:[%s1 + $0x108] sm:$0xff]
  %v1313 = vld [vmem:[%s1 + $0x110] sm:$0xff]
  %v1314 = vld [vmem:[%s1 + $0x118] sm:$0xff]
  %v1315 = vld [vmem:[%s1 + $0x120] sm:$0xff]
  %v1316 = vld [vmem:[%s1 + $0x128] sm:$0xff]
  %v1317 = vld [vmem:[%s1 + $0x130] sm:$0xff]
  %v1318 = vld [vmem:[%s1 + $0x138] sm:$0xff]
  %v1319 = vld [vmem:[%s1 + $0x140] sm:$0xff]
  %v1320 = vld [vmem:[%s1 + $0x148] sm:$0xff]
  %v1321 = vld [vmem:[%s1 + $0x150] sm:$0xff]
  %v1322 = vld [vmem:[%s1 + $0x158] sm:$0xff]
  %v1323 = vld [vmem:[%s1 + $0x160] sm:$0xff]
  %v1324 = vld [vmem:[%s1 + $0x168] sm:$0xff]
  %v1325 = vld [vmem:[%s1 + $0x170] sm:$0xff]
  %v1326 = vld [vmem:[%s1 + $0x178] sm:$0xff]
  %v1327 = vld [vmem:[%s1 + $0x180] sm:$0xff]
  %v1328 = vld [vmem:[%s1 + $0x188] sm:$0xff]
  %v1329 = vld [vmem:[%s1 + $0x190] sm:$0xff]
  %v1330 = vld [vmem:[%s1 + $0x198] sm:$0xff]
  %v1331 = vld [vmem:[%s1 + $0x1a0] sm:$0xff]
  %v1332 = vld [vmem:[%s1 + $0x1a8] sm:$0xff]
  %v1333 = vld [vmem:[%s1 + $0x1b0] sm:$0xff]
  %v1334 = vld [vmem:[%s1 + $0x1b8] sm:$0xff]
  %v1335 = vld [vmem:[%s1 + $0x1c0] sm:$0xff]
  %v1336 = vld [vmem:[%s1 + $0x1c8] sm:$0xff]
  %v1337 = vld [vmem:[%s1 + $0x1d0] sm:$0xff]
  %v1338 = vld [vmem:[%s1 + $0x1d8] sm:$0xff]
  %v1339 = vmul.f32 %v981, 0.5
  %v1340 = vmul.f32 %v986, 0.5
  %v1341 = vmul.f32 %v991, 0.5
  %v1342 = vmul.f32 %v996, 0.5
  %v1343 = vmul.f32 %v1001, 0.5
  %v1344 = vmul.f32 %v1006, 0.5
  %v1345 = vmul.f32 %v1011, 0.5
  %v1346 = vmul.f32 %v1016, 0.5
  %v1347 = vmul.f32 %v1021, 0.5
  %v1348 = vmul.f32 %v1026, 0.5
  %v1349 = vmul.f32 %v1031, 0.5
  %v1350 = vmul.f32 %v1036, 0.5
  %v1351 = vmul.f32 %v1041, 0.5
  %v1352 = vmul.f32 %v1046, 0.5
  %v1353 = vmul.f32 %v1051, 0.5
  %v1354 = vmul.f32 %v1056, 0.5
  %v1355 = vmul.f32 %v1061, 0.5
  %v1356 = vmul.f32 %v1066, 0.5
  %v1357 = vmul.f32 %v1071, 0.5
  %v1358 = vmul.f32 %v1076, 0.5
  %v1359 = vmul.f32 %v1081, 0.5
  %v1360 = vmul.f32 %v1086, 0.5
  %v1361 = vmul.f32 %v1091, 0.5
  %v1362 = vmul.f32 %v1096, 0.5
  %v1363 = vmul.f32 %v1101, 0.5
  %v1364 = vmul.f32 %v1106, 0.5
  %v1365 = vmul.f32 %v1111, 0.5
  %v1366 = vmul.f32 %v1116, 0.5
  %v1367 = vmul.f32 %v1121, 0.5
  %v1368 = vmul.f32 %v1126, 0.5
  %v1369 = vmul.f32 %v1131, 0.5
  %v1370 = vmul.f32 %v1136, 0.5
  %v1371 = vmul.f32 %v1141, 0.5
  %v1372 = vmul.f32 %v1146, 0.5
  %v1373 = vmul.f32 %v1151, 0.5
  %v1374 = vmul.f32 %v1156, 0.5
  %v1375 = vmul.f32 %v1161, 0.5
  %v1376 = vmul.f32 %v1166, 0.5
  %v1377 = vmul.f32 %v1171, 0.5
  %v1378 = vmul.f32 %v1176, 0.5
  %v1379 = vmul.f32 %v1181, 0.5
  %v1380 = vmul.f32 %v1186, 0.5
  %v1381 = vmul.f32 %v1191, 0.5
  %v1382 = vmul.f32 %v1196, 0.5
  %v1383 = vmul.f32 %v1201, 0.5
  %v1384 = vmul.f32 %v1206, 0.5
  %v1385 = vmul.f32 %v1211, 0.5
  %v1386 = vmul.f32 %v1216, 0.5
  %v1387 = vmul.f32 %v1221, 0.5
  %v1388 = vmul.f32 %v1226, 0.5
  %v1389 = vmul.f32 %v1231, 0.5
  %v1390 = vmul.f32 %v1236, 0.5
  %v1391 = vmul.f32 %v1241, 0.5
  %v1392 = vmul.f32 %v1246, 0.5
  %v1393 = vmul.f32 %v1251, 0.5
  %v1394 = vmul.f32 %v1256, 0.5
  %v1395 = vmul.f32 %v1261, 0.5
  %v1396 = vmul.f32 %v1266, 0.5
  %v1397 = vmul.f32 %v1271, 0.5
  %v1398 = vmul.f32 %v1276, 0.5
  %v1399 = vmul.f32 %v1339, 1.442695
  %v1400 = vpow.pop %v1399
  %v1401 = vmul.f32 %v1340, 1.442695
  %v1402 = vpow.pop %v1401
  %v1403 = vmul.f32 %v1341, 1.442695
  %v1404 = vpow.pop %v1403
  %v1405 = vmul.f32 %v1342, 1.442695
  %v1406 = vpow.pop %v1405
  %v1407 = vmul.f32 %v1343, 1.442695
  %v1408 = vpow.pop %v1407
  %v1409 = vmul.f32 %v1344, 1.442695
  %v1410 = vpow.pop %v1409
  %v1411 = vmul.f32 %v1345, 1.442695
  %v1412 = vpow.pop %v1411
  %v1413 = vmul.f32 %v1346, 1.442695
  %v1414 = vpow.pop %v1413
  %v1415 = vmul.f32 %v1347, 1.442695
  %v1416 = vpow.pop %v1415
  %v1417 = vmul.f32 %v1348, 1.442695
  %v1418 = vpow.pop %v1417
  %v1419 = vmul.f32 %v1349, 1.442695
  %v1420 = vpow.pop %v1419
  %v1421 = vmul.f32 %v1350, 1.442695
  %v1422 = vpow.pop %v1421
  %v1423 = vmul.f32 %v1351, 1.442695
  %v1424 = vpow.pop %v1423
  %v1425 = vmul.f32 %v1352, 1.442695
  %v1426 = vpow.pop %v1425
  %v1427 = vmul.f32 %v1353, 1.442695
  %v1428 = vpow.pop %v1427
  %v1429 = vmul.f32 %v1354, 1.442695
  %v1430 = vpow.pop %v1429
  %v1431 = vmul.f32 %v1355, 1.442695
  %v1432 = vpow.pop %v1431
  %v1433 = vmul.f32 %v1356, 1.442695
  %v1434 = vpow.pop %v1433
  %v1435 = vmul.f32 %v1357, 1.442695
  %v1436 = vpow.pop %v1435
  %v1437 = vmul.f32 %v1358, 1.442695
  %v1438 = vpow.pop %v1437
  %v1439 = vmul.f32 %v1359, 1.442695
  %v1440 = vpow.pop %v1439
  %v1441 = vmul.f32 %v1360, 1.442695
  %v1442 = vpow.pop %v1441
  %v1443 = vmul.f32 %v1361, 1.442695
  %v1444 = vpow.pop %v1443
  %v1445 = vmul.f32 %v1362, 1.442695
  %v1446 = vpow.pop %v1445
  %v1447 = vmul.f32 %v1363, 1.442695
  %v1448 = vpow.pop %v1447
  %v1449 = vmul.f32 %v1364, 1.442695
  %v1450 = vpow.pop %v1449
  %v1451 = vmul.f32 %v1365, 1.442695
  %v1452 = vpow.pop %v1451
  %v1453 = vmul.f32 %v1366, 1.442695
  %v1454 = vpow.pop %v1453
  %v1455 = vmul.f32 %v1367, 1.442695
  %v1456 = vpow.pop %v1455
  %v1457 = vmul.f32 %v1368, 1.442695
  %v1458 = vpow.pop %v1457
  %v1459 = vmul.f32 %v1369, 1.442695
  %v1460 = vpow.pop %v1459
  %v1461 = vmul.f32 %v1370, 1.442695
  %v1462 = vpow.pop %v1461
  %v1463 = vmul.f32 %v1371, 1.442695
  %v1464 = vpow.pop %v1463
  %v1465 = vmul.f32 %v1372, 1.442695
  %v1466 = vpow.pop %v1465
  %v1467 = vmul.f32 %v1373, 1.442695
  %v1468 = vpow.pop %v1467
  %v1469 = vmul.f32 %v1374, 1.442695
  %v1470 = vpow.pop %v1469
  %v1471 = vmul.f32 %v1375, 1.442695
  %v1472 = vpow.pop %v1471
  %v1473 = vmul.f32 %v1376, 1.442695
  %v1474 = vpow.pop %v1473
  %v1475 = vmul.f32 %v1377, 1.442695
  %v1476 = vpow.pop %v1475
  %v1477 = vmul.f32 %v1378, 1.442695
  %v1478 = vpow.pop %v1477
  %v1479 = vmul.f32 %v1379, 1.442695
  %v1480 = vpow.pop %v1479
  %v1481 = vmul.f32 %v1380, 1.442695
  %v1482 = vpow.pop %v1481
  %v1483 = vmul.f32 %v1381, 1.442695
  %v1484 = vpow.pop %v1483
  %v1485 = vmul.f32 %v1382, 1.442695
  %v1486 = vpow.pop %v1485
  %v1487 = vmul.f32 %v1383, 1.442695
  %v1488 = vpow.pop %v1487
  %v1489 = vmul.f32 %v1384, 1.442695
  %v1490 = vpow.pop %v1489
  %v1491 = vmul.f32 %v1385, 1.442695
  %v1492 = vpow.pop %v1491
  %v1493 = vmul.f32 %v1386, 1.442695
  %v1494 = vpow.pop %v1493
  %v1495 = vmul.f32 %v1387, 1.442695
  %v1496 = vpow.pop %v1495
  %v1497 = vmul.f32 %v1388, 1.442695
  %v1498 = vpow.pop %v1497
  %v1499 = vmul.f32 %v1389, 1.442695
  %v1500 = vpow.pop %v1499
  %v1501 = vmul.f32 %v1390, 1.442695
  %v1502 = vpow.pop %v1501
  %v1503 = vmul.f32 %v1391, 1.442695
  %v1504 = vpow.pop %v1503
  %v1505 = vmul.f32 %v1392, 1.442695
  %v1506 = vpow.pop %v1505
  %v1507 = vmul.f32 %v1393, 1.442695
  %v1508 = vpow.pop %v1507
  %v1509 = vmul.f32 %v1394, 1.442695
  %v1510 = vpow.pop %v1509
  %v1511 = vmul.f32 %v1395, 1.442695
  %v1512 = vpow.pop %v1511
  %v1513 = vmul.f32 %v1396, 1.442695
  %v1514 = vpow.pop %v1513
  %v1515 = vmul.f32 %v1397, 1.442695
  %v1516 = vpow.pop %v1515
  %v1517 = vmul.f32 %v1398, 1.442695
  %v1518 = vpow.pop %v1517
  %1579 = vrot.lane.b32.xlu0 %v1400, 118
  %v1580 = vpop.permute.xlu0 %1579
  %1581 = vrot.lane.b32.xlu0 %v1402, 118
  %v1582 = vpop.permute.xlu0 %1581
  %1583 = vrot.lane.b32.xlu0 %v1404, 118
  %v1584 = vpop.permute.xlu0 %1583
  %1585 = vrot.lane.b32.xlu0 %v1406, 118
  %v1586 = vpop.permute.xlu0 %1585
  %1587 = vrot.lane.b32.xlu0 %v1408, 118
  %v1588 = vpop.permute.xlu0 %1587
  %1589 = vrot.lane.b32.xlu0 %v1410, 118
  %v1590 = vpop.permute.xlu0 %1589
  %1591 = vrot.lane.b32.xlu0 %v1412, 118
  %v1592 = vpop.permute.xlu0 %1591
  %1593 = vrot.lane.b32.xlu0 %v1414, 118
  %v1594 = vpop.permute.xlu0 %1593
  %1595 = vrot.lane.b32.xlu0 %v1416, 118
  %v1596 = vpop.permute.xlu0 %1595
  %1597 = vrot.lane.b32.xlu0 %v1418, 118
  %v1598 = vpop.permute.xlu0 %1597
  %1599 = vrot.lane.b32.xlu0 %v1420, 118
  %v1600 = vpop.permute.xlu0 %1599
  %1601 = vrot.lane.b32.xlu0 %v1422, 118
  %v1602 = vpop.permute.xlu0 %1601
  %1603 = vrot.lane.b32.xlu0 %v1424, 118
  %v1604 = vpop.permute.xlu0 %1603
  %1605 = vrot.lane.b32.xlu0 %v1426, 118
  %v1606 = vpop.permute.xlu0 %1605
  %1607 = vrot.lane.b32.xlu0 %v1428, 118
  %v1608 = vpop.permute.xlu0 %1607
  %1609 = vrot.lane.b32.xlu0 %v1430, 118
  %v1610 = vpop.permute.xlu0 %1609
  %1611 = vrot.lane.b32.xlu0 %v1432, 118
  %v1612 = vpop.permute.xlu0 %1611
  %1613 = vrot.lane.b32.xlu0 %v1434, 118
  %v1614 = vpop.permute.xlu0 %1613
  %1615 = vrot.lane.b32.xlu0 %v1436, 118
  %v1616 = vpop.permute.xlu0 %1615
  %1617 = vrot.lane.b32.xlu0 %v1438, 118
  %v1618 = vpop.permute.xlu0 %1617
  %1619 = vrot.lane.b32.xlu0 %v1440, 118
  %v1620 = vpop.permute.xlu0 %1619
  %1621 = vrot.lane.b32.xlu0 %v1442, 118
  %v1622 = vpop.permute.xlu0 %1621
  %1623 = vrot.lane.b32.xlu0 %v1444, 118
  %v1624 = vpop.permute.xlu0 %1623
  %1625 = vrot.lane.b32.xlu0 %v1446, 118
  %v1626 = vpop.permute.xlu0 %1625
  %1627 = vrot.lane.b32.xlu0 %v1448, 118
  %v1628 = vpop.permute.xlu0 %1627
  %1629 = vrot.lane.b32.xlu0 %v1450, 118
  %v1630 = vpop.permute.xlu0 %1629
  %1631 = vrot.lane.b32.xlu0 %v1452, 118
  %v1632 = vpop.permute.xlu0 %1631
  %1633 = vrot.lane.b32.xlu0 %v1454, 118
  %v1634 = vpop.permute.xlu0 %1633
  %1635 = vrot.lane.b32.xlu0 %v1456, 118
  %v1636 = vpop.permute.xlu0 %1635
  %1637 = vrot.lane.b32.xlu0 %v1458, 118
  %v1638 = vpop.permute.xlu0 %1637
  %1639 = vrot.lane.b32.xlu0 %v1460, 118
  %v1640 = vpop.permute.xlu0 %1639
  %1641 = vrot.lane.b32.xlu0 %v1462, 118
  %v1642 = vpop.permute.xlu0 %1641
  %1643 = vrot.lane.b32.xlu0 %v1464, 118
  %v1644 = vpop.permute.xlu0 %1643
  %1645 = vrot.lane.b32.xlu0 %v1466, 118
  %v1646 = vpop.permute.xlu0 %1645
  %1647 = vrot.lane.b32.xlu0 %v1468, 118
  %v1648 = vpop.permute.xlu0 %1647
  %1649 = vrot.lane.b32.xlu0 %v1470, 118
  %v1650 = vpop.permute.xlu0 %1649
  %1651 = vrot.lane.b32.xlu0 %v1472, 118
  %v1652 = vpop.permute.xlu0 %1651
  %1653 = vrot.lane.b32.xlu0 %v1474, 118
  %v1654 = vpop.permute.xlu0 %1653
  %1655 = vrot.lane.b32.xlu0 %v1476, 118
  %v1656 = vpop.permute.xlu0 %1655
  %1657 = vrot.lane.b32.xlu0 %v1478, 118
  %v1658 = vpop.permute.xlu0 %1657
  %1659 = vrot.lane.b32.xlu0 %v1480, 118
  %v1660 = vpop.permute.xlu0 %1659
  %1661 = vrot.lane.b32.xlu0 %v1482, 118
  %v1662 = vpop.permute.xlu0 %1661
  %1663 = vrot.lane.b32.xlu0 %v1484, 118
  %v1664 = vpop.permute.xlu0 %1663
  %1665 = vrot.lane.b32.xlu0 %v1486, 118
  %v1666 = vpop.permute.xlu0 %1665
  %1667 = vrot.lane.b32.xlu0 %v1488, 118
  %v1668 = vpop.permute.xlu0 %1667
  %1669 = vrot.lane.b32.xlu0 %v1490, 118
  %v1670 = vpop.permute.xlu0 %1669
  %1671 = vrot.lane.b32.xlu0 %v1492, 118
  %v1672 = vpop.permute.xlu0 %1671
  %1673 = vrot.lane.b32.xlu0 %v1494, 118
  %v1674 = vpop.permute.xlu0 %1673
  %1675 = vrot.lane.b32.xlu0 %v1496, 118
  %v1676 = vpop.permute.xlu0 %1675
  %1677 = vrot.lane.b32.xlu0 %v1498, 118
  %v1678 = vpop.permute.xlu0 %1677
  %1679 = vrot.lane.b32.xlu0 %v1500, 118
  %v1680 = vpop.permute.xlu0 %1679
  %1681 = vrot.lane.b32.xlu0 %v1502, 118
  %v1682 = vpop.permute.xlu0 %1681
  %1683 = vrot.lane.b32.xlu0 %v1504, 118
  %v1684 = vpop.permute.xlu0 %1683
  %1685 = vrot.lane.b32.xlu0 %v1506, 118
  %v1686 = vpop.permute.xlu0 %1685
  %1687 = vrot.lane.b32.xlu0 %v1508, 118
  %v1688 = vpop.permute.xlu0 %1687
  %1689 = vrot.lane.b32.xlu0 %v1510, 118
  %v1690 = vpop.permute.xlu0 %1689
  %1691 = vrot.lane.b32.xlu0 %v1512, 118
  %v1692 = vpop.permute.xlu0 %1691
  %1693 = vrot.lane.b32.xlu0 %v1514, 118
  %v1694 = vpop.permute.xlu0 %1693
  %1695 = vrot.lane.b32.xlu0 %v1516, 118
  %v1696 = vpop.permute.xlu0 %1695
  %1697 = vrot.lane.b32.xlu0 %v1518, 118
  %v1698 = vpop.permute.xlu0 %1697
  %v1759 = vmul.f32 %v1279, %v1580
  %v1760 = vmul.f32 %v1280, %v1582
  %v1761 = vmul.f32 %v1281, %v1584
  %v1762 = vmul.f32 %v1282, %v1586
  %v1763 = vmul.f32 %v1283, %v1588
  %v1764 = vmul.f32 %v1284, %v1590
  %v1765 = vmul.f32 %v1285, %v1592
  %v1766 = vmul.f32 %v1286, %v1594
  %v1767 = vmul.f32 %v1287, %v1596
  %v1768 = vmul.f32 %v1288, %v1598
  %v1769 = vmul.f32 %v1289, %v1600
  %v1770 = vmul.f32 %v1290, %v1602
  %v1771 = vmul.f32 %v1291, %v1604
  %v1772 = vmul.f32 %v1292, %v1606
  %v1773 = vmul.f32 %v1293, %v1608
  %v1774 = vmul.f32 %v1294, %v1610
  %v1775 = vmul.f32 %v1295, %v1612
  %v1776 = vmul.f32 %v1296, %v1614
  %v1777 = vmul.f32 %v1297, %v1616
  %v1778 = vmul.f32 %v1298, %v1618
  %v1779 = vmul.f32 %v1299, %v1620
  %v1780 = vmul.f32 %v1300, %v1622
  %v1781 = vmul.f32 %v1301, %v1624
  %v1782 = vmul.f32 %v1302, %v1626
  %v1783 = vmul.f32 %v1303, %v1628
  %v1784 = vmul.f32 %v1304, %v1630
  %v1785 = vmul.f32 %v1305, %v1632
  %v1786 = vmul.f32 %v1306, %v1634
  %v1787 = vmul.f32 %v1307, %v1636
  %v1788 = vmul.f32 %v1308, %v1638
  %v1789 = vmul.f32 %v1309, %v1640
  %v1790 = vmul.f32 %v1310, %v1642
  %v1791 = vmul.f32 %v1311, %v1644
  %v1792 = vmul.f32 %v1312, %v1646
  %v1793 = vmul.f32 %v1313, %v1648
  %v1794 = vmul.f32 %v1314, %v1650
  %v1795 = vmul.f32 %v1315, %v1652
  %v1796 = vmul.f32 %v1316, %v1654
  %v1797 = vmul.f32 %v1317, %v1656
  %v1798 = vmul.f32 %v1318, %v1658
  %v1799 = vmul.f32 %v1319, %v1660
  %v1800 = vmul.f32 %v1320, %v1662
  %v1801 = vmul.f32 %v1321, %v1664
  %v1802 = vmul.f32 %v1322, %v1666
  %v1803 = vmul.f32 %v1323, %v1668
  %v1804 = vmul.f32 %v1324, %v1670
  %v1805 = vmul.f32 %v1325, %v1672
  %v1806 = vmul.f32 %v1326, %v1674
  %v1807 = vmul.f32 %v1327, %v1676
  %v1808 = vmul.f32 %v1328, %v1678
  %v1809 = vmul.f32 %v1329, %v1680
  %v1810 = vmul.f32 %v1330, %v1682
  %v1811 = vmul.f32 %v1331, %v1684
  %v1812 = vmul.f32 %v1332, %v1686
  %v1813 = vmul.f32 %v1333, %v1688
  %v1814 = vmul.f32 %v1334, %v1690
  %v1815 = vmul.f32 %v1335, %v1692
  %v1816 = vmul.f32 %v1336, %v1694
  %v1817 = vmul.f32 %v1337, %v1696
  %v1818 = vmul.f32 %v1338, %v1698
  %v1819 = vadd.f32 %v981, %v1759
  %v1820 = vadd.f32 %v986, %v1760
  %v1821 = vadd.f32 %v991, %v1761
  %v1822 = vadd.f32 %v996, %v1762
  %v1823 = vadd.f32 %v1001, %v1763
  %v1824 = vadd.f32 %v1006, %v1764
  %v1825 = vadd.f32 %v1011, %v1765
  %v1826 = vadd.f32 %v1016, %v1766
  %v1827 = vadd.f32 %v1021, %v1767
  %v1828 = vadd.f32 %v1026, %v1768
  %v1829 = vadd.f32 %v1031, %v1769
  %v1830 = vadd.f32 %v1036, %v1770
  %v1831 = vadd.f32 %v1041, %v1771
  %v1832 = vadd.f32 %v1046, %v1772
  %v1833 = vadd.f32 %v1051, %v1773
  %v1834 = vadd.f32 %v1056, %v1774
  %v1835 = vadd.f32 %v1061, %v1775
  %v1836 = vadd.f32 %v1066, %v1776
  %v1837 = vadd.f32 %v1071, %v1777
  %v1838 = vadd.f32 %v1076, %v1778
  %v1839 = vadd.f32 %v1081, %v1779
  %v1840 = vadd.f32 %v1086, %v1780
  %v1841 = vadd.f32 %v1091, %v1781
  %v1842 = vadd.f32 %v1096, %v1782
  %v1843 = vadd.f32 %v1101, %v1783
  %v1844 = vadd.f32 %v1106, %v1784
  %v1845 = vadd.f32 %v1111, %v1785
  %v1846 = vadd.f32 %v1116, %v1786
  %v1847 = vadd.f32 %v1121, %v1787
  %v1848 = vadd.f32 %v1126, %v1788
  %v1849 = vadd.f32 %v1131, %v1789
  %v1850 = vadd.f32 %v1136, %v1790
  %v1851 = vadd.f32 %v1141, %v1791
  %v1852 = vadd.f32 %v1146, %v1792
  %v1853 = vadd.f32 %v1151, %v1793
  %v1854 = vadd.f32 %v1156, %v1794
  %v1855 = vadd.f32 %v1161, %v1795
  %v1856 = vadd.f32 %v1166, %v1796
  %v1857 = vadd.f32 %v1171, %v1797
  %v1858 = vadd.f32 %v1176, %v1798
  %v1859 = vadd.f32 %v1181, %v1799
  %v1860 = vadd.f32 %v1186, %v1800
  %v1861 = vadd.f32 %v1191, %v1801
  %v1862 = vadd.f32 %v1196, %v1802
  %v1863 = vadd.f32 %v1201, %v1803
  %v1864 = vadd.f32 %v1206, %v1804
  %v1865 = vadd.f32 %v1211, %v1805
  %v1866 = vadd.f32 %v1216, %v1806
  %v1867 = vadd.f32 %v1221, %v1807
  %v1868 = vadd.f32 %v1226, %v1808
  %v1869 = vadd.f32 %v1231, %v1809
  %v1870 = vadd.f32 %v1236, %v1810
  %v1871 = vadd.f32 %v1241, %v1811
  %v1872 = vadd.f32 %v1246, %v1812
  %v1873 = vadd.f32 %v1251, %v1813
  %v1874 = vadd.f32 %v1256, %v1814
  %v1875 = vadd.f32 %v1261, %v1815
  %v1876 = vadd.f32 %v1266, %v1816
  %v1877 = vadd.f32 %v1271, %v1817
  %v1878 = vadd.f32 %v1276, %v1818
  %v1879 = vld [vmem:[%s6] sm:$0xff]
  %v1880 = vld [vmem:[%s6 + $0x8] sm:$0x3]
  %v1881 = vld [vmem:[%s7] sm:$0x1]
  %v1883 = vlaneseq
  %v1884 = vshrl.u32 %v1883, 7
  %v1885 = vsub.s32 0, %v1884
  %v1886 = vrot.slane %v1881, %v1885
  %vm1888 = vcmask 80896
  %v1890 = vsel %vm1888, %v1819, 0
  %v1893 = vsel %vm1888, %v1820, 0
  %v1896 = vsel %vm1888, %v1821, 0
  %v1899 = vsel %vm1888, %v1822, 0
  %v1902 = vsel %vm1888, %v1823, 0
  %v1905 = vsel %vm1888, %v1824, 0
  %v1908 = vsel %vm1888, %v1825, 0
  %v1911 = vsel %vm1888, %v1826, 0
  %v1914 = vsel %vm1888, %v1827, 0
  %v1917 = vsel %vm1888, %v1828, 0
  %v1920 = vsel %vm1888, %v1829, 0
  %v1923 = vsel %vm1888, %v1830, 0
  %v1926 = vsel %vm1888, %v1831, 0
  %v1929 = vsel %vm1888, %v1832, 0
  %v1932 = vsel %vm1888, %v1833, 0
  %v1935 = vsel %vm1888, %v1834, 0
  %v1938 = vsel %vm1888, %v1835, 0
  %v1941 = vsel %vm1888, %v1836, 0
  %v1944 = vsel %vm1888, %v1837, 0
  %v1947 = vsel %vm1888, %v1838, 0
  %v1950 = vsel %vm1888, %v1839, 0
  %v1953 = vsel %vm1888, %v1840, 0
  %v1956 = vsel %vm1888, %v1841, 0
  %v1959 = vsel %vm1888, %v1842, 0
  %v1962 = vsel %vm1888, %v1843, 0
  %v1965 = vsel %vm1888, %v1844, 0
  %v1968 = vsel %vm1888, %v1845, 0
  %v1971 = vsel %vm1888, %v1846, 0
  %v1974 = vsel %vm1888, %v1847, 0
  %v1977 = vsel %vm1888, %v1848, 0
  %v1980 = vsel %vm1888, %v1849, 0
  %v1983 = vsel %vm1888, %v1850, 0
  %v1986 = vsel %vm1888, %v1851, 0
  %v1989 = vsel %vm1888, %v1852, 0
  %v1992 = vsel %vm1888, %v1853, 0
  %v1995 = vsel %vm1888, %v1854, 0
  %v1998 = vsel %vm1888, %v1855, 0
  %v2001 = vsel %vm1888, %v1856, 0
  %v2004 = vsel %vm1888, %v1857, 0
  %v2007 = vsel %vm1888, %v1858, 0
  %v2010 = vsel %vm1888, %v1859, 0
  %v2013 = vsel %vm1888, %v1860, 0
  %v2016 = vsel %vm1888, %v1861, 0
  %v2019 = vsel %vm1888, %v1862, 0
  %v2022 = vsel %vm1888, %v1863, 0
  %v2025 = vsel %vm1888, %v1864, 0
  %v2028 = vsel %vm1888, %v1865, 0
  %v2031 = vsel %vm1888, %v1866, 0
  %v2034 = vsel %vm1888, %v1867, 0
  %v2037 = vsel %vm1888, %v1868, 0
  %v2040 = vsel %vm1888, %v1869, 0
  %v2043 = vsel %vm1888, %v1870, 0
  %v2046 = vsel %vm1888, %v1871, 0
  %v2049 = vsel %vm1888, %v1872, 0
  %v2052 = vsel %vm1888, %v1873, 0
  %v2055 = vsel %vm1888, %v1874, 0
  %v2058 = vsel %vm1888, %v1875, 0
  %v2061 = vsel %vm1888, %v1876, 0
  %v2064 = vsel %vm1888, %v1877, 0
  %v2067 = vsel %vm1888, %v1878, 0
  %vm2069 = vcmask 1041408
  %v2071 = vsel %vm2069, %v1880, 0
  %2073 = vmatprep.subr.mxu0 0.0
  %2074 = vmatpush1.msra.mxu0 %v1879
  %2075 = vmatprep.subr.mxu0 0.0
  %2076 = vmatpush1.msra.mxu0 %v2071
  %2077 = vmatprep.subr.mxu0 0.0
  %2078 = vmatpush1.msra.mxu0 0.0
  %2079 = vmatprep.subr.mxu0 0.0
  %2080 = vmatpush1.msra.mxu0 0.0
  %2081 = vmatprep.subr.mxu0 0.0
  %2082 = vmatpush1.msra.mxu0 0.0
  %2083 = vmatprep.subr.mxu0 0.0
  %2084 = vmatpush1.msra.mxu0 0.0
  %2085 = vmatprep.subr.mxu0 0.0
  %2086 = vmatpush1.msra.mxu0 0.0
  %2087 = vmatprep.subr.mxu0 0.0
  %2088 = vmatpush1.msra.mxu0 0.0
  %2089 = vmatprep.subr.mxu0 0.0
  %2090 = vmatpush1.msra.mxu0 0.0
  %2091 = vmatprep.subr.mxu0 0.0
  %2092 = vmatpush1.msra.mxu0 0.0
  %2093 = vmatprep.subr.mxu0 0.0
  %2094 = vmatpush1.msra.mxu0 0.0
  %2095 = vmatprep.subr.mxu0 0.0
  %2096 = vmatpush1.msra.mxu0 0.0
  %2097 = vmatprep.subr.mxu0 0.0
  %2098 = vmatpush1.msra.mxu0 0.0
  %2099 = vmatprep.subr.mxu0 0.0
  %2100 = vmatpush1.msra.mxu0 0.0
  %2101 = vmatprep.subr.mxu0 0.0
  %2102 = vmatpush1.msra.mxu0 0.0
  %2103 = vmatprep.subr.mxu0 0.0
  %2104 = vmatpush1.msra.mxu0 0.0
  %2105 = vmatprep.subr.mxu0 0.0
  %2106 = vmatpush1.msra.mxu0 0.0
  %2107 = vmatprep.subr.mxu0 0.0
  %2108 = vmatpush1.msra.mxu0 0.0
  %2109 = vmatprep.subr.mxu0 0.0
  %2110 = vmatpush1.msra.mxu0 0.0
  %2111 = vmatprep.subr.mxu0 0.0
  %2112 = vmatpush1.msra.mxu0 0.0
  %2113 = vmatprep.subr.mxu0 0.0
  %2114 = vmatpush1.msra.mxu0 0.0
  %2115 = vmatprep.subr.mxu0 0.0
  %2116 = vmatpush1.msra.mxu0 0.0
  %2117 = vmatprep.subr.mxu0 0.0
  %2118 = vmatpush1.msra.mxu0 0.0
  %2119 = vmatprep.subr.mxu0 0.0
  %2120 = vmatpush1.msra.mxu0 0.0
  %2121 = vmatprep.subr.mxu0 0.0
  %2122 = vmatpush1.msra.mxu0 0.0
  %2123 = vmatprep.subr.mxu0 0.0
  %2124 = vmatpush1.msra.mxu0 0.0
  %2125 = vmatprep.subr.mxu0 0.0
  %2126 = vmatpush1.msra.mxu0 0.0
  %2127 = vmatprep.subr.mxu0 0.0
  %2128 = vmatpush1.msra.mxu0 0.0
  %2129 = vmatprep.subr.mxu0 0.0
  %2130 = vmatpush1.msra.mxu0 0.0
  %2131 = vmatprep.subr.mxu0 0.0
  %2132 = vmatpush1.msra.mxu0 0.0
  %2133 = vmatprep.subr.mxu0 0.0
  %2134 = vmatpush1.msra.mxu0 0.0
  %2135 = vmatprep.subr.mxu0 0.0
  %2136 = vmatpush1.msra.mxu0 0.0
  %2137 = vmatprep.mubr.f32.mxu0 0.0
  %2138 = vmatmul.mubr.f32.gmra.mrb[0].mxu0 %v1890
  %v2139 = vpop.f32.mrb[0].mxu0
  %v2140 = vadd.f32 %v1886, %v2139
  %v2141 = vpop.f32.mrb[0].mxu0
  %2142 = vmatprep.mubr.f32.mxu0 0.0
  %2143 = vmatmul.mubr.f32.gmra.mrb[0].mxu0 %v1893
  %v2144 = vpop.f32.mrb[0].mxu0
  %v2145 = vadd.f32 %v1886, %v2144
  %v2146 = vpop.f32.mrb[0].mxu0
  %2147 = vmatprep.mubr.f32.mxu0 0.0
  %2148 = vmatmul.mubr.f32.gmra.mrb[0].mxu0 %v1896
  %v2149 = vpop.f32.mrb[0].mxu0
  %v2150 = vadd.f32 %v1886, %v2149
  %v2151 = vpop.f32.mrb[0].mxu0
  %2152 = vmatprep.mubr.f32.mxu0 0.0
  %2153 = vmatmul.mubr.f32.gmra.mrb[0].mxu0 %v1899
  %v2154 = vpop.f32.mrb[0].mxu0
  %v2155 = vadd.f32 %v1886, %v2154
  %v2156 = vpop.f32.mrb[0].mxu0
  %2157 = vmatprep.mubr.f32.mxu0 0.0
  %2158 = vmatmul.mubr.f32.gmra.mrb[0].mxu0 %v1902
  %v2159 = vpop.f32.mrb[0].mxu0
  %v2160 = vadd.f32 %v1886, %v2159
  %v2161 = vpop.f32.mrb[0].mxu0
  %2162 = vmatprep.mubr.f32.mxu0 0.0
  %2163 = vmatmul.mubr.f32.gmra.mrb[0].mxu0 %v1905
  %v2164 = vpop.f32.mrb[0].mxu0
  %v2165 = vadd.f32 %v1886, %v2164
  %v2166 = vpop.f32.mrb[0].mxu0
  %2167 = vmatprep.mubr.f32.mxu0 0.0
  %2168 = vmatmul.mubr.f32.gmra.mrb[0].mxu0 %v1908
  %v2169 = vpop.f32.mrb[0].mxu0
  %v2170 = vadd.f32 %v1886, %v2169
  %v2171 = vpop.f32.mrb[0].mxu0
  %2172 = vmatprep.mubr.f32.mxu0 0.0
  %2173 = vmatmul.mubr.f32.gmra.mrb[0].mxu0 %v1911
  %v2174 = vpop.f32.mrb[0].mxu0
  %v2175 = vadd.f32 %v1886, %v2174
  %v2176 = vpop.f32.mrb[0].mxu0
  %2177 = vmatprep.mubr.f32.mxu0 0.0
  %2178 = vmatmul.mubr.f32.gmra.mrb[0].mxu0 %v1914
  %v2179 = vpop.f32.mrb[0].mxu0
  %v2180 = vadd.f32 %v1886, %v2179
  %v2181 = vpop.f32.mrb[0].mxu0
  %2182 = vmatprep.mubr.f32.mxu0 0.0
  %2183 = vmatmul.mubr.f32.gmra.mrb[0].mxu0 %v1917
  %v2184 = vpop.f32.mrb[0].mxu0
  %v2185 = vadd.f32 %v1886, %v2184
  %v2186 = vpop.f32.mrb[0].mxu0
  %2187 = vmatprep.mubr.f32.mxu0 0.0
  %2188 = vmatmul.mubr.f32.gmra.mrb[0].mxu0 %v1920
  %v2189 = vpop.f32.mrb[0].mxu0
  %v2190 = vadd.f32 %v1886, %v2189
  %v2191 = vpop.f32.mrb[0].mxu0
  %2192 = vmatprep.mubr.f32.mxu0 0.0
  %2193 = vmatmul.mubr.f32.gmra.mrb[0].mxu0 %v1923
  %v2194 = vpop.f32.mrb[0].mxu0
  %v2195 = vadd.f32 %v1886, %v2194
  %v2196 = vpop.f32.mrb[0].mxu0
  %2197 = vmatprep.mubr.f32.mxu0 0.0
  %2198 = vmatmul.mubr.f32.gmra.mrb[0].mxu0 %v1926
  %v2199 = vpop.f32.mrb[0].mxu0
  %v2200 = vadd.f32 %v1886, %v2199
  %v2201 = vpop.f32.mrb[0].mxu0
  %2202 = vmatprep.mubr.f32.mxu0 0.0
  %2203 = vmatmul.mubr.f32.gmra.mrb[0].mxu0 %v1929
  %v2204 = vpop.f32.mrb[0].mxu0
  %v2205 = vadd.f32 %v1886, %v2204
  %v2206 = vpop.f32.mrb[0].mxu0
  %2207 = vmatprep.mubr.f32.mxu0 0.0
  %2208 = vmatmul.mubr.f32.gmra.mrb[0].mxu0 %v1932
  %v2209 = vpop.f32.mrb[0].mxu0
  %v2210 = vadd.f32 %v1886, %v2209
  %v2211 = vpop.f32.mrb[0].mxu0
  %2212 = vmatprep.mubr.f32.mxu0 0.0
  %2213 = vmatmul.mubr.f32.gmra.mrb[0].mxu0 %v1935
  %v2214 = vpop.f32.mrb[0].mxu0
  %v2215 = vadd.f32 %v1886, %v2214
  %v2216 = vpop.f32.mrb[0].mxu0
  %2217 = vmatprep.mubr.f32.mxu0 0.0
  %2218 = vmatmul.mubr.f32.gmra.mrb[0].mxu0 %v1938
  %v2219 = vpop.f32.mrb[0].mxu0
  %v2220 = vadd.f32 %v1886, %v2219
  %v2221 = vpop.f32.mrb[0].mxu0
  %2222 = vmatprep.mubr.f32.mxu0 0.0
  %2223 = vmatmul.mubr.f32.gmra.mrb[0].mxu0 %v1941
  %v2224 = vpop.f32.mrb[0].mxu0
  %v2225 = vadd.f32 %v1886, %v2224
  %v2226 = vpop.f32.mrb[0].mxu0
  %2227 = vmatprep.mubr.f32.mxu0 0.0
  %2228 = vmatmul.mubr.f32.gmra.mrb[0].mxu0 %v1944
  %v2229 = vpop.f32.mrb[0].mxu0
  %v2230 = vadd.f32 %v1886, %v2229
  %v2231 = vpop.f32.mrb[0].mxu0
  %2232 = vmatprep.mubr.f32.mxu0 0.0
  %2233 = vmatmul.mubr.f32.gmra.mrb[0].mxu0 %v1947
  %v2234 = vpop.f32.mrb[0].mxu0
  %v2235 = vadd.f32 %v1886, %v2234
  %v2236 = vpop.f32.mrb[0].mxu0
  %2237 = vmatprep.mubr.f32.mxu0 0.0
  %2238 = vmatmul.mubr.f32.gmra.mrb[0].mxu0 %v1950
  %v2239 = vpop.f32.mrb[0].mxu0
  %v2240 = vadd.f32 %v1886, %v2239
  %v2241 = vpop.f32.mrb[0].mxu0
  %2242 = vmatprep.mubr.f32.mxu0 0.0
  %2243 = vmatmul.mubr.f32.gmra.mrb[0].mxu0 %v1953
  %v2244 = vpop.f32.mrb[0].mxu0
  %v2245 = vadd.f32 %v1886, %v2244
  %v2246 = vpop.f32.mrb[0].mxu0
  %2247 = vmatprep.mubr.f32.mxu0 0.0
  %2248 = vmatmul.mubr.f32.gmra.mrb[0].mxu0 %v1956
  %v2249 = vpop.f32.mrb[0].mxu0
  %v2250 = vadd.f32 %v1886, %v2249
  %v2251 = vpop.f32.mrb[0].mxu0
  %2252 = vmatprep.mubr.f32.mxu0 0.0
  %2253 = vmatmul.mubr.f32.gmra.mrb[0].mxu0 %v1959
  %v2254 = vpop.f32.mrb[0].mxu0
  %v2255 = vadd.f32 %v1886, %v2254
  %v2256 = vpop.f32.mrb[0].mxu0
  %2257 = vmatprep.mubr.f32.mxu0 0.0
  %2258 = vmatmul.mubr.f32.gmra.mrb[0].mxu0 %v1962
  %v2259 = vpop.f32.mrb[0].mxu0
  %v2260 = vadd.f32 %v1886, %v2259
  %v2261 = vpop.f32.mrb[0].mxu0
  %2262 = vmatprep.mubr.f32.mxu0 0.0
  %2263 = vmatmul.mubr.f32.gmra.mrb[0].mxu0 %v1965
  %v2264 = vpop.f32.mrb[0].mxu0
  %v2265 = vadd.f32 %v1886, %v2264
  %v2266 = vpop.f32.mrb[0].mxu0
  %2267 = vmatprep.mubr.f32.mxu0 0.0
  %2268 = vmatmul.mubr.f32.gmra.mrb[0].mxu0 %v1968
  %v2269 = vpop.f32.mrb[0].mxu0
  %v2270 = vadd.f32 %v1886, %v2269
  %v2271 = vpop.f32.mrb[0].mxu0
  %2272 = vmatprep.mubr.f32.mxu0 0.0
  %2273 = vmatmul.mubr.f32.gmra.mrb[0].mxu0 %v1971
  %v2274 = vpop.f32.mrb[0].mxu0
  %v2275 = vadd.f32 %v1886, %v2274
  %v2276 = vpop.f32.mrb[0].mxu0
  %2277 = vmatprep.mubr.f32.mxu0 0.0
  %2278 = vmatmul.mubr.f32.gmra.mrb[0].mxu0 %v1974
  %v2279 = vpop.f32.mrb[0].mxu0
  %v2280 = vadd.f32 %v1886, %v2279
  %v2281 = vpop.f32.mrb[0].mxu0
  %2282 = vmatprep.mubr.f32.mxu0 0.0
  %2283 = vmatmul.mubr.f32.gmra.mrb[0].mxu0 %v1977
  %v2284 = vpop.f32.mrb[0].mxu0
  %v2285 = vadd.f32 %v1886, %v2284
  %v2286 = vpop.f32.mrb[0].mxu0
  %2287 = vmatprep.mubr.f32.mxu0 0.0
  %2288 = vmatmul.mubr.f32.gmra.mrb[0].mxu0 %v1980
  %v2289 = vpop.f32.mrb[0].mxu0
  %v2290 = vadd.f32 %v1886, %v2289
  %v2291 = vpop.f32.mrb[0].mxu0
  %2292 = vmatprep.mubr.f32.mxu0 0.0
  %2293 = vmatmul.mubr.f32.gmra.mrb[0].mxu0 %v1983
  %v2294 = vpop.f32.mrb[0].mxu0
  %v2295 = vadd.f32 %v1886, %v2294
  %v2296 = vpop.f32.mrb[0].mxu0
  %2297 = vmatprep.mubr.f32.mxu0 0.0
  %2298 = vmatmul.mubr.f32.gmra.mrb[0].mxu0 %v1986
  %v2299 = vpop.f32.mrb[0].mxu0
  %v2300 = vadd.f32 %v1886, %v2299
  %v2301 = vpop.f32.mrb[0].mxu0
  %2302 = vmatprep.mubr.f32.mxu0 0.0
  %2303 = vmatmul.mubr.f32.gmra.mrb[0].mxu0 %v1989
  %v2304 = vpop.f32.mrb[0].mxu0
  %v2305 = vadd.f32 %v1886, %v2304
  %v2306 = vpop.f32.mrb[0].mxu0
  %2307 = vmatprep.mubr.f32.mxu0 0.0
  %2308 = vmatmul.mubr.f32.gmra.mrb[0].mxu0 %v1992
  %v2309 = vpop.f32.mrb[0].mxu0
  %v2310 = vadd.f32 %v1886, %v2309
  %v2311 = vpop.f32.mrb[0].mxu0
  %2312 = vmatprep.mubr.f32.mxu0 0.0
  %2313 = vmatmul.mubr.f32.gmra.mrb[0].mxu0 %v1995
  %v2314 = vpop.f32.mrb[0].mxu0
  %v2315 = vadd.f32 %v1886, %v2314
  %v2316 = vpop.f32.mrb[0].mxu0
  %2317 = vmatprep.mubr.f32.mxu0 0.0
  %2318 = vmatmul.mubr.f32.gmra.mrb[0].mxu0 %v1998
  %v2319 = vpop.f32.mrb[0].mxu0
  %v2320 = vadd.f32 %v1886, %v2319
  %v2321 = vpop.f32.mrb[0].mxu0
  %2322 = vmatprep.mubr.f32.mxu0 0.0
  %2323 = vmatmul.mubr.f32.gmra.mrb[0].mxu0 %v2001
  %v2324 = vpop.f32.mrb[0].mxu0
  %v2325 = vadd.f32 %v1886, %v2324
  %v2326 = vpop.f32.mrb[0].mxu0
  %2327 = vmatprep.mubr.f32.mxu0 0.0
  %2328 = vmatmul.mubr.f32.gmra.mrb[0].mxu0 %v2004
  %v2329 = vpop.f32.mrb[0].mxu0
  %v2330 = vadd.f32 %v1886, %v2329
  %v2331 = vpop.f32.mrb[0].mxu0
  %2332 = vmatprep.mubr.f32.mxu0 0.0
  %2333 = vmatmul.mubr.f32.gmra.mrb[0].mxu0 %v2007
  %v2334 = vpop.f32.mrb[0].mxu0
  %v2335 = vadd.f32 %v1886, %v2334
  %v2336 = vpop.f32.mrb[0].mxu0
  %2337 = vmatprep.mubr.f32.mxu0 0.0
  %2338 = vmatmul.mubr.f32.gmra.mrb[0].mxu0 %v2010
  %v2339 = vpop.f32.mrb[0].mxu0
  %v2340 = vadd.f32 %v1886, %v2339
  %v2341 = vpop.f32.mrb[0].mxu0
  %2342 = vmatprep.mubr.f32.mxu0 0.0
  %2343 = vmatmul.mubr.f32.gmra.mrb[0].mxu0 %v2013
  %v2344 = vpop.f32.mrb[0].mxu0
  %v2345 = vadd.f32 %v1886, %v2344
  %v2346 = vpop.f32.mrb[0].mxu0
  %2347 = vmatprep.mubr.f32.mxu0 0.0
  %2348 = vmatmul.mubr.f32.gmra.mrb[0].mxu0 %v2016
  %v2349 = vpop.f32.mrb[0].mxu0
  %v2350 = vadd.f32 %v1886, %v2349
  %v2351 = vpop.f32.mrb[0].mxu0
  %2352 = vmatprep.mubr.f32.mxu0 0.0
  %2353 = vmatmul.mubr.f32.gmra.mrb[0].mxu0 %v2019
  %v2354 = vpop.f32.mrb[0].mxu0
  %v2355 = vadd.f32 %v1886, %v2354
  %v2356 = vpop.f32.mrb[0].mxu0
  %2357 = vmatprep.mubr.f32.mxu0 0.0
  %2358 = vmatmul.mubr.f32.gmra.mrb[0].mxu0 %v2022
  %v2359 = vpop.f32.mrb[0].mxu0
  %v2360 = vadd.f32 %v1886, %v2359
  %v2361 = vpop.f32.mrb[0].mxu0
  %2362 = vmatprep.mubr.f32.mxu0 0.0
  %2363 = vmatmul.mubr.f32.gmra.mrb[0].mxu0 %v2025
  %v2364 = vpop.f32.mrb[0].mxu0
  %v2365 = vadd.f32 %v1886, %v2364
  %v2366 = vpop.f32.mrb[0].mxu0
  %2367 = vmatprep.mubr.f32.mxu0 0.0
  %2368 = vmatmul.mubr.f32.gmra.mrb[0].mxu0 %v2028
  %v2369 = vpop.f32.mrb[0].mxu0
  %v2370 = vadd.f32 %v1886, %v2369
  %v2371 = vpop.f32.mrb[0].mxu0
  %2372 = vmatprep.mubr.f32.mxu0 0.0
  %2373 = vmatmul.mubr.f32.gmra.mrb[0].mxu0 %v2031
  %v2374 = vpop.f32.mrb[0].mxu0
  %v2375 = vadd.f32 %v1886, %v2374
  %v2376 = vpop.f32.mrb[0].mxu0
  %2377 = vmatprep.mubr.f32.mxu0 0.0
  %2378 = vmatmul.mubr.f32.gmra.mrb[0].mxu0 %v2034
  %v2379 = vpop.f32.mrb[0].mxu0
  %v2380 = vadd.f32 %v1886, %v2379
  %v2381 = vpop.f32.mrb[0].mxu0
  %2382 = vmatprep.mubr.f32.mxu0 0.0
  %2383 = vmatmul.mubr.f32.gmra.mrb[0].mxu0 %v2037
  %v2384 = vpop.f32.mrb[0].mxu0
  %v2385 = vadd.f32 %v1886, %v2384
  %v2386 = vpop.f32.mrb[0].mxu0
  %2387 = vmatprep.mubr.f32.mxu0 0.0
  %2388 = vmatmul.mubr.f32.gmra.mrb[0].mxu0 %v2040
  %v2389 = vpop.f32.mrb[0].mxu0
  %v2390 = vadd.f32 %v1886, %v2389
  %v2391 = vpop.f32.mrb[0].mxu0
  %2392 = vmatprep.mubr.f32.mxu0 0.0
  %2393 = vmatmul.mubr.f32.gmra.mrb[0].mxu0 %v2043
  %v2394 = vpop.f32.mrb[0].mxu0
  %v2395 = vadd.f32 %v1886, %v2394
  %v2396 = vpop.f32.mrb[0].mxu0
  %2397 = vmatprep.mubr.f32.mxu0 0.0
  %2398 = vmatmul.mubr.f32.gmra.mrb[0].mxu0 %v2046
  %v2399 = vpop.f32.mrb[0].mxu0
  %v2400 = vadd.f32 %v1886, %v2399
  %v2401 = vpop.f32.mrb[0].mxu0
  %2402 = vmatprep.mubr.f32.mxu0 0.0
  %2403 = vmatmul.mubr.f32.gmra.mrb[0].mxu0 %v2049
  %v2404 = vpop.f32.mrb[0].mxu0
  %v2405 = vadd.f32 %v1886, %v2404
  %v2406 = vpop.f32.mrb[0].mxu0
  %2407 = vmatprep.mubr.f32.mxu0 0.0
  %2408 = vmatmul.mubr.f32.gmra.mrb[0].mxu0 %v2052
  %v2409 = vpop.f32.mrb[0].mxu0
  %v2410 = vadd.f32 %v1886, %v2409
  %v2411 = vpop.f32.mrb[0].mxu0
  %2412 = vmatprep.mubr.f32.mxu0 0.0
  %2413 = vmatmul.mubr.f32.gmra.mrb[0].mxu0 %v2055
  %v2414 = vpop.f32.mrb[0].mxu0
  %v2415 = vadd.f32 %v1886, %v2414
  %v2416 = vpop.f32.mrb[0].mxu0
  %2417 = vmatprep.mubr.f32.mxu0 0.0
  %2418 = vmatmul.mubr.f32.gmra.mrb[0].mxu0 %v2058
  %v2419 = vpop.f32.mrb[0].mxu0
  %v2420 = vadd.f32 %v1886, %v2419
  %v2421 = vpop.f32.mrb[0].mxu0
  %2422 = vmatprep.mubr.f32.mxu0 0.0
  %2423 = vmatmul.mubr.f32.gmra.mrb[0].mxu0 %v2061
  %v2424 = vpop.f32.mrb[0].mxu0
  %v2425 = vadd.f32 %v1886, %v2424
  %v2426 = vpop.f32.mrb[0].mxu0
  %2427 = vmatprep.mubr.f32.mxu0 0.0
  %2428 = vmatmul.mubr.f32.gmra.mrb[0].mxu0 %v2064
  %v2429 = vpop.f32.mrb[0].mxu0
  %v2430 = vadd.f32 %v1886, %v2429
  %v2431 = vpop.f32.mrb[0].mxu0
  %2432 = vmatprep.mubr.f32.mxu0 0.0
  %2433 = vmatmul.mubr.f32.gmra.mrb[0].mxu0 %v2067
  %v2434 = vpop.f32.mrb[0].mxu0
  %v2435 = vadd.f32 %v1886, %v2434
  %v2436 = vpop.f32.mrb[0].mxu0
  %2437 = vdwg.mxu0
  %v2438 = vmax.f32 %v2140, 0.0
  %v2439 = vmax.f32 %v2145, 0.0
  %v2440 = vmax.f32 %v2150, 0.0
  %v2441 = vmax.f32 %v2155, 0.0
  %v2442 = vmax.f32 %v2160, 0.0
  %v2443 = vmax.f32 %v2165, 0.0
  %v2444 = vmax.f32 %v2170, 0.0
  %v2445 = vmax.f32 %v2175, 0.0
  %v2446 = vmax.f32 %v2180, 0.0
  %v2447 = vmax.f32 %v2185, 0.0
  %v2448 = vmax.f32 %v2190, 0.0
  %v2449 = vmax.f32 %v2195, 0.0
  %v2450 = vmax.f32 %v2200, 0.0
  %v2451 = vmax.f32 %v2205, 0.0
  %v2452 = vmax.f32 %v2210, 0.0
  %v2453 = vmax.f32 %v2215, 0.0
  %v2454 = vmax.f32 %v2220, 0.0
  %v2455 = vmax.f32 %v2225, 0.0
  %v2456 = vmax.f32 %v2230, 0.0
  %v2457 = vmax.f32 %v2235, 0.0
  %v2458 = vmax.f32 %v2240, 0.0
  %v2459 = vmax.f32 %v2245, 0.0
  %v2460 = vmax.f32 %v2250, 0.0
  %v2461 = vmax.f32 %v2255, 0.0
  %v2462 = vmax.f32 %v2260, 0.0
  %v2463 = vmax.f32 %v2265, 0.0
  %v2464 = vmax.f32 %v2270, 0.0
  %v2465 = vmax.f32 %v2275, 0.0
  %v2466 = vmax.f32 %v2280, 0.0
  %v2467 = vmax.f32 %v2285, 0.0
  %v2468 = vmax.f32 %v2290, 0.0
  %v2469 = vmax.f32 %v2295, 0.0
  %v2470 = vmax.f32 %v2300, 0.0
  %v2471 = vmax.f32 %v2305, 0.0
  %v2472 = vmax.f32 %v2310, 0.0
  %v2473 = vmax.f32 %v2315, 0.0
  %v2474 = vmax.f32 %v2320, 0.0
  %v2475 = vmax.f32 %v2325, 0.0
  %v2476 = vmax.f32 %v2330, 0.0
  %v2477 = vmax.f32 %v2335, 0.0
  %v2478 = vmax.f32 %v2340, 0.0
  %v2479 = vmax.f32 %v2345, 0.0
  %v2480 = vmax.f32 %v2350, 0.0
  %v2481 = vmax.f32 %v2355, 0.0
  %v2482 = vmax.f32 %v2360, 0.0
  %v2483 = vmax.f32 %v2365, 0.0
  %v2484 = vmax.f32 %v2370, 0.0
  %v2485 = vmax.f32 %v2375, 0.0
  %v2486 = vmax.f32 %v2380, 0.0
  %v2487 = vmax.f32 %v2385, 0.0
  %v2488 = vmax.f32 %v2390, 0.0
  %v2489 = vmax.f32 %v2395, 0.0
  %v2490 = vmax.f32 %v2400, 0.0
  %v2491 = vmax.f32 %v2405, 0.0
  %v2492 = vmax.f32 %v2410, 0.0
  %v2493 = vmax.f32 %v2415, 0.0
  %v2494 = vmax.f32 %v2420, 0.0
  %v2495 = vmax.f32 %v2425, 0.0
  %v2496 = vmax.f32 %v2430, 0.0
  %v2497 = vmax.f32 %v2435, 0.0
  %v2498 = vld [vmem:[%s8] sm:$0xff]
  %v2499 = vld [vmem:[%s8 + $0x8] sm:$0xff]
  %v2500 = vld [vmem:[%s8 + $0x10] sm:$0xff]
  %v2501 = vld [vmem:[%s8 + $0x18] sm:$0xff]
  %v2502 = vld [vmem:[%s8 + $0x20] sm:$0xff]
  %v2503 = vld [vmem:[%s8 + $0x28] sm:$0xff]
  %v2504 = vld [vmem:[%s8 + $0x30] sm:$0xff]
  %v2505 = vld [vmem:[%s8 + $0x38] sm:$0xff]
  %v2506 = vld [vmem:[%s9] sm:$0x1]
  %v2508 = vlaneseq
  %v2509 = vshrl.u32 %v2508, 7
  %v2510 = vsub.s32 0, %v2509
  %v2511 = vrot.slane %v2506, %v2510
  %v2514 = vsel %vm733, %v2438, 0
  %v2517 = vsel %vm733, %v2439, 0
  %v2520 = vsel %vm733, %v2440, 0
  %v2523 = vsel %vm733, %v2441, 0
  %v2526 = vsel %vm733, %v2442, 0
  %v2529 = vsel %vm733, %v2443, 0
  %v2532 = vsel %vm733, %v2444, 0
  %v2535 = vsel %vm733, %v2445, 0
  %v2538 = vsel %vm733, %v2446, 0
  %v2541 = vsel %vm733, %v2447, 0
  %v2544 = vsel %vm733, %v2448, 0
  %v2547 = vsel %vm733, %v2449, 0
  %v2550 = vsel %vm733, %v2450, 0
  %v2553 = vsel %vm733, %v2451, 0
  %v2556 = vsel %vm733, %v2452, 0
  %v2559 = vsel %vm733, %v2453, 0
  %v2562 = vsel %vm733, %v2454, 0
  %v2565 = vsel %vm733, %v2455, 0
  %v2568 = vsel %vm733, %v2456, 0
  %v2571 = vsel %vm733, %v2457, 0
  %v2574 = vsel %vm733, %v2458, 0
  %v2577 = vsel %vm733, %v2459, 0
  %v2580 = vsel %vm733, %v2460, 0
  %v2583 = vsel %vm733, %v2461, 0
  %v2586 = vsel %vm733, %v2462, 0
  %v2589 = vsel %vm733, %v2463, 0
  %v2592 = vsel %vm733, %v2464, 0
  %v2595 = vsel %vm733, %v2465, 0
  %v2598 = vsel %vm733, %v2466, 0
  %v2601 = vsel %vm733, %v2467, 0
  %v2604 = vsel %vm733, %v2468, 0
  %v2607 = vsel %vm733, %v2469, 0
  %v2610 = vsel %vm733, %v2470, 0
  %v2613 = vsel %vm733, %v2471, 0
  %v2616 = vsel %vm733, %v2472, 0
  %v2619 = vsel %vm733, %v2473, 0
  %v2622 = vsel %vm733, %v2474, 0
  %v2625 = vsel %vm733, %v2475, 0
  %v2628 = vsel %vm733, %v2476, 0
  %v2631 = vsel %vm733, %v2477, 0
  %v2634 = vsel %vm733, %v2478, 0
  %v2637 = vsel %vm733, %v2479, 0
  %v2640 = vsel %vm733, %v2480, 0
  %v2643 = vsel %vm733, %v2481, 0
  %v2646 = vsel %vm733, %v2482, 0
  %v2649 = vsel %vm733, %v2483, 0
  %v2652 = vsel %vm733, %v2484, 0
  %v2655 = vsel %vm733, %v2485, 0
  %v2658 = vsel %vm733, %v2486, 0
  %v2661 = vsel %vm733, %v2487, 0
  %v2664 = vsel %vm733, %v2488, 0
  %v2667 = vsel %vm733, %v2489, 0
  %v2670 = vsel %vm733, %v2490, 0
  %v2673 = vsel %vm733, %v2491, 0
  %v2676 = vsel %vm733, %v2492, 0
  %v2679 = vsel %vm733, %v2493, 0
  %v2682 = vsel %vm733, %v2494, 0
  %v2685 = vsel %vm733, %v2495, 0
  %v2688 = vsel %vm733, %v2496, 0
  %v2691 = vsel %vm733, %v2497, 0
  %2693 = vmatprep.subr.mxu0 0.0
  %2694 = vmatpush1.msra.mxu0 %v2498
  %2695 = vmatprep.subr.mxu0 0.0
  %2696 = vmatpush1.msra.mxu0 %v2499
  %2697 = vmatprep.subr.mxu0 0.0
  %2698 = vmatpush1.msra.mxu0 %v2500
  %2699 = vmatprep.subr.mxu0 0.0
  %2700 = vmatpush1.msra.mxu0 %v2501
  %2701 = vmatprep.subr.mxu0 0.0
  %2702 = vmatpush1.msra.mxu0 %v2502
  %2703 = vmatprep.subr.mxu0 0.0
  %2704 = vmatpush1.msra.mxu0 %v2503
  %2705 = vmatprep.subr.mxu0 0.0
  %2706 = vmatpush1.msra.mxu0 %v2504
  %2707 = vmatprep.subr.mxu0 0.0
  %2708 = vmatpush1.msra.mxu0 %v2505
  %2709 = vmatprep.subr.mxu0 0.0
  %2710 = vmatpush1.msra.mxu0 0.0
  %2711 = vmatprep.subr.mxu0 0.0
  %2712 = vmatpush1.msra.mxu0 0.0
  %2713 = vmatprep.subr.mxu0 0.0
  %2714 = vmatpush1.msra.mxu0 0.0
  %2715 = vmatprep.subr.mxu0 0.0
  %2716 = vmatpush1.msra.mxu0 0.0
  %2717 = vmatprep.subr.mxu0 0.0
  %2718 = vmatpush1.msra.mxu0 0.0
  %2719 = vmatprep.subr.mxu0 0.0
  %2720 = vmatpush1.msra.mxu0 0.0
  %2721 = vmatprep.subr.mxu0 0.0
  %2722 = vmatpush1.msra.mxu0 0.0
  %2723 = vmatprep.subr.mxu0 0.0
  %2724 = vmatpush1.msra.mxu0 0.0
  %2725 = vmatprep.subr.mxu0 0.0
  %2726 = vmatpush1.msra.mxu0 0.0
  %2727 = vmatprep.subr.mxu0 0.0
  %2728 = vmatpush1.msra.mxu0 0.0
  %2729 = vmatprep.subr.mxu0 0.0
  %2730 = vmatpush1.msra.mxu0 0.0
  %2731 = vmatprep.subr.mxu0 0.0
  %2732 = vmatpush1.msra.mxu0 0.0
  %2733 = vmatprep.subr.mxu0 0.0
  %2734 = vmatpush1.msra.mxu0 0.0
  %2735 = vmatprep.subr.mxu0 0.0
  %2736 = vmatpush1.msra.mxu0 0.0
  %2737 = vmatprep.subr.mxu0 0.0
  %2738 = vmatpush1.msra.mxu0 0.0
  %2739 = vmatprep.subr.mxu0 0.0
  %2740 = vmatpush1.msra.mxu0 0.0
  %2741 = vmatprep.subr.mxu0 0.0
  %2742 = vmatpush1.msra.mxu0 0.0
  %2743 = vmatprep.subr.mxu0 0.0
  %2744 = vmatpush1.msra.mxu0 0.0
  %2745 = vmatprep.subr.mxu0 0.0
  %2746 = vmatpush1.msra.mxu0 0.0
  %2747 = vmatprep.subr.mxu0 0.0
  %2748 = vmatpush1.msra.mxu0 0.0
  %2749 = vmatprep.subr.mxu0 0.0
  %2750 = vmatpush1.msra.mxu0 0.0
  %2751 = vmatprep.subr.mxu0 0.0
  %2752 = vmatpush1.msra.mxu0 0.0
  %2753 = vmatprep.subr.mxu0 0.0
  %2754 = vmatpush1.msra.mxu0 0.0
  %2755 = vmatprep.subr.mxu0 0.0
  %2756 = vmatpush1.msra.mxu0 0.0
  %2757 = vmatprep.mubr.f32.mxu0 0.0
  %2758 = vmatmul.mubr.f32.gmra.mrb[0].mxu0 %v2514
  %v2759 = vpop.f32.mrb[0].mxu0
  %v2760 = vadd.f32 %v2511, %v2759
  %v2761 = vpop.f32.mrb[0].mxu0
  %2762 = vmatprep.mubr.f32.mxu0 0.0
  %2763 = vmatmul.mubr.f32.gmra.mrb[0].mxu0 %v2517
  %v2764 = vpop.f32.mrb[0].mxu0
  %v2765 = vadd.f32 %v2511, %v2764
  %v2766 = vpop.f32.mrb[0].mxu0
  %2767 = vmatprep.mubr.f32.mxu0 0.0
  %2768 = vmatmul.mubr.f32.gmra.mrb[0].mxu0 %v2520
  %v2769 = vpop.f32.mrb[0].mxu0
  %v2770 = vadd.f32 %v2511, %v2769
  %v2771 = vpop.f32.mrb[0].mxu0
  %2772 = vmatprep.mubr.f32.mxu0 0.0
  %2773 = vmatmul.mubr.f32.gmra.mrb[0].mxu0 %v2523
  %v2774 = vpop.f32.mrb[0].mxu0
  %v2775 = vadd.f32 %v2511, %v2774
  %v2776 = vpop.f32.mrb[0].mxu0
  %2777 = vmatprep.mubr.f32.mxu0 0.0
  %2778 = vmatmul.mubr.f32.gmra.mrb[0].mxu0 %v2526
  %v2779 = vpop.f32.mrb[0].mxu0
  %v2780 = vadd.f32 %v2511, %v2779
  %v2781 = vpop.f32.mrb[0].mxu0
  %2782 = vmatprep.mubr.f32.mxu0 0.0
  %2783 = vmatmul.mubr.f32.gmra.mrb[0].mxu0 %v2529
  %v2784 = vpop.f32.mrb[0].mxu0
  %v2785 = vadd.f32 %v2511, %v2784
  %v2786 = vpop.f32.mrb[0].mxu0
  %2787 = vmatprep.mubr.f32.mxu0 0.0
  %2788 = vmatmul.mubr.f32.gmra.mrb[0].mxu0 %v2532
  %v2789 = vpop.f32.mrb[0].mxu0
  %v2790 = vadd.f32 %v2511, %v2789
  %v2791 = vpop.f32.mrb[0].mxu0
  %2792 = vmatprep.mubr.f32.mxu0 0.0
  %2793 = vmatmul.mubr.f32.gmra.mrb[0].mxu0 %v2535
  %v2794 = vpop.f32.mrb[0].mxu0
  %v2795 = vadd.f32 %v2511, %v2794
  %v2796 = vpop.f32.mrb[0].mxu0
  %2797 = vmatprep.mubr.f32.mxu0 0.0
  %2798 = vmatmul.mubr.f32.gmra.mrb[0].mxu0 %v2538
  %v2799 = vpop.f32.mrb[0].mxu0
  %v2800 = vadd.f32 %v2511, %v2799
  %v2801 = vpop.f32.mrb[0].mxu0
  %2802 = vmatprep.mubr.f32.mxu0 0.0
  %2803 = vmatmul.mubr.f32.gmra.mrb[0].mxu0 %v2541
  %v2804 = vpop.f32.mrb[0].mxu0
  %v2805 = vadd.f32 %v2511, %v2804
  %v2806 = vpop.f32.mrb[0].mxu0
  %2807 = vmatprep.mubr.f32.mxu0 0.0
  %2808 = vmatmul.mubr.f32.gmra.mrb[0].mxu0 %v2544
  %v2809 = vpop.f32.mrb[0].mxu0
  %v2810 = vadd.f32 %v2511, %v2809
  %v2811 = vpop.f32.mrb[0].mxu0
  %2812 = vmatprep.mubr.f32.mxu0 0.0
  %2813 = vmatmul.mubr.f32.gmra.mrb[0].mxu0 %v2547
  %v2814 = vpop.f32.mrb[0].mxu0
  %v2815 = vadd.f32 %v2511, %v2814
  %v2816 = vpop.f32.mrb[0].mxu0
  %2817 = vmatprep.mubr.f32.mxu0 0.0
  %2818 = vmatmul.mubr.f32.gmra.mrb[0].mxu0 %v2550
  %v2819 = vpop.f32.mrb[0].mxu0
  %v2820 = vadd.f32 %v2511, %v2819
  %v2821 = vpop.f32.mrb[0].mxu0
  %2822 = vmatprep.mubr.f32.mxu0 0.0
  %2823 = vmatmul.mubr.f32.gmra.mrb[0].mxu0 %v2553
  %v2824 = vpop.f32.mrb[0].mxu0
  %v2825 = vadd.f32 %v2511, %v2824
  %v2826 = vpop.f32.mrb[0].mxu0
  %2827 = vmatprep.mubr.f32.mxu0 0.0
  %2828 = vmatmul.mubr.f32.gmra.mrb[0].mxu0 %v2556
  %v2829 = vpop.f32.mrb[0].mxu0
  %v2830 = vadd.f32 %v2511, %v2829
  %v2831 = vpop.f32.mrb[0].mxu0
  %2832 = vmatprep.mubr.f32.mxu0 0.0
  %2833 = vmatmul.mubr.f32.gmra.mrb[0].mxu0 %v2559
  %v2834 = vpop.f32.mrb[0].mxu0
  %v2835 = vadd.f32 %v2511, %v2834
  %v2836 = vpop.f32.mrb[0].mxu0
  %2837 = vmatprep.mubr.f32.mxu0 0.0
  %2838 = vmatmul.mubr.f32.gmra.mrb[0].mxu0 %v2562
  %v2839 = vpop.f32.mrb[0].mxu0
  %v2840 = vadd.f32 %v2511, %v2839
  %v2841 = vpop.f32.mrb[0].mxu0
  %2842 = vmatprep.mubr.f32.mxu0 0.0
  %2843 = vmatmul.mubr.f32.gmra.mrb[0].mxu0 %v2565
  %v2844 = vpop.f32.mrb[0].mxu0
  %v2845 = vadd.f32 %v2511, %v2844
  %v2846 = vpop.f32.mrb[0].mxu0
  %2847 = vmatprep.mubr.f32.mxu0 0.0
  %2848 = vmatmul.mubr.f32.gmra.mrb[0].mxu0 %v2568
  %v2849 = vpop.f32.mrb[0].mxu0
  %v2850 = vadd.f32 %v2511, %v2849
  %v2851 = vpop.f32.mrb[0].mxu0
  %2852 = vmatprep.mubr.f32.mxu0 0.0
  %2853 = vmatmul.mubr.f32.gmra.mrb[0].mxu0 %v2571
  %v2854 = vpop.f32.mrb[0].mxu0
  %v2855 = vadd.f32 %v2511, %v2854
  %v2856 = vpop.f32.mrb[0].mxu0
  %2857 = vmatprep.mubr.f32.mxu0 0.0
  %2858 = vmatmul.mubr.f32.gmra.mrb[0].mxu0 %v2574
  %v2859 = vpop.f32.mrb[0].mxu0
  %v2860 = vadd.f32 %v2511, %v2859
  %v2861 = vpop.f32.mrb[0].mxu0
  %2862 = vmatprep.mubr.f32.mxu0 0.0
  %2863 = vmatmul.mubr.f32.gmra.mrb[0].mxu0 %v2577
  %v2864 = vpop.f32.mrb[0].mxu0
  %v2865 = vadd.f32 %v2511, %v2864
  %v2866 = vpop.f32.mrb[0].mxu0
  %2867 = vmatprep.mubr.f32.mxu0 0.0
  %2868 = vmatmul.mubr.f32.gmra.mrb[0].mxu0 %v2580
  %v2869 = vpop.f32.mrb[0].mxu0
  %v2870 = vadd.f32 %v2511, %v2869
  %v2871 = vpop.f32.mrb[0].mxu0
  %2872 = vmatprep.mubr.f32.mxu0 0.0
  %2873 = vmatmul.mubr.f32.gmra.mrb[0].mxu0 %v2583
  %v2874 = vpop.f32.mrb[0].mxu0
  %v2875 = vadd.f32 %v2511, %v2874
  %v2876 = vpop.f32.mrb[0].mxu0
  %2877 = vmatprep.mubr.f32.mxu0 0.0
  %2878 = vmatmul.mubr.f32.gmra.mrb[0].mxu0 %v2586
  %v2879 = vpop.f32.mrb[0].mxu0
  %v2880 = vadd.f32 %v2511, %v2879
  %v2881 = vpop.f32.mrb[0].mxu0
  %2882 = vmatprep.mubr.f32.mxu0 0.0
  %2883 = vmatmul.mubr.f32.gmra.mrb[0].mxu0 %v2589
  %v2884 = vpop.f32.mrb[0].mxu0
  %v2885 = vadd.f32 %v2511, %v2884
  %v2886 = vpop.f32.mrb[0].mxu0
  %2887 = vmatprep.mubr.f32.mxu0 0.0
  %2888 = vmatmul.mubr.f32.gmra.mrb[0].mxu0 %v2592
  %v2889 = vpop.f32.mrb[0].mxu0
  %v2890 = vadd.f32 %v2511, %v2889
  %v2891 = vpop.f32.mrb[0].mxu0
  %2892 = vmatprep.mubr.f32.mxu0 0.0
  %2893 = vmatmul.mubr.f32.gmra.mrb[0].mxu0 %v2595
  %v2894 = vpop.f32.mrb[0].mxu0
  %v2895 = vadd.f32 %v2511, %v2894
  %v2896 = vpop.f32.mrb[0].mxu0
  %2897 = vmatprep.mubr.f32.mxu0 0.0
  %2898 = vmatmul.mubr.f32.gmra.mrb[0].mxu0 %v2598
  %v2899 = vpop.f32.mrb[0].mxu0
  %v2900 = vadd.f32 %v2511, %v2899
  %v2901 = vpop.f32.mrb[0].mxu0
  %2902 = vmatprep.mubr.f32.mxu0 0.0
  %2903 = vmatmul.mubr.f32.gmra.mrb[0].mxu0 %v2601
  %v2904 = vpop.f32.mrb[0].mxu0
  %v2905 = vadd.f32 %v2511, %v2904
  %v2906 = vpop.f32.mrb[0].mxu0
  %2907 = vmatprep.mubr.f32.mxu0 0.0
  %2908 = vmatmul.mubr.f32.gmra.mrb[0].mxu0 %v2604
  %v2909 = vpop.f32.mrb[0].mxu0
  %v2910 = vadd.f32 %v2511, %v2909
  %v2911 = vpop.f32.mrb[0].mxu0
  %2912 = vmatprep.mubr.f32.mxu0 0.0
  %2913 = vmatmul.mubr.f32.gmra.mrb[0].mxu0 %v2607
  %v2914 = vpop.f32.mrb[0].mxu0
  %v2915 = vadd.f32 %v2511, %v2914
  %v2916 = vpop.f32.mrb[0].mxu0
  %2917 = vmatprep.mubr.f32.mxu0 0.0
  %2918 = vmatmul.mubr.f32.gmra.mrb[0].mxu0 %v2610
  %v2919 = vpop.f32.mrb[0].mxu0
  %v2920 = vadd.f32 %v2511, %v2919
  %v2921 = vpop.f32.mrb[0].mxu0
  %2922 = vmatprep.mubr.f32.mxu0 0.0
  %2923 = vmatmul.mubr.f32.gmra.mrb[0].mxu0 %v2613
  %v2924 = vpop.f32.mrb[0].mxu0
  %v2925 = vadd.f32 %v2511, %v2924
  %v2926 = vpop.f32.mrb[0].mxu0
  %2927 = vmatprep.mubr.f32.mxu0 0.0
  %2928 = vmatmul.mubr.f32.gmra.mrb[0].mxu0 %v2616
  %v2929 = vpop.f32.mrb[0].mxu0
  %v2930 = vadd.f32 %v2511, %v2929
  %v2931 = vpop.f32.mrb[0].mxu0
  %2932 = vmatprep.mubr.f32.mxu0 0.0
  %2933 = vmatmul.mubr.f32.gmra.mrb[0].mxu0 %v2619
  %v2934 = vpop.f32.mrb[0].mxu0
  %v2935 = vadd.f32 %v2511, %v2934
  %v2936 = vpop.f32.mrb[0].mxu0
  %2937 = vmatprep.mubr.f32.mxu0 0.0
  %2938 = vmatmul.mubr.f32.gmra.mrb[0].mxu0 %v2622
  %v2939 = vpop.f32.mrb[0].mxu0
  %v2940 = vadd.f32 %v2511, %v2939
  %v2941 = vpop.f32.mrb[0].mxu0
  %2942 = vmatprep.mubr.f32.mxu0 0.0
  %2943 = vmatmul.mubr.f32.gmra.mrb[0].mxu0 %v2625
  %v2944 = vpop.f32.mrb[0].mxu0
  %v2945 = vadd.f32 %v2511, %v2944
  %v2946 = vpop.f32.mrb[0].mxu0
  %2947 = vmatprep.mubr.f32.mxu0 0.0
  %2948 = vmatmul.mubr.f32.gmra.mrb[0].mxu0 %v2628
  %v2949 = vpop.f32.mrb[0].mxu0
  %v2950 = vadd.f32 %v2511, %v2949
  %v2951 = vpop.f32.mrb[0].mxu0
  %2952 = vmatprep.mubr.f32.mxu0 0.0
  %2953 = vmatmul.mubr.f32.gmra.mrb[0].mxu0 %v2631
  %v2954 = vpop.f32.mrb[0].mxu0
  %v2955 = vadd.f32 %v2511, %v2954
  %v2956 = vpop.f32.mrb[0].mxu0
  %2957 = vmatprep.mubr.f32.mxu0 0.0
  %2958 = vmatmul.mubr.f32.gmra.mrb[0].mxu0 %v2634
  %v2959 = vpop.f32.mrb[0].mxu0
  %v2960 = vadd.f32 %v2511, %v2959
  %v2961 = vpop.f32.mrb[0].mxu0
  %2962 = vmatprep.mubr.f32.mxu0 0.0
  %2963 = vmatmul.mubr.f32.gmra.mrb[0].mxu0 %v2637
  %v2964 = vpop.f32.mrb[0].mxu0
  %v2965 = vadd.f32 %v2511, %v2964
  %v2966 = vpop.f32.mrb[0].mxu0
  %2967 = vmatprep.mubr.f32.mxu0 0.0
  %2968 = vmatmul.mubr.f32.gmra.mrb[0].mxu0 %v2640
  %v2969 = vpop.f32.mrb[0].mxu0
  %v2970 = vadd.f32 %v2511, %v2969
  %v2971 = vpop.f32.mrb[0].mxu0
  %2972 = vmatprep.mubr.f32.mxu0 0.0
  %2973 = vmatmul.mubr.f32.gmra.mrb[0].mxu0 %v2643
  %v2974 = vpop.f32.mrb[0].mxu0
  %v2975 = vadd.f32 %v2511, %v2974
  %v2976 = vpop.f32.mrb[0].mxu0
  %2977 = vmatprep.mubr.f32.mxu0 0.0
  %2978 = vmatmul.mubr.f32.gmra.mrb[0].mxu0 %v2646
  %v2979 = vpop.f32.mrb[0].mxu0
  %v2980 = vadd.f32 %v2511, %v2979
  %v2981 = vpop.f32.mrb[0].mxu0
  %2982 = vmatprep.mubr.f32.mxu0 0.0
  %2983 = vmatmul.mubr.f32.gmra.mrb[0].mxu0 %v2649
  %v2984 = vpop.f32.mrb[0].mxu0
  %v2985 = vadd.f32 %v2511, %v2984
  %v2986 = vpop.f32.mrb[0].mxu0
  %2987 = vmatprep.mubr.f32.mxu0 0.0
  %2988 = vmatmul.mubr.f32.gmra.mrb[0].mxu0 %v2652
  %v2989 = vpop.f32.mrb[0].mxu0
  %v2990 = vadd.f32 %v2511, %v2989
  %v2991 = vpop.f32.mrb[0].mxu0
  %2992 = vmatprep.mubr.f32.mxu0 0.0
  %2993 = vmatmul.mubr.f32.gmra.mrb[0].mxu0 %v2655
  %v2994 = vpop.f32.mrb[0].mxu0
  %v2995 = vadd.f32 %v2511, %v2994
  %v2996 = vpop.f32.mrb[0].mxu0
  %2997 = vmatprep.mubr.f32.mxu0 0.0
  %2998 = vmatmul.mubr.f32.gmra.mrb[0].mxu0 %v2658
  %v2999 = vpop.f32.mrb[0].mxu0
  %v3000 = vadd.f32 %v2511, %v2999
  %v3001 = vpop.f32.mrb[0].mxu0
  %3002 = vmatprep.mubr.f32.mxu0 0.0
  %3003 = vmatmul.mubr.f32.gmra.mrb[0].mxu0 %v2661
  %v3004 = vpop.f32.mrb[0].mxu0
  %v3005 = vadd.f32 %v2511, %v3004
  %v3006 = vpop.f32.mrb[0].mxu0
  %3007 = vmatprep.mubr.f32.mxu0 0.0
  %3008 = vmatmul.mubr.f32.gmra.mrb[0].mxu0 %v2664
  %v3009 = vpop.f32.mrb[0].mxu0
  %v3010 = vadd.f32 %v2511, %v3009
  %v3011 = vpop.f32.mrb[0].mxu0
  %3012 = vmatprep.mubr.f32.mxu0 0.0
  %3013 = vmatmul.mubr.f32.gmra.mrb[0].mxu0 %v2667
  %v3014 = vpop.f32.mrb[0].mxu0
  %v3015 = vadd.f32 %v2511, %v3014
  %v3016 = vpop.f32.mrb[0].mxu0
  %3017 = vmatprep.mubr.f32.mxu0 0.0
  %3018 = vmatmul.mubr.f32.gmra.mrb[0].mxu0 %v2670
  %v3019 = vpop.f32.mrb[0].mxu0
  %v3020 = vadd.f32 %v2511, %v3019
  %v3021 = vpop.f32.mrb[0].mxu0
  %3022 = vmatprep.mubr.f32.mxu0 0.0
  %3023 = vmatmul.mubr.f32.gmra.mrb[0].mxu0 %v2673
  %v3024 = vpop.f32.mrb[0].mxu0
  %v3025 = vadd.f32 %v2511, %v3024
  %v3026 = vpop.f32.mrb[0].mxu0
  %3027 = vmatprep.mubr.f32.mxu0 0.0
  %3028 = vmatmul.mubr.f32.gmra.mrb[0].mxu0 %v2676
  %v3029 = vpop.f32.mrb[0].mxu0
  %v3030 = vadd.f32 %v2511, %v3029
  %v3031 = vpop.f32.mrb[0].mxu0
  %3032 = vmatprep.mubr.f32.mxu0 0.0
  %3033 = vmatmul.mubr.f32.gmra.mrb[0].mxu0 %v2679
  %v3034 = vpop.f32.mrb[0].mxu0
  %v3035 = vadd.f32 %v2511, %v3034
  %v3036 = vpop.f32.mrb[0].mxu0
  %3037 = vmatprep.mubr.f32.mxu0 0.0
  %3038 = vmatmul.mubr.f32.gmra.mrb[0].mxu0 %v2682
  %v3039 = vpop.f32.mrb[0].mxu0
  %v3040 = vadd.f32 %v2511, %v3039
  %v3041 = vpop.f32.mrb[0].mxu0
  %3042 = vmatprep.mubr.f32.mxu0 0.0
  %3043 = vmatmul.mubr.f32.gmra.mrb[0].mxu0 %v2685
  %v3044 = vpop.f32.mrb[0].mxu0
  %v3045 = vadd.f32 %v2511, %v3044
  %v3046 = vpop.f32.mrb[0].mxu0
  %3047 = vmatprep.mubr.f32.mxu0 0.0
  %3048 = vmatmul.mubr.f32.gmra.mrb[0].mxu0 %v2688
  %v3049 = vpop.f32.mrb[0].mxu0
  %v3050 = vadd.f32 %v2511, %v3049
  %v3051 = vpop.f32.mrb[0].mxu0
  %3052 = vmatprep.mubr.f32.mxu0 0.0
  %3053 = vmatmul.mubr.f32.gmra.mrb[0].mxu0 %v2691
  %v3054 = vpop.f32.mrb[0].mxu0
  %v3055 = vadd.f32 %v2511, %v3054
  %v3056 = vpop.f32.mrb[0].mxu0
  %3057 = vdwg.mxu0
  %3058 = vst.msk [vmem:[%s10] sm:$0xff] %vm108, %v2760
  %3059 = vst.msk [vmem:[%s10 + $0x8] sm:$0xff] %vm108, %v2765
  %3060 = vst.msk [vmem:[%s10 + $0x10] sm:$0xff] %vm108, %v2770
  %3061 = vst.msk [vmem:[%s10 + $0x18] sm:$0xff] %vm108, %v2775
  %3062 = vst.msk [vmem:[%s10 + $0x20] sm:$0xff] %vm108, %v2780
  %3063 = vst.msk [vmem:[%s10 + $0x28] sm:$0xff] %vm108, %v2785
  %3064 = vst.msk [vmem:[%s10 + $0x30] sm:$0xff] %vm108, %v2790
  %3065 = vst.msk [vmem:[%s10 + $0x38] sm:$0xff] %vm108, %v2795
  %3066 = vst.msk [vmem:[%s10 + $0x40] sm:$0xff] %vm108, %v2800
  %3067 = vst.msk [vmem:[%s10 + $0x48] sm:$0xff] %vm108, %v2805
  %3068 = vst.msk [vmem:[%s10 + $0x50] sm:$0xff] %vm108, %v2810
  %3069 = vst.msk [vmem:[%s10 + $0x58] sm:$0xff] %vm108, %v2815
  %3070 = vst.msk [vmem:[%s10 + $0x60] sm:$0xff] %vm108, %v2820
  %3071 = vst.msk [vmem:[%s10 + $0x68] sm:$0xff] %vm108, %v2825
  %3072 = vst.msk [vmem:[%s10 + $0x70] sm:$0xff] %vm108, %v2830
  %3073 = vst.msk [vmem:[%s10 + $0x78] sm:$0xff] %vm108, %v2835
  %3074 = vst.msk [vmem:[%s10 + $0x80] sm:$0xff] %vm108, %v2840
  %3075 = vst.msk [vmem:[%s10 + $0x88] sm:$0xff] %vm108, %v2845
  %3076 = vst.msk [vmem:[%s10 + $0x90] sm:$0xff] %vm108, %v2850
  %3077 = vst.msk [vmem:[%s10 + $0x98] sm:$0xff] %vm108, %v2855
  %3078 = vst.msk [vmem:[%s10 + $0xa0] sm:$0xff] %vm108, %v2860
  %3079 = vst.msk [vmem:[%s10 + $0xa8] sm:$0xff] %vm108, %v2865
  %3080 = vst.msk [vmem:[%s10 + $0xb0] sm:$0xff] %vm108, %v2870
  %3081 = vst.msk [vmem:[%s10 + $0xb8] sm:$0xff] %vm108, %v2875
  %3082 = vst.msk [vmem:[%s10 + $0xc0] sm:$0xff] %vm108, %v2880
  %3083 = vst.msk [vmem:[%s10 + $0xc8] sm:$0xff] %vm108, %v2885
  %3084 = vst.msk [vmem:[%s10 + $0xd0] sm:$0xff] %vm108, %v2890
  %3085 = vst.msk [vmem:[%s10 + $0xd8] sm:$0xff] %vm108, %v2895
  %3086 = vst.msk [vmem:[%s10 + $0xe0] sm:$0xff] %vm108, %v2900
  %3087 = vst.msk [vmem:[%s10 + $0xe8] sm:$0xff] %vm108, %v2905
  %3088 = vst.msk [vmem:[%s10 + $0xf0] sm:$0xff] %vm108, %v2910
  %3089 = vst.msk [vmem:[%s10 + $0xf8] sm:$0xff] %vm108, %v2915
  %3090 = vst.msk [vmem:[%s10 + $0x100] sm:$0xff] %vm108, %v2920
  %3091 = vst.msk [vmem:[%s10 + $0x108] sm:$0xff] %vm108, %v2925
  %3092 = vst.msk [vmem:[%s10 + $0x110] sm:$0xff] %vm108, %v2930
  %3093 = vst.msk [vmem:[%s10 + $0x118] sm:$0xff] %vm108, %v2935
  %3094 = vst.msk [vmem:[%s10 + $0x120] sm:$0xff] %vm108, %v2940
  %3095 = vst.msk [vmem:[%s10 + $0x128] sm:$0xff] %vm108, %v2945
  %3096 = vst.msk [vmem:[%s10 + $0x130] sm:$0xff] %vm108, %v2950
  %3097 = vst.msk [vmem:[%s10 + $0x138] sm:$0xff] %vm108, %v2955
  %3098 = vst.msk [vmem:[%s10 + $0x140] sm:$0xff] %vm108, %v2960
  %3099 = vst.msk [vmem:[%s10 + $0x148] sm:$0xff] %vm108, %v2965
  %3100 = vst.msk [vmem:[%s10 + $0x150] sm:$0xff] %vm108, %v2970
  %3101 = vst.msk [vmem:[%s10 + $0x158] sm:$0xff] %vm108, %v2975
  %3102 = vst.msk [vmem:[%s10 + $0x160] sm:$0xff] %vm108, %v2980
  %3103 = vst.msk [vmem:[%s10 + $0x168] sm:$0xff] %vm108, %v2985
  %3104 = vst.msk [vmem:[%s10 + $0x170] sm:$0xff] %vm108, %v2990
  %3105 = vst.msk [vmem:[%s10 + $0x178] sm:$0xff] %vm108, %v2995
  %3106 = vst.msk [vmem:[%s10 + $0x180] sm:$0xff] %vm108, %v3000
  %3107 = vst.msk [vmem:[%s10 + $0x188] sm:$0xff] %vm108, %v3005
  %3108 = vst.msk [vmem:[%s10 + $0x190] sm:$0xff] %vm108, %v3010
  %3109 = vst.msk [vmem:[%s10 + $0x198] sm:$0xff] %vm108, %v3015
  %3110 = vst.msk [vmem:[%s10 + $0x1a0] sm:$0xff] %vm108, %v3020
  %3111 = vst.msk [vmem:[%s10 + $0x1a8] sm:$0xff] %vm108, %v3025
  %3112 = vst.msk [vmem:[%s10 + $0x1b0] sm:$0xff] %vm108, %v3030
  %3113 = vst.msk [vmem:[%s10 + $0x1b8] sm:$0xff] %vm108, %v3035
  %3114 = vst.msk [vmem:[%s10 + $0x1c0] sm:$0xff] %vm108, %v3040
  %3115 = vst.msk [vmem:[%s10 + $0x1c8] sm:$0xff] %vm108, %v3045
  %3116 = vst.msk [vmem:[%s10 + $0x1d0] sm:$0xff] %vm108, %v3050
  %3117 = vst.msk [vmem:[%s10 + $0x1d8] sm:$0xff] %vm108, %v3055
  %3118 = vst.msk [vmem:[%s11] sm:$0xff] %vm1888, %v981
  %3119 = vst.msk [vmem:[%s11 + $0x8] sm:$0xff] %vm1888, %v986
  %3120 = vst.msk [vmem:[%s11 + $0x10] sm:$0xff] %vm1888, %v991
  %3121 = vst.msk [vmem:[%s11 + $0x18] sm:$0xff] %vm1888, %v996
  %3122 = vst.msk [vmem:[%s11 + $0x20] sm:$0xff] %vm1888, %v1001
  %3123 = vst.msk [vmem:[%s11 + $0x28] sm:$0xff] %vm1888, %v1006
  %3124 = vst.msk [vmem:[%s11 + $0x30] sm:$0xff] %vm1888, %v1011
  %3125 = vst.msk [vmem:[%s11 + $0x38] sm:$0xff] %vm1888, %v1016
  %3126 = vst.msk [vmem:[%s11 + $0x40] sm:$0xff] %vm1888, %v1021
  %3127 = vst.msk [vmem:[%s11 + $0x48] sm:$0xff] %vm1888, %v1026
  %3128 = vst.msk [vmem:[%s11 + $0x50] sm:$0xff] %vm1888, %v1031
  %3129 = vst.msk [vmem:[%s11 + $0x58] sm:$0xff] %vm1888, %v1036
  %3130 = vst.msk [vmem:[%s11 + $0x60] sm:$0xff] %vm1888, %v1041
  %3131 = vst.msk [vmem:[%s11 + $0x68] sm:$0xff] %vm1888, %v1046
  %3132 = vst.msk [vmem:[%s11 + $0x70] sm:$0xff] %vm1888, %v1051
  %3133 = vst.msk [vmem:[%s11 + $0x78] sm:$0xff] %vm1888, %v1056
  %3134 = vst.msk [vmem:[%s11 + $0x80] sm:$0xff] %vm1888, %v1061
  %3135 = vst.msk [vmem:[%s11 + $0x88] sm:$0xff] %vm1888, %v1066
  %3136 = vst.msk [vmem:[%s11 + $0x90] sm:$0xff] %vm1888, %v1071
  %3137 = vst.msk [vmem:[%s11 + $0x98] sm:$0xff] %vm1888, %v1076
  %3138 = vst.msk [vmem:[%s11 + $0xa0] sm:$0xff] %vm1888, %v1081
  %3139 = vst.msk [vmem:[%s11 + $0xa8] sm:$0xff] %vm1888, %v1086
  %3140 = vst.msk [vmem:[%s11 + $0xb0] sm:$0xff] %vm1888, %v1091
  %3141 = vst.msk [vmem:[%s11 + $0xb8] sm:$0xff] %vm1888, %v1096
  %3142 = vst.msk [vmem:[%s11 + $0xc0] sm:$0xff] %vm1888, %v1101
  %3143 = vst.msk [vmem:[%s11 + $0xc8] sm:$0xff] %vm1888, %v1106
  %3144 = vst.msk [vmem:[%s11 + $0xd0] sm:$0xff] %vm1888, %v1111
  %3145 = vst.msk [vmem:[%s11 + $0xd8] sm:$0xff] %vm1888, %v1116
  %3146 = vst.msk [vmem:[%s11 + $0xe0] sm:$0xff] %vm1888, %v1121
  %3147 = vst.msk [vmem:[%s11 + $0xe8] sm:$0xff] %vm1888, %v1126
  %3148 = vst.msk [vmem:[%s11 + $0xf0] sm:$0xff] %vm1888, %v1131
  %3149 = vst.msk [vmem:[%s11 + $0xf8] sm:$0xff] %vm1888, %v1136
  %3150 = vst.msk [vmem:[%s11 + $0x100] sm:$0xff] %vm1888, %v1141
  %3151 = vst.msk [vmem:[%s11 + $0x108] sm:$0xff] %vm1888, %v1146
  %3152 = vst.msk [vmem:[%s11 + $0x110] sm:$0xff] %vm1888, %v1151
  %3153 = vst.msk [vmem:[%s11 + $0x118] sm:$0xff] %vm1888, %v1156
  %3154 = vst.msk [vmem:[%s11 + $0x120] sm:$0xff] %vm1888, %v1161
  %3155 = vst.msk [vmem:[%s11 + $0x128] sm:$0xff] %vm1888, %v1166
  %3156 = vst.msk [vmem:[%s11 + $0x130] sm:$0xff] %vm1888, %v1171
  %3157 = vst.msk [vmem:[%s11 + $0x138] sm:$0xff] %vm1888, %v1176
  %3158 = vst.msk [vmem:[%s11 + $0x140] sm:$0xff] %vm1888, %v1181
  %3159 = vst.msk [vmem:[%s11 + $0x148] sm:$0xff] %vm1888, %v1186
  %3160 = vst.msk [vmem:[%s11 + $0x150] sm:$0xff] %vm1888, %v1191
  %3161 = vst.msk [vmem:[%s11 + $0x158] sm:$0xff] %vm1888, %v1196
  %3162 = vst.msk [vmem:[%s11 + $0x160] sm:$0xff] %vm1888, %v1201
  %3163 = vst.msk [vmem:[%s11 + $0x168] sm:$0xff] %vm1888, %v1206
  %3164 = vst.msk [vmem:[%s11 + $0x170] sm:$0xff] %vm1888, %v1211
  %3165 = vst.msk [vmem:[%s11 + $0x178] sm:$0xff] %vm1888, %v1216
  %3166 = vst.msk [vmem:[%s11 + $0x180] sm:$0xff] %vm1888, %v1221
  %3167 = vst.msk [vmem:[%s11 + $0x188] sm:$0xff] %vm1888, %v1226
  %3168 = vst.msk [vmem:[%s11 + $0x190] sm:$0xff] %vm1888, %v1231
  %3169 = vst.msk [vmem:[%s11 + $0x198] sm:$0xff] %vm1888, %v1236
  %3170 = vst.msk [vmem:[%s11 + $0x1a0] sm:$0xff] %vm1888, %v1241
  %3171 = vst.msk [vmem:[%s11 + $0x1a8] sm:$0xff] %vm1888, %v1246
  %3172 = vst.msk [vmem:[%s11 + $0x1b0] sm:$0xff] %vm1888, %v1251
  %3173 = vst.msk [vmem:[%s11 + $0x1b8] sm:$0xff] %vm1888, %v1256
  %3174 = vst.msk [vmem:[%s11 + $0x1c0] sm:$0xff] %vm1888, %v1261
  %3175 = vst.msk [vmem:[%s11 + $0x1c8] sm:$0xff] %vm1888, %v1266
  %3176 = vst.msk [vmem:[%s11 + $0x1d0] sm:$0xff] %vm1888, %v1271
  %3177 = vst.msk [vmem:[%s11 + $0x1d8] sm:$0xff] %vm1888, %v1276
  %3238 = vrot.lane.b32.xlu0 %v981, 118
  %v3239 = vpop.permute.xlu0 %3238
  %3240 = vrot.lane.b32.xlu0 %v986, 118
  %v3241 = vpop.permute.xlu0 %3240
  %3242 = vrot.lane.b32.xlu0 %v991, 118
  %v3243 = vpop.permute.xlu0 %3242
  %3244 = vrot.lane.b32.xlu0 %v996, 118
  %v3245 = vpop.permute.xlu0 %3244
  %3246 = vrot.lane.b32.xlu0 %v1001, 118
  %v3247 = vpop.permute.xlu0 %3246
  %3248 = vrot.lane.b32.xlu0 %v1006, 118
  %v3249 = vpop.permute.xlu0 %3248
  %3250 = vrot.lane.b32.xlu0 %v1011, 118
  %v3251 = vpop.permute.xlu0 %3250
  %3252 = vrot.lane.b32.xlu0 %v1016, 118
  %v3253 = vpop.permute.xlu0 %3252
  %3254 = vrot.lane.b32.xlu0 %v1021, 118
  %v3255 = vpop.permute.xlu0 %3254
  %3256 = vrot.lane.b32.xlu0 %v1026, 118
  %v3257 = vpop.permute.xlu0 %3256
  %3258 = vrot.lane.b32.xlu0 %v1031, 118
  %v3259 = vpop.permute.xlu0 %3258
  %3260 = vrot.lane.b32.xlu0 %v1036, 118
  %v3261 = vpop.permute.xlu0 %3260
  %3262 = vrot.lane.b32.xlu0 %v1041, 118
  %v3263 = vpop.permute.xlu0 %3262
  %3264 = vrot.lane.b32.xlu0 %v1046, 118
  %v3265 = vpop.permute.xlu0 %3264
  %3266 = vrot.lane.b32.xlu0 %v1051, 118
  %v3267 = vpop.permute.xlu0 %3266
  %3268 = vrot.lane.b32.xlu0 %v1056, 118
  %v3269 = vpop.permute.xlu0 %3268
  %3270 = vrot.lane.b32.xlu0 %v1061, 118
  %v3271 = vpop.permute.xlu0 %3270
  %3272 = vrot.lane.b32.xlu0 %v1066, 118
  %v3273 = vpop.permute.xlu0 %3272
  %3274 = vrot.lane.b32.xlu0 %v1071, 118
  %v3275 = vpop.permute.xlu0 %3274
  %3276 = vrot.lane.b32.xlu0 %v1076, 118
  %v3277 = vpop.permute.xlu0 %3276
  %3278 = vrot.lane.b32.xlu0 %v1081, 118
  %v3279 = vpop.permute.xlu0 %3278
  %3280 = vrot.lane.b32.xlu0 %v1086, 118
  %v3281 = vpop.permute.xlu0 %3280
  %3282 = vrot.lane.b32.xlu0 %v1091, 118
  %v3283 = vpop.permute.xlu0 %3282
  %3284 = vrot.lane.b32.xlu0 %v1096, 118
  %v3285 = vpop.permute.xlu0 %3284
  %3286 = vrot.lane.b32.xlu0 %v1101, 118
  %v3287 = vpop.permute.xlu0 %3286
  %3288 = vrot.lane.b32.xlu0 %v1106, 118
  %v3289 = vpop.permute.xlu0 %3288
  %3290 = vrot.lane.b32.xlu0 %v1111, 118
  %v3291 = vpop.permute.xlu0 %3290
  %3292 = vrot.lane.b32.xlu0 %v1116, 118
  %v3293 = vpop.permute.xlu0 %3292
  %3294 = vrot.lane.b32.xlu0 %v1121, 118
  %v3295 = vpop.permute.xlu0 %3294
  %3296 = vrot.lane.b32.xlu0 %v1126, 118
  %v3297 = vpop.permute.xlu0 %3296
  %3298 = vrot.lane.b32.xlu0 %v1131, 118
  %v3299 = vpop.permute.xlu0 %3298
  %3300 = vrot.lane.b32.xlu0 %v1136, 118
  %v3301 = vpop.permute.xlu0 %3300
  %3302 = vrot.lane.b32.xlu0 %v1141, 118
  %v3303 = vpop.permute.xlu0 %3302
  %3304 = vrot.lane.b32.xlu0 %v1146, 118
  %v3305 = vpop.permute.xlu0 %3304
  %3306 = vrot.lane.b32.xlu0 %v1151, 118
  %v3307 = vpop.permute.xlu0 %3306
  %3308 = vrot.lane.b32.xlu0 %v1156, 118
  %v3309 = vpop.permute.xlu0 %3308
  %3310 = vrot.lane.b32.xlu0 %v1161, 118
  %v3311 = vpop.permute.xlu0 %3310
  %3312 = vrot.lane.b32.xlu0 %v1166, 118
  %v3313 = vpop.permute.xlu0 %3312
  %3314 = vrot.lane.b32.xlu0 %v1171, 118
  %v3315 = vpop.permute.xlu0 %3314
  %3316 = vrot.lane.b32.xlu0 %v1176, 118
  %v3317 = vpop.permute.xlu0 %3316
  %3318 = vrot.lane.b32.xlu0 %v1181, 118
  %v3319 = vpop.permute.xlu0 %3318
  %3320 = vrot.lane.b32.xlu0 %v1186, 118
  %v3321 = vpop.permute.xlu0 %3320
  %3322 = vrot.lane.b32.xlu0 %v1191, 118
  %v3323 = vpop.permute.xlu0 %3322
  %3324 = vrot.lane.b32.xlu0 %v1196, 118
  %v3325 = vpop.permute.xlu0 %3324
  %3326 = vrot.lane.b32.xlu0 %v1201, 118
  %v3327 = vpop.permute.xlu0 %3326
  %3328 = vrot.lane.b32.xlu0 %v1206, 118
  %v3329 = vpop.permute.xlu0 %3328
  %3330 = vrot.lane.b32.xlu0 %v1211, 118
  %v3331 = vpop.permute.xlu0 %3330
  %3332 = vrot.lane.b32.xlu0 %v1216, 118
  %v3333 = vpop.permute.xlu0 %3332
  %3334 = vrot.lane.b32.xlu0 %v1221, 118
  %v3335 = vpop.permute.xlu0 %3334
  %3336 = vrot.lane.b32.xlu0 %v1226, 118
  %v3337 = vpop.permute.xlu0 %3336
  %3338 = vrot.lane.b32.xlu0 %v1231, 118
  %v3339 = vpop.permute.xlu0 %3338
  %3340 = vrot.lane.b32.xlu0 %v1236, 118
  %v3341 = vpop.permute.xlu0 %3340
  %3342 = vrot.lane.b32.xlu0 %v1241, 118
  %v3343 = vpop.permute.xlu0 %3342
  %3344 = vrot.lane.b32.xlu0 %v1246, 118
  %v3345 = vpop.permute.xlu0 %3344
  %3346 = vrot.lane.b32.xlu0 %v1251, 118
  %v3347 = vpop.permute.xlu0 %3346
  %3348 = vrot.lane.b32.xlu0 %v1256, 118
  %v3349 = vpop.permute.xlu0 %3348
  %3350 = vrot.lane.b32.xlu0 %v1261, 118
  %v3351 = vpop.permute.xlu0 %3350
  %3352 = vrot.lane.b32.xlu0 %v1266, 118
  %v3353 = vpop.permute.xlu0 %3352
  %3354 = vrot.lane.b32.xlu0 %v1271, 118
  %v3355 = vpop.permute.xlu0 %3354
  %3356 = vrot.lane.b32.xlu0 %v1276, 118
  %v3357 = vpop.permute.xlu0 %3356
  %3418 = vst.msk [vmem:[%s12] sm:$0xff] %vm1888, %v3239
  %3419 = vst.msk [vmem:[%s12 + $0x8] sm:$0xff] %vm1888, %v3241
  %3420 = vst.msk [vmem:[%s12 + $0x10] sm:$0xff] %vm1888, %v3243
  %3421 = vst.msk [vmem:[%s12 + $0x18] sm:$0xff] %vm1888, %v3245
  %3422 = vst.msk [vmem:[%s12 + $0x20] sm:$0xff] %vm1888, %v3247
  %3423 = vst.msk [vmem:[%s12 + $0x28] sm:$0xff] %vm1888, %v3249
  %3424 = vst.msk [vmem:[%s12 + $0x30] sm:$0xff] %vm1888, %v3251
  %3425 = vst.msk [vmem:[%s12 + $0x38] sm:$0xff] %vm1888, %v3253
  %3426 = vst.msk [vmem:[%s12 + $0x40] sm:$0xff] %vm1888, %v3255
  %3427 = vst.msk [vmem:[%s12 + $0x48] sm:$0xff] %vm1888, %v3257
  %3428 = vst.msk [vmem:[%s12 + $0x50] sm:$0xff] %vm1888, %v3259
  %3429 = vst.msk [vmem:[%s12 + $0x58] sm:$0xff] %vm1888, %v3261
  %3430 = vst.msk [vmem:[%s12 + $0x60] sm:$0xff] %vm1888, %v3263
  %3431 = vst.msk [vmem:[%s12 + $0x68] sm:$0xff] %vm1888, %v3265
  %3432 = vst.msk [vmem:[%s12 + $0x70] sm:$0xff] %vm1888, %v3267
  %3433 = vst.msk [vmem:[%s12 + $0x78] sm:$0xff] %vm1888, %v3269
  %3434 = vst.msk [vmem:[%s12 + $0x80] sm:$0xff] %vm1888, %v3271
  %3435 = vst.msk [vmem:[%s12 + $0x88] sm:$0xff] %vm1888, %v3273
  %3436 = vst.msk [vmem:[%s12 + $0x90] sm:$0xff] %vm1888, %v3275
  %3437 = vst.msk [vmem:[%s12 + $0x98] sm:$0xff] %vm1888, %v3277
  %3438 = vst.msk [vmem:[%s12 + $0xa0] sm:$0xff] %vm1888, %v3279
  %3439 = vst.msk [vmem:[%s12 + $0xa8] sm:$0xff] %vm1888, %v3281
  %3440 = vst.msk [vmem:[%s12 + $0xb0] sm:$0xff] %vm1888, %v3283
  %3441 = vst.msk [vmem:[%s12 + $0xb8] sm:$0xff] %vm1888, %v3285
  %3442 = vst.msk [vmem:[%s12 + $0xc0] sm:$0xff] %vm1888, %v3287
  %3443 = vst.msk [vmem:[%s12 + $0xc8] sm:$0xff] %vm1888, %v3289
  %3444 = vst.msk [vmem:[%s12 + $0xd0] sm:$0xff] %vm1888, %v3291
  %3445 = vst.msk [vmem:[%s12 + $0xd8] sm:$0xff] %vm1888, %v3293
  %3446 = vst.msk [vmem:[%s12 + $0xe0] sm:$0xff] %vm1888, %v3295
  %3447 = vst.msk [vmem:[%s12 + $0xe8] sm:$0xff] %vm1888, %v3297
  %3448 = vst.msk [vmem:[%s12 + $0xf0] sm:$0xff] %vm1888, %v3299
  %3449 = vst.msk [vmem:[%s12 + $0xf8] sm:$0xff] %vm1888, %v3301
  %3450 = vst.msk [vmem:[%s12 + $0x100] sm:$0xff] %vm1888, %v3303
  %3451 = vst.msk [vmem:[%s12 + $0x108] sm:$0xff] %vm1888, %v3305
  %3452 = vst.msk [vmem:[%s12 + $0x110] sm:$0xff] %vm1888, %v3307
  %3453 = vst.msk [vmem:[%s12 + $0x118] sm:$0xff] %vm1888, %v3309
  %3454 = vst.msk [vmem:[%s12 + $0x120] sm:$0xff] %vm1888, %v3311
  %3455 = vst.msk [vmem:[%s12 + $0x128] sm:$0xff] %vm1888, %v3313
  %3456 = vst.msk [vmem:[%s12 + $0x130] sm:$0xff] %vm1888, %v3315
  %3457 = vst.msk [vmem:[%s12 + $0x138] sm:$0xff] %vm1888, %v3317
  %3458 = vst.msk [vmem:[%s12 + $0x140] sm:$0xff] %vm1888, %v3319
  %3459 = vst.msk [vmem:[%s12 + $0x148] sm:$0xff] %vm1888, %v3321
  %3460 = vst.msk [vmem:[%s12 + $0x150] sm:$0xff] %vm1888, %v3323
  %3461 = vst.msk [vmem:[%s12 + $0x158] sm:$0xff] %vm1888, %v3325
  %3462 = vst.msk [vmem:[%s12 + $0x160] sm:$0xff] %vm1888, %v3327
  %3463 = vst.msk [vmem:[%s12 + $0x168] sm:$0xff] %vm1888, %v3329
  %3464 = vst.msk [vmem:[%s12 + $0x170] sm:$0xff] %vm1888, %v3331
  %3465 = vst.msk [vmem:[%s12 + $0x178] sm:$0xff] %vm1888, %v3333
  %3466 = vst.msk [vmem:[%s12 + $0x180] sm:$0xff] %vm1888, %v3335
  %3467 = vst.msk [vmem:[%s12 + $0x188] sm:$0xff] %vm1888, %v3337
  %3468 = vst.msk [vmem:[%s12 + $0x190] sm:$0xff] %vm1888, %v3339
  %3469 = vst.msk [vmem:[%s12 + $0x198] sm:$0xff] %vm1888, %v3341
  %3470 = vst.msk [vmem:[%s12 + $0x1a0] sm:$0xff] %vm1888, %v3343
  %3471 = vst.msk [vmem:[%s12 + $0x1a8] sm:$0xff] %vm1888, %v3345
  %3472 = vst.msk [vmem:[%s12 + $0x1b0] sm:$0xff] %vm1888, %v3347
  %3473 = vst.msk [vmem:[%s12 + $0x1b8] sm:$0xff] %vm1888, %v3349
  %3474 = vst.msk [vmem:[%s12 + $0x1c0] sm:$0xff] %vm1888, %v3351
  %3475 = vst.msk [vmem:[%s12 + $0x1c8] sm:$0xff] %vm1888, %v3353
  %3476 = vst.msk [vmem:[%s12 + $0x1d0] sm:$0xff] %vm1888, %v3355
  %3477 = vst.msk [vmem:[%s12 + $0x1d8] sm:$0xff] %vm1888, %v3357
  // Predicated region
  $region42: #{vae_only_forward.1} parent=0 // pred_check
    _
  $region43: #{vae_only_forward.1} parent=0 // pred_check_branch
    %3479 = sbr.rel (0) target = $region45
  $region44: #{vae_only_forward.1} parent=0 // pred_region
    _
  $region45: #{vae_only_forward.1} parent=0 // pred_fallthru
    _
  // Predicated region
  $region46: #{vae_only_forward.1} parent=0 // pred_check
    _
  $region47: #{vae_only_forward.1} parent=0 // pred_check_branch
    %3481 = sbr.rel (0) target = $region49
  $region48: #{vae_only_forward.1} parent=0 // pred_region
    _
  $region49: #{vae_only_forward.1} parent=0 // pred_fallthru
    _
  // Predicated region
  $region50: #{vae_only_forward.1} parent=0 // pred_check
    _
  $region51: #{vae_only_forward.1} parent=0 // pred_check_branch
    %3483 = sbr.rel (0) target = $region53
  $region52: #{vae_only_forward.1} parent=0 // pred_region
    _
  $region53: #{vae_only_forward.1} parent=0 // pred_fallthru
    _
  // Predicated region
  $region54: #{vae_only_forward.1} parent=0 // pred_check
    _
  $region55: #{vae_only_forward.1} parent=0 // pred_check_branch
    %3485 = sbr.rel (0) target = $region57
  $region56: #{vae_only_forward.1} parent=0 // pred_region
    _
  $region57: #{vae_only_forward.1} parent=0 // pred_fallthru
    _
  // Predicated region
  $region58: #{vae_only_forward.1} parent=0 // pred_check
    _
  $region59: #{vae_only_forward.1} parent=0 // pred_check_branch
    %3487 = sbr.rel (0) target = $region61
  $region60: #{vae_only_forward.1} parent=0 // pred_region
    _
  $region61: #{vae_only_forward.1} parent=0 // pred_fallthru
    _
  // Predicated region
  $region62: #{vae_only_forward.1} parent=0 // pred_check
    _
  $region63: #{vae_only_forward.1} parent=0 // pred_check_branch
    %3489 = sbr.rel (0) target = $region65
  $region64: #{vae_only_forward.1} parent=0 // pred_region
    _
  $region65: #{vae_only_forward.1} parent=0 // pred_fallthru
    _

</llo_original>
